<compile_context>
chip_gen: v6e
topology: v6e:2x2x1
jax: 0.10.0
libtpu: 0.0.40
codegen_flags: <defaults>
</compile_context>

<pallas_src>
import functools

import jax
import jax.numpy as jnp
from jax.experimental import pallas as pl
from jax.experimental.pallas import tpu as pltpu


def _layernorm(x, gamma, beta, eps=1e-5):
    mean = jnp.mean(x, axis=-1, keepdims=True)
    var = jnp.mean((x - mean) ** 2, axis=-1, keepdims=True)   # biased, like torch
    return (x - mean) * jax.lax.rsqrt(var + eps) * gamma + beta


def transformer_kernel(tok_ref,                                # (B, S) int32, SMEM
                       emb_ref,
                       wqkv_ref, bqkv_ref, wo_ref, bo_ref,
                       g1_ref, be1_ref,
                       w1_ref, b1_ref, w2_ref, b2_ref,
                       g2_ref, be2_ref,
                       wout_ref, bout_ref,
                       out_ref,
                       *, nhead, batch_block, seq_len):
    f32 = jnp.float32
    BB, S = batch_block, seq_len
    V, H = emb_ref.shape
    dh = H // nhead
    scale = 1.0 / float(dh) ** 0.5
    b0 = pl.program_id(0) * BB

    # --- fused embedding lookup: one-hot(tokens) @ table on the MXU ---
    lane_iota = jax.lax.broadcasted_iota(jnp.int32, (1, V), 1)
    onehot_rows = []
    for bb in range(BB):
        for s in range(S):
            tok = tok_ref[b0 + bb, s]                          # scalar from SMEM
            onehot_rows.append((lane_iota == tok).astype(f32))
    onehot = jnp.concatenate(onehot_rows, axis=0)              # (BB*S, V)
    x = jnp.dot(onehot, emb_ref[...], preferred_element_type=f32)   # (BB*S, H)

    # --- fused Q/K/V in-projection (single matmul, 3H lanes) ---
    qkv = jnp.dot(x, wqkv_ref[...], preferred_element_type=f32) + bqkv_ref[...]
    q = qkv[:, 0:H] * scale                                    # scale once
    k = qkv[:, H:2 * H]
    v = qkv[:, 2 * H:3 * H]

    # --- per-batch, per-head attention; single out-projection at the end ---
    ctx_rows = []
    for bb in range(BB):
        r0, r1 = bb * S, (bb + 1) * S
        head_ctx = []
        for h in range(nhead):
            c0, c1 = h * dh, (h + 1) * dh
            qh = q[r0:r1, c0:c1]
            kh = k[r0:r1, c0:c1]
            vh = v[r0:r1, c0:c1]
            scores = jnp.dot(qh, kh.T, preferred_element_type=f32)   # (S, S)
            scores = scores - jnp.max(scores, axis=-1, keepdims=True)
            p = jnp.exp(scores)
            p = p * pl.reciprocal(jnp.sum(p, axis=-1, keepdims=True), approx=True)
            head_ctx.append(jnp.dot(p, vh, preferred_element_type=f32))  # (S, dh)
        ctx_rows.append(jnp.concatenate(head_ctx, axis=1))     # (S, H) lane-assembled
    ctx = jnp.concatenate(ctx_rows, axis=0)                    # (BB*S, H)
    attn = jnp.dot(ctx, wo_ref[...], preferred_element_type=f32) + bo_ref[...]

    # --- add & norm 1 ---
    x1 = _layernorm(x + attn, g1_ref[...], be1_ref[...])

    # --- feed-forward (ReLU); weights may be bf16 (v5e), f32 accumulation ---
    w1 = w1_ref[...]
    mid = jnp.dot(x1.astype(w1.dtype), w1, preferred_element_type=f32) + b1_ref[...]
    mid = jnp.maximum(mid, 0.0)
    w2 = w2_ref[...]
    ff = jnp.dot(mid.astype(w2.dtype), w2, preferred_element_type=f32) + b2_ref[...]

    # --- add & norm 2 ---
    x2 = _layernorm(x1 + ff, g2_ref[...], be2_ref[...])

    # --- output head ---
    y = jnp.dot(x2, wout_ref[...], preferred_element_type=f32) + bout_ref[...]
    for bb in range(BB):
        out_ref[bb] = y[bb * S:(bb + 1) * S, :]


def _cores_per_chip():
    try:
        kind = jax.devices()[0].device_kind.lower()
    except Exception:
        return 1
    # v7x exposes 2 TensorCores per chip; v5e/v6e have one.
    return 2 if "7" in kind else 1


def _ffn_weight_dtype():
    try:
        kind = jax.devices()[0].device_kind.lower()
    except Exception:
        return jnp.float32
    # v5e is HBM-bandwidth poor; halve FFN weight traffic with bf16 weights.
    if "v5 lite" in kind or "v5e" in kind:
        return jnp.bfloat16
    return jnp.float32


def rtttl_transformer_forward(tokens, params, *, nhead,
                              batch_block=None, ffn_dtype=None):
    tokens = tokens.astype(jnp.int32)
    B, S = tokens.shape
    emb = params["embedding"].astype(jnp.float32)
    O = params["wout"].shape[1]

    if batch_block is None:
        # dual-TC (v7x): one batch element per core via parallel grid;
        # single-TC (v5e/v6e): fold the whole batch into one grid step.
        batch_block = 1 if (_cores_per_chip() > 1 and B > 1) else B
    if B % batch_block != 0:
        batch_block = B
    if ffn_dtype is None:
        ffn_dtype = _ffn_weight_dtype()

    weights = [
        emb,
        params["wqkv"], params["bqkv"],
        params["wo"], params["bo"],
        params["g1"], params["be1"],
        params["w1"].astype(ffn_dtype), params["b1"],
        params["w2"].astype(ffn_dtype), params["b2"],
        params["g2"], params["be2"],
        params["wout"], params["bout"],
    ]

    def _const_spec(shape):
        nd = len(shape)
        return pl.BlockSpec(shape, lambda b, tok, _nd=nd: (0,) * _nd)

    in_specs = [_const_spec(w.shape) for w in weights]
    out_spec = pl.BlockSpec((batch_block, S, O), lambda b, tok: (b, 0, 0))

    kernel = functools.partial(transformer_kernel, nhead=nhead,
                               batch_block=batch_block, seq_len=S)

    return pl.pallas_call(
        kernel,
        out_shape=jax.ShapeDtypeStruct((B, S, O), jnp.float32),
        grid_spec=pltpu.PrefetchScalarGridSpec(
            num_scalar_prefetch=1,          # token ids land in SMEM
            grid=(B // batch_block,),
            in_specs=in_specs,
            out_specs=out_spec,
        ),
        compiler_params=pltpu.CompilerParams(
            dimension_semantics=("parallel",)),
    )(tokens, *weights)


def init_params(key, input_size, hidden_size, output_size, dim_ff):
    keys = jax.random.split(key, 8)

    def init(k, shape, scale=0.05):
        return (scale * jax.random.normal(k, shape)).astype(jnp.float32)

    H, F, O = hidden_size, dim_ff, output_size
    return {
        "embedding": init(keys[0], (input_size, H)),
        # fused attention in-projection (torch in_proj_weight.T): (H, 3H)
        "wqkv": init(keys[1], (H, 3 * H)),
        "bqkv": init(keys[2], (1, 3 * H)),
        # attention out-projection
        "wo": init(keys[3], (H, H)), "bo": init(keys[4], (1, H)),
        # layer norms (PyTorch default init: gamma=1, beta=0)
        "g1": jnp.ones((1, H), jnp.float32), "be1": jnp.zeros((1, H), jnp.float32),
        "g2": jnp.ones((1, H), jnp.float32), "be2": jnp.zeros((1, H), jnp.float32),
        # feed-forward
        "w1": init(keys[5], (H, F)), "b1": jnp.zeros((1, F), jnp.float32),
        "w2": init(keys[6], (F, H)), "b2": jnp.zeros((1, H), jnp.float32),
        # output head
        "wout": init(keys[7], (H, O)), "bout": jnp.zeros((1, O), jnp.float32),
    }


if __name__ == "__main__":
    input_size, hidden_size, output_size, nhead = 64, 32, 16, 4
    dim_ff = 2048   # PyTorch TransformerEncoderLayer default dim_feedforward
    B, S = 2, 8

    key = jax.random.PRNGKey(0)
    pkey, tkey = jax.random.split(key)
    params = init_params(pkey, input_size, hidden_size, output_size, dim_ff)
    tokens = jax.random.randint(tkey, (B, S), 0, input_size, dtype=jnp.int32)

    out = rtttl_transformer_forward(tokens, params, nhead=nhead)
    jax.block_until_ready(out)

    assert out.shape == (B, S, output_size), out.shape
    assert bool(jnp.all(jnp.isfinite(out)))
    print("KERNEL_OK")
</pallas_src>

<mosaic_0001>
module attributes {stable_mosaic.version = 11 : i64} {
  func.func @transformer_kernel(%arg0: i32, %arg1: memref<2x8xi32, #tpu.memory_space<smem>>, %arg2: memref<64x32xf32, #tpu.memory_space<vmem>>, %arg3: memref<32x96xf32, #tpu.memory_space<vmem>>, %arg4: memref<1x96xf32, #tpu.memory_space<vmem>>, %arg5: memref<32x32xf32, #tpu.memory_space<vmem>>, %arg6: memref<1x32xf32, #tpu.memory_space<vmem>>, %arg7: memref<1x32xf32, #tpu.memory_space<vmem>>, %arg8: memref<1x32xf32, #tpu.memory_space<vmem>>, %arg9: memref<32x2048xf32, #tpu.memory_space<vmem>>, %arg10: memref<1x2048xf32, #tpu.memory_space<vmem>>, %arg11: memref<2048x32xf32, #tpu.memory_space<vmem>>, %arg12: memref<1x32xf32, #tpu.memory_space<vmem>>, %arg13: memref<1x32xf32, #tpu.memory_space<vmem>>, %arg14: memref<1x32xf32, #tpu.memory_space<vmem>>, %arg15: memref<32x16xf32, #tpu.memory_space<vmem>>, %arg16: memref<1x16xf32, #tpu.memory_space<vmem>>, %arg17: memref<2x8x16xf32, #tpu.memory_space<vmem>>) attributes {dimension_semantics = [#tpu.dimension_semantics<parallel>], iteration_bounds = array<i64: 1>, scalar_prefetch = 1 : i64, scratch_operands = 0 : i64, tpu.core_type = #tpu.core_type<tc>, window_params = [{pipeline_mode = #tpu.pipeline_mode<synchronous>, transform_indices = @transform_0, window_bounds = array<i64: 64, 32>}, {pipeline_mode = #tpu.pipeline_mode<synchronous>, transform_indices = @transform_1, window_bounds = array<i64: 32, 96>}, {pipeline_mode = #tpu.pipeline_mode<synchronous>, transform_indices = @transform_2, window_bounds = array<i64: 1, 96>}, {pipeline_mode = #tpu.pipeline_mode<synchronous>, transform_indices = @transform_3, window_bounds = array<i64: 32, 32>}, {pipeline_mode = #tpu.pipeline_mode<synchronous>, transform_indices = @transform_4, window_bounds = array<i64: 1, 32>}, {pipeline_mode = #tpu.pipeline_mode<synchronous>, transform_indices = @transform_5, window_bounds = array<i64: 1, 32>}, {pipeline_mode = #tpu.pipeline_mode<synchronous>, transform_indices = @transform_6, window_bounds = array<i64: 1, 32>}, {pipeline_mode = #tpu.pipeline_mode<synchronous>, transform_indices = @transform_7, window_bounds = array<i64: 32, 2048>}, {pipeline_mode = #tpu.pipeline_mode<synchronous>, transform_indices = @transform_8, window_bounds = array<i64: 1, 2048>}, {pipeline_mode = #tpu.pipeline_mode<synchronous>, transform_indices = @transform_9, window_bounds = array<i64: 2048, 32>}, {pipeline_mode = #tpu.pipeline_mode<synchronous>, transform_indices = @transform_10, window_bounds = array<i64: 1, 32>}, {pipeline_mode = #tpu.pipeline_mode<synchronous>, transform_indices = @transform_11, window_bounds = array<i64: 1, 32>}, {pipeline_mode = #tpu.pipeline_mode<synchronous>, transform_indices = @transform_12, window_bounds = array<i64: 1, 32>}, {pipeline_mode = #tpu.pipeline_mode<synchronous>, transform_indices = @transform_13, window_bounds = array<i64: 32, 16>}, {pipeline_mode = #tpu.pipeline_mode<synchronous>, transform_indices = @transform_14, window_bounds = array<i64: 1, 16>}, {transform_indices = @transform_15, window_bounds = array<i64: 2, 8, 16>}]} {
    %c2_i32 = arith.constant 2 : i32
    %0 = arith.muli %arg0, %c2_i32 : i32
    %1 = tpu.iota {dimensions = array<i32: 1>} : vector<1x64xi32>
    %c0_i32 = arith.constant 0 : i32
    %2 = arith.addi %0, %c0_i32 : i32
    %3 = arith.index_cast %2 : i32 to index
    %c0 = arith.constant 0 : index
    %4 = memref.load %arg1[%3, %c0] : memref<2x8xi32, #tpu.memory_space<smem>>
    %5 = vector.broadcast %4 : i32 to vector<1x64xi32>
    %6 = arith.cmpi eq, %1, %5 : vector<1x64xi32>
    %7 = arith.extui %6 : vector<1x64xi1> to vector<1x64xi32>
    %8 = arith.sitofp %7 : vector<1x64xi32> to vector<1x64xf32>
    %c0_i32_0 = arith.constant 0 : i32
    %9 = arith.addi %0, %c0_i32_0 : i32
    %10 = arith.index_cast %9 : i32 to index
    %c1 = arith.constant 1 : index
    %11 = memref.load %arg1[%10, %c1] : memref<2x8xi32, #tpu.memory_space<smem>>
    %12 = vector.broadcast %11 : i32 to vector<1x64xi32>
    %13 = arith.cmpi eq, %1, %12 : vector<1x64xi32>
    %14 = arith.extui %13 : vector<1x64xi1> to vector<1x64xi32>
    %15 = arith.sitofp %14 : vector<1x64xi32> to vector<1x64xf32>
    %c0_i32_1 = arith.constant 0 : i32
    %16 = arith.addi %0, %c0_i32_1 : i32
    %17 = arith.index_cast %16 : i32 to index
    %c2 = arith.constant 2 : index
    %18 = memref.load %arg1[%17, %c2] : memref<2x8xi32, #tpu.memory_space<smem>>
    %19 = vector.broadcast %18 : i32 to vector<1x64xi32>
    %20 = arith.cmpi eq, %1, %19 : vector<1x64xi32>
    %21 = arith.extui %20 : vector<1x64xi1> to vector<1x64xi32>
    %22 = arith.sitofp %21 : vector<1x64xi32> to vector<1x64xf32>
    %c0_i32_2 = arith.constant 0 : i32
    %23 = arith.addi %0, %c0_i32_2 : i32
    %24 = arith.index_cast %23 : i32 to index
    %c3 = arith.constant 3 : index
    %25 = memref.load %arg1[%24, %c3] : memref<2x8xi32, #tpu.memory_space<smem>>
    %26 = vector.broadcast %25 : i32 to vector<1x64xi32>
    %27 = arith.cmpi eq, %1, %26 : vector<1x64xi32>
    %28 = arith.extui %27 : vector<1x64xi1> to vector<1x64xi32>
    %29 = arith.sitofp %28 : vector<1x64xi32> to vector<1x64xf32>
    %c0_i32_3 = arith.constant 0 : i32
    %30 = arith.addi %0, %c0_i32_3 : i32
    %31 = arith.index_cast %30 : i32 to index
    %c4 = arith.constant 4 : index
    %32 = memref.load %arg1[%31, %c4] : memref<2x8xi32, #tpu.memory_space<smem>>
    %33 = vector.broadcast %32 : i32 to vector<1x64xi32>
    %34 = arith.cmpi eq, %1, %33 : vector<1x64xi32>
    %35 = arith.extui %34 : vector<1x64xi1> to vector<1x64xi32>
    %36 = arith.sitofp %35 : vector<1x64xi32> to vector<1x64xf32>
    %c0_i32_4 = arith.constant 0 : i32
    %37 = arith.addi %0, %c0_i32_4 : i32
    %38 = arith.index_cast %37 : i32 to index
    %c5 = arith.constant 5 : index
    %39 = memref.load %arg1[%38, %c5] : memref<2x8xi32, #tpu.memory_space<smem>>
    %40 = vector.broadcast %39 : i32 to vector<1x64xi32>
    %41 = arith.cmpi eq, %1, %40 : vector<1x64xi32>
    %42 = arith.extui %41 : vector<1x64xi1> to vector<1x64xi32>
    %43 = arith.sitofp %42 : vector<1x64xi32> to vector<1x64xf32>
    %c0_i32_5 = arith.constant 0 : i32
    %44 = arith.addi %0, %c0_i32_5 : i32
    %45 = arith.index_cast %44 : i32 to index
    %c6 = arith.constant 6 : index
    %46 = memref.load %arg1[%45, %c6] : memref<2x8xi32, #tpu.memory_space<smem>>
    %47 = vector.broadcast %46 : i32 to vector<1x64xi32>
    %48 = arith.cmpi eq, %1, %47 : vector<1x64xi32>
    %49 = arith.extui %48 : vector<1x64xi1> to vector<1x64xi32>
    %50 = arith.sitofp %49 : vector<1x64xi32> to vector<1x64xf32>
    %c0_i32_6 = arith.constant 0 : i32
    %51 = arith.addi %0, %c0_i32_6 : i32
    %52 = arith.index_cast %51 : i32 to index
    %c7 = arith.constant 7 : index
    %53 = memref.load %arg1[%52, %c7] : memref<2x8xi32, #tpu.memory_space<smem>>
    %54 = vector.broadcast %53 : i32 to vector<1x64xi32>
    %55 = arith.cmpi eq, %1, %54 : vector<1x64xi32>
    %56 = arith.extui %55 : vector<1x64xi1> to vector<1x64xi32>
    %57 = arith.sitofp %56 : vector<1x64xi32> to vector<1x64xf32>
    %c1_i32 = arith.constant 1 : i32
    %58 = arith.addi %0, %c1_i32 : i32
    %59 = arith.index_cast %58 : i32 to index
    %c0_7 = arith.constant 0 : index
    %60 = memref.load %arg1[%59, %c0_7] : memref<2x8xi32, #tpu.memory_space<smem>>
    %61 = vector.broadcast %60 : i32 to vector<1x64xi32>
    %62 = arith.cmpi eq, %1, %61 : vector<1x64xi32>
    %63 = arith.extui %62 : vector<1x64xi1> to vector<1x64xi32>
    %64 = arith.sitofp %63 : vector<1x64xi32> to vector<1x64xf32>
    %c1_i32_8 = arith.constant 1 : i32
    %65 = arith.addi %0, %c1_i32_8 : i32
    %66 = arith.index_cast %65 : i32 to index
    %c1_9 = arith.constant 1 : index
    %67 = memref.load %arg1[%66, %c1_9] : memref<2x8xi32, #tpu.memory_space<smem>>
    %68 = vector.broadcast %67 : i32 to vector<1x64xi32>
    %69 = arith.cmpi eq, %1, %68 : vector<1x64xi32>
    %70 = arith.extui %69 : vector<1x64xi1> to vector<1x64xi32>
    %71 = arith.sitofp %70 : vector<1x64xi32> to vector<1x64xf32>
    %c1_i32_10 = arith.constant 1 : i32
    %72 = arith.addi %0, %c1_i32_10 : i32
    %73 = arith.index_cast %72 : i32 to index
    %c2_11 = arith.constant 2 : index
    %74 = memref.load %arg1[%73, %c2_11] : memref<2x8xi32, #tpu.memory_space<smem>>
    %75 = vector.broadcast %74 : i32 to vector<1x64xi32>
    %76 = arith.cmpi eq, %1, %75 : vector<1x64xi32>
    %77 = arith.extui %76 : vector<1x64xi1> to vector<1x64xi32>
    %78 = arith.sitofp %77 : vector<1x64xi32> to vector<1x64xf32>
    %c1_i32_12 = arith.constant 1 : i32
    %79 = arith.addi %0, %c1_i32_12 : i32
    %80 = arith.index_cast %79 : i32 to index
    %c3_13 = arith.constant 3 : index
    %81 = memref.load %arg1[%80, %c3_13] : memref<2x8xi32, #tpu.memory_space<smem>>
    %82 = vector.broadcast %81 : i32 to vector<1x64xi32>
    %83 = arith.cmpi eq, %1, %82 : vector<1x64xi32>
    %84 = arith.extui %83 : vector<1x64xi1> to vector<1x64xi32>
    %85 = arith.sitofp %84 : vector<1x64xi32> to vector<1x64xf32>
    %c1_i32_14 = arith.constant 1 : i32
    %86 = arith.addi %0, %c1_i32_14 : i32
    %87 = arith.index_cast %86 : i32 to index
    %c4_15 = arith.constant 4 : index
    %88 = memref.load %arg1[%87, %c4_15] : memref<2x8xi32, #tpu.memory_space<smem>>
    %89 = vector.broadcast %88 : i32 to vector<1x64xi32>
    %90 = arith.cmpi eq, %1, %89 : vector<1x64xi32>
    %91 = arith.extui %90 : vector<1x64xi1> to vector<1x64xi32>
    %92 = arith.sitofp %91 : vector<1x64xi32> to vector<1x64xf32>
    %c1_i32_16 = arith.constant 1 : i32
    %93 = arith.addi %0, %c1_i32_16 : i32
    %94 = arith.index_cast %93 : i32 to index
    %c5_17 = arith.constant 5 : index
    %95 = memref.load %arg1[%94, %c5_17] : memref<2x8xi32, #tpu.memory_space<smem>>
    %96 = vector.broadcast %95 : i32 to vector<1x64xi32>
    %97 = arith.cmpi eq, %1, %96 : vector<1x64xi32>
    %98 = arith.extui %97 : vector<1x64xi1> to vector<1x64xi32>
    %99 = arith.sitofp %98 : vector<1x64xi32> to vector<1x64xf32>
    %c1_i32_18 = arith.constant 1 : i32
    %100 = arith.addi %0, %c1_i32_18 : i32
    %101 = arith.index_cast %100 : i32 to index
    %c6_19 = arith.constant 6 : index
    %102 = memref.load %arg1[%101, %c6_19] : memref<2x8xi32, #tpu.memory_space<smem>>
    %103 = vector.broadcast %102 : i32 to vector<1x64xi32>
    %104 = arith.cmpi eq, %1, %103 : vector<1x64xi32>
    %105 = arith.extui %104 : vector<1x64xi1> to vector<1x64xi32>
    %106 = arith.sitofp %105 : vector<1x64xi32> to vector<1x64xf32>
    %c1_i32_20 = arith.constant 1 : i32
    %107 = arith.addi %0, %c1_i32_20 : i32
    %108 = arith.index_cast %107 : i32 to index
    %c7_21 = arith.constant 7 : index
    %109 = memref.load %arg1[%108, %c7_21] : memref<2x8xi32, #tpu.memory_space<smem>>
    %110 = vector.broadcast %109 : i32 to vector<1x64xi32>
    %111 = arith.cmpi eq, %1, %110 : vector<1x64xi32>
    %112 = arith.extui %111 : vector<1x64xi1> to vector<1x64xi32>
    %113 = arith.sitofp %112 : vector<1x64xi32> to vector<1x64xf32>
    %114 = tpu.concatenate %8, %15, %22, %29, %36, %43, %50, %57, %64, %71, %78, %85, %92, %99, %106, %113 in 0 : vector<1x64xf32>, vector<1x64xf32>, vector<1x64xf32>, vector<1x64xf32>, vector<1x64xf32>, vector<1x64xf32>, vector<1x64xf32>, vector<1x64xf32>, vector<1x64xf32>, vector<1x64xf32>, vector<1x64xf32>, vector<1x64xf32>, vector<1x64xf32>, vector<1x64xf32>, vector<1x64xf32>, vector<1x64xf32> -> vector<16x64xf32>
    %c0_22 = arith.constant 0 : index
    %c0_23 = arith.constant 0 : index
    %115 = vector.load %arg2[%c0_22, %c0_23] : memref<64x32xf32, #tpu.memory_space<vmem>>, vector<64x32xf32>
    %cst = arith.constant dense<0.000000e+00> : vector<16x32xf32>
    %116 = tpu.matmul %114, %115, %cst {dimension_numbers = #tpu.dot_dimension_numbers<[1], [0], [0], [1], [0, 0, 1, 1], [], []>} : vector<16x64xf32>, vector<64x32xf32>, vector<16x32xf32> -> vector<16x32xf32>
    %c0_24 = arith.constant 0 : index
    %c0_25 = arith.constant 0 : index
    %117 = vector.load %arg3[%c0_24, %c0_25] : memref<32x96xf32, #tpu.memory_space<vmem>>, vector<32x96xf32>
    %cst_26 = arith.constant dense<0.000000e+00> : vector<16x96xf32>
    %118 = tpu.matmul %116, %117, %cst_26 {dimension_numbers = #tpu.dot_dimension_numbers<[1], [0], [0], [1], [0, 0, 1, 1], [], []>} : vector<16x32xf32>, vector<32x96xf32>, vector<16x96xf32> -> vector<16x96xf32>
    %c0_27 = arith.constant 0 : index
    %c0_28 = arith.constant 0 : index
    %119 = vector.load %arg4[%c0_27, %c0_28] : memref<1x96xf32, #tpu.memory_space<vmem>>, vector<1x96xf32>
    %120 = vector.broadcast %119 : vector<1x96xf32> to vector<16x96xf32>
    %121 = arith.addf %118, %120 : vector<16x96xf32>
    %122 = vector.extract_strided_slice %121 {offsets = [0, 0], sizes = [16, 32], strides = [1, 1]} : vector<16x96xf32> to vector<16x32xf32>
    %cst_29 = arith.constant 0.353553385 : f32
    %123 = vector.broadcast %cst_29 : f32 to vector<16x32xf32>
    %124 = arith.mulf %122, %123 : vector<16x32xf32>
    %125 = vector.extract_strided_slice %121 {offsets = [0, 32], sizes = [16, 32], strides = [1, 1]} : vector<16x96xf32> to vector<16x32xf32>
    %126 = vector.extract_strided_slice %121 {offsets = [0, 64], sizes = [16, 32], strides = [1, 1]} : vector<16x96xf32> to vector<16x32xf32>
    %127 = vector.extract_strided_slice %124 {offsets = [0, 0], sizes = [8, 8], strides = [1, 1]} : vector<16x32xf32> to vector<8x8xf32>
    %128 = vector.extract_strided_slice %125 {offsets = [0, 0], sizes = [8, 8], strides = [1, 1]} : vector<16x32xf32> to vector<8x8xf32>
    %129 = vector.extract_strided_slice %126 {offsets = [0, 0], sizes = [8, 8], strides = [1, 1]} : vector<16x32xf32> to vector<8x8xf32>
    %130 = tpu.transpose %128, [1, 0] : vector<8x8xf32> -> vector<8x8xf32>
    %cst_30 = arith.constant dense<0.000000e+00> : vector<8x8xf32>
    %131 = tpu.matmul %127, %130, %cst_30 {dimension_numbers = #tpu.dot_dimension_numbers<[1], [0], [0], [1], [0, 0, 1, 1], [], []>} : vector<8x8xf32>, vector<8x8xf32>, vector<8x8xf32> -> vector<8x8xf32>
    %cst_31 = arith.constant dense<0xFF800000> : vector<8xf32>
    %132 = vector.multi_reduction <maximumf>, %131, %cst_31 [1] : vector<8x8xf32> to vector<8xf32>
    %133 = vector.shape_cast %132 : vector<8xf32> to vector<8x1xf32>
    %134 = vector.broadcast %133 : vector<8x1xf32> to vector<8x8xf32>
    %135 = arith.subf %131, %134 : vector<8x8xf32>
    %136 = math.exp %135 : vector<8x8xf32>
    %cst_32 = arith.constant dense<0.000000e+00> : vector<8xf32>
    %137 = vector.multi_reduction <add>, %136, %cst_32 [1] : vector<8x8xf32> to vector<8xf32>
    %138 = vector.shape_cast %137 : vector<8xf32> to vector<8x1xf32>
    %139 = tpu.reciprocal %138 {approx = true} : vector<8x1xf32> -> vector<8x1xf32>
    %140 = vector.broadcast %139 : vector<8x1xf32> to vector<8x8xf32>
    %141 = arith.mulf %136, %140 : vector<8x8xf32>
    %cst_33 = arith.constant dense<0.000000e+00> : vector<8x8xf32>
    %142 = tpu.matmul %141, %129, %cst_33 {dimension_numbers = #tpu.dot_dimension_numbers<[1], [0], [0], [1], [0, 0, 1, 1], [], []>} : vector<8x8xf32>, vector<8x8xf32>, vector<8x8xf32> -> vector<8x8xf32>
    %143 = vector.extract_strided_slice %124 {offsets = [0, 8], sizes = [8, 8], strides = [1, 1]} : vector<16x32xf32> to vector<8x8xf32>
    %144 = vector.extract_strided_slice %125 {offsets = [0, 8], sizes = [8, 8], strides = [1, 1]} : vector<16x32xf32> to vector<8x8xf32>
    %145 = vector.extract_strided_slice %126 {offsets = [0, 8], sizes = [8, 8], strides = [1, 1]} : vector<16x32xf32> to vector<8x8xf32>
    %146 = tpu.transpose %144, [1, 0] : vector<8x8xf32> -> vector<8x8xf32>
    %cst_34 = arith.constant dense<0.000000e+00> : vector<8x8xf32>
    %147 = tpu.matmul %143, %146, %cst_34 {dimension_numbers = #tpu.dot_dimension_numbers<[1], [0], [0], [1], [0, 0, 1, 1], [], []>} : vector<8x8xf32>, vector<8x8xf32>, vector<8x8xf32> -> vector<8x8xf32>
    %cst_35 = arith.constant dense<0xFF800000> : vector<8xf32>
    %148 = vector.multi_reduction <maximumf>, %147, %cst_35 [1] : vector<8x8xf32> to vector<8xf32>
    %149 = vector.shape_cast %148 : vector<8xf32> to vector<8x1xf32>
    %150 = vector.broadcast %149 : vector<8x1xf32> to vector<8x8xf32>
    %151 = arith.subf %147, %150 : vector<8x8xf32>
    %152 = math.exp %151 : vector<8x8xf32>
    %cst_36 = arith.constant dense<0.000000e+00> : vector<8xf32>
    %153 = vector.multi_reduction <add>, %152, %cst_36 [1] : vector<8x8xf32> to vector<8xf32>
    %154 = vector.shape_cast %153 : vector<8xf32> to vector<8x1xf32>
    %155 = tpu.reciprocal %154 {approx = true} : vector<8x1xf32> -> vector<8x1xf32>
    %156 = vector.broadcast %155 : vector<8x1xf32> to vector<8x8xf32>
    %157 = arith.mulf %152, %156 : vector<8x8xf32>
    %cst_37 = arith.constant dense<0.000000e+00> : vector<8x8xf32>
    %158 = tpu.matmul %157, %145, %cst_37 {dimension_numbers = #tpu.dot_dimension_numbers<[1], [0], [0], [1], [0, 0, 1, 1], [], []>} : vector<8x8xf32>, vector<8x8xf32>, vector<8x8xf32> -> vector<8x8xf32>
    %159 = vector.extract_strided_slice %124 {offsets = [0, 16], sizes = [8, 8], strides = [1, 1]} : vector<16x32xf32> to vector<8x8xf32>
    %160 = vector.extract_strided_slice %125 {offsets = [0, 16], sizes = [8, 8], strides = [1, 1]} : vector<16x32xf32> to vector<8x8xf32>
    %161 = vector.extract_strided_slice %126 {offsets = [0, 16], sizes = [8, 8], strides = [1, 1]} : vector<16x32xf32> to vector<8x8xf32>
    %162 = tpu.transpose %160, [1, 0] : vector<8x8xf32> -> vector<8x8xf32>
    %cst_38 = arith.constant dense<0.000000e+00> : vector<8x8xf32>
    %163 = tpu.matmul %159, %162, %cst_38 {dimension_numbers = #tpu.dot_dimension_numbers<[1], [0], [0], [1], [0, 0, 1, 1], [], []>} : vector<8x8xf32>, vector<8x8xf32>, vector<8x8xf32> -> vector<8x8xf32>
    %cst_39 = arith.constant dense<0xFF800000> : vector<8xf32>
    %164 = vector.multi_reduction <maximumf>, %163, %cst_39 [1] : vector<8x8xf32> to vector<8xf32>
    %165 = vector.shape_cast %164 : vector<8xf32> to vector<8x1xf32>
    %166 = vector.broadcast %165 : vector<8x1xf32> to vector<8x8xf32>
    %167 = arith.subf %163, %166 : vector<8x8xf32>
    %168 = math.exp %167 : vector<8x8xf32>
    %cst_40 = arith.constant dense<0.000000e+00> : vector<8xf32>
    %169 = vector.multi_reduction <add>, %168, %cst_40 [1] : vector<8x8xf32> to vector<8xf32>
    %170 = vector.shape_cast %169 : vector<8xf32> to vector<8x1xf32>
    %171 = tpu.reciprocal %170 {approx = true} : vector<8x1xf32> -> vector<8x1xf32>
    %172 = vector.broadcast %171 : vector<8x1xf32> to vector<8x8xf32>
    %173 = arith.mulf %168, %172 : vector<8x8xf32>
    %cst_41 = arith.constant dense<0.000000e+00> : vector<8x8xf32>
    %174 = tpu.matmul %173, %161, %cst_41 {dimension_numbers = #tpu.dot_dimension_numbers<[1], [0], [0], [1], [0, 0, 1, 1], [], []>} : vector<8x8xf32>, vector<8x8xf32>, vector<8x8xf32> -> vector<8x8xf32>
    %175 = vector.extract_strided_slice %124 {offsets = [0, 24], sizes = [8, 8], strides = [1, 1]} : vector<16x32xf32> to vector<8x8xf32>
    %176 = vector.extract_strided_slice %125 {offsets = [0, 24], sizes = [8, 8], strides = [1, 1]} : vector<16x32xf32> to vector<8x8xf32>
    %177 = vector.extract_strided_slice %126 {offsets = [0, 24], sizes = [8, 8], strides = [1, 1]} : vector<16x32xf32> to vector<8x8xf32>
    %178 = tpu.transpose %176, [1, 0] : vector<8x8xf32> -> vector<8x8xf32>
    %cst_42 = arith.constant dense<0.000000e+00> : vector<8x8xf32>
    %179 = tpu.matmul %175, %178, %cst_42 {dimension_numbers = #tpu.dot_dimension_numbers<[1], [0], [0], [1], [0, 0, 1, 1], [], []>} : vector<8x8xf32>, vector<8x8xf32>, vector<8x8xf32> -> vector<8x8xf32>
    %cst_43 = arith.constant dense<0xFF800000> : vector<8xf32>
    %180 = vector.multi_reduction <maximumf>, %179, %cst_43 [1] : vector<8x8xf32> to vector<8xf32>
    %181 = vector.shape_cast %180 : vector<8xf32> to vector<8x1xf32>
    %182 = vector.broadcast %181 : vector<8x1xf32> to vector<8x8xf32>
    %183 = arith.subf %179, %182 : vector<8x8xf32>
    %184 = math.exp %183 : vector<8x8xf32>
    %cst_44 = arith.constant dense<0.000000e+00> : vector<8xf32>
    %185 = vector.multi_reduction <add>, %184, %cst_44 [1] : vector<8x8xf32> to vector<8xf32>
    %186 = vector.shape_cast %185 : vector<8xf32> to vector<8x1xf32>
    %187 = tpu.reciprocal %186 {approx = true} : vector<8x1xf32> -> vector<8x1xf32>
    %188 = vector.broadcast %187 : vector<8x1xf32> to vector<8x8xf32>
    %189 = arith.mulf %184, %188 : vector<8x8xf32>
    %cst_45 = arith.constant dense<0.000000e+00> : vector<8x8xf32>
    %190 = tpu.matmul %189, %177, %cst_45 {dimension_numbers = #tpu.dot_dimension_numbers<[1], [0], [0], [1], [0, 0, 1, 1], [], []>} : vector<8x8xf32>, vector<8x8xf32>, vector<8x8xf32> -> vector<8x8xf32>
    %191 = tpu.concatenate %142, %158, %174, %190 in 1 : vector<8x8xf32>, vector<8x8xf32>, vector<8x8xf32>, vector<8x8xf32> -> vector<8x32xf32>
    %192 = vector.extract_strided_slice %124 {offsets = [8, 0], sizes = [8, 8], strides = [1, 1]} : vector<16x32xf32> to vector<8x8xf32>
    %193 = vector.extract_strided_slice %125 {offsets = [8, 0], sizes = [8, 8], strides = [1, 1]} : vector<16x32xf32> to vector<8x8xf32>
    %194 = vector.extract_strided_slice %126 {offsets = [8, 0], sizes = [8, 8], strides = [1, 1]} : vector<16x32xf32> to vector<8x8xf32>
    %195 = tpu.transpose %193, [1, 0] : vector<8x8xf32> -> vector<8x8xf32>
    %cst_46 = arith.constant dense<0.000000e+00> : vector<8x8xf32>
    %196 = tpu.matmul %192, %195, %cst_46 {dimension_numbers = #tpu.dot_dimension_numbers<[1], [0], [0], [1], [0, 0, 1, 1], [], []>} : vector<8x8xf32>, vector<8x8xf32>, vector<8x8xf32> -> vector<8x8xf32>
    %cst_47 = arith.constant dense<0xFF800000> : vector<8xf32>
    %197 = vector.multi_reduction <maximumf>, %196, %cst_47 [1] : vector<8x8xf32> to vector<8xf32>
    %198 = vector.shape_cast %197 : vector<8xf32> to vector<8x1xf32>
    %199 = vector.broadcast %198 : vector<8x1xf32> to vector<8x8xf32>
    %200 = arith.subf %196, %199 : vector<8x8xf32>
    %201 = math.exp %200 : vector<8x8xf32>
    %cst_48 = arith.constant dense<0.000000e+00> : vector<8xf32>
    %202 = vector.multi_reduction <add>, %201, %cst_48 [1] : vector<8x8xf32> to vector<8xf32>
    %203 = vector.shape_cast %202 : vector<8xf32> to vector<8x1xf32>
    %204 = tpu.reciprocal %203 {approx = true} : vector<8x1xf32> -> vector<8x1xf32>
    %205 = vector.broadcast %204 : vector<8x1xf32> to vector<8x8xf32>
    %206 = arith.mulf %201, %205 : vector<8x8xf32>
    %cst_49 = arith.constant dense<0.000000e+00> : vector<8x8xf32>
    %207 = tpu.matmul %206, %194, %cst_49 {dimension_numbers = #tpu.dot_dimension_numbers<[1], [0], [0], [1], [0, 0, 1, 1], [], []>} : vector<8x8xf32>, vector<8x8xf32>, vector<8x8xf32> -> vector<8x8xf32>
    %208 = vector.extract_strided_slice %124 {offsets = [8, 8], sizes = [8, 8], strides = [1, 1]} : vector<16x32xf32> to vector<8x8xf32>
    %209 = vector.extract_strided_slice %125 {offsets = [8, 8], sizes = [8, 8], strides = [1, 1]} : vector<16x32xf32> to vector<8x8xf32>
    %210 = vector.extract_strided_slice %126 {offsets = [8, 8], sizes = [8, 8], strides = [1, 1]} : vector<16x32xf32> to vector<8x8xf32>
    %211 = tpu.transpose %209, [1, 0] : vector<8x8xf32> -> vector<8x8xf32>
    %cst_50 = arith.constant dense<0.000000e+00> : vector<8x8xf32>
    %212 = tpu.matmul %208, %211, %cst_50 {dimension_numbers = #tpu.dot_dimension_numbers<[1], [0], [0], [1], [0, 0, 1, 1], [], []>} : vector<8x8xf32>, vector<8x8xf32>, vector<8x8xf32> -> vector<8x8xf32>
    %cst_51 = arith.constant dense<0xFF800000> : vector<8xf32>
    %213 = vector.multi_reduction <maximumf>, %212, %cst_51 [1] : vector<8x8xf32> to vector<8xf32>
    %214 = vector.shape_cast %213 : vector<8xf32> to vector<8x1xf32>
    %215 = vector.broadcast %214 : vector<8x1xf32> to vector<8x8xf32>
    %216 = arith.subf %212, %215 : vector<8x8xf32>
    %217 = math.exp %216 : vector<8x8xf32>
    %cst_52 = arith.constant dense<0.000000e+00> : vector<8xf32>
    %218 = vector.multi_reduction <add>, %217, %cst_52 [1] : vector<8x8xf32> to vector<8xf32>
    %219 = vector.shape_cast %218 : vector<8xf32> to vector<8x1xf32>
    %220 = tpu.reciprocal %219 {approx = true} : vector<8x1xf32> -> vector<8x1xf32>
    %221 = vector.broadcast %220 : vector<8x1xf32> to vector<8x8xf32>
    %222 = arith.mulf %217, %221 : vector<8x8xf32>
    %cst_53 = arith.constant dense<0.000000e+00> : vector<8x8xf32>
    %223 = tpu.matmul %222, %210, %cst_53 {dimension_numbers = #tpu.dot_dimension_numbers<[1], [0], [0], [1], [0, 0, 1, 1], [], []>} : vector<8x8xf32>, vector<8x8xf32>, vector<8x8xf32> -> vector<8x8xf32>
    %224 = vector.extract_strided_slice %124 {offsets = [8, 16], sizes = [8, 8], strides = [1, 1]} : vector<16x32xf32> to vector<8x8xf32>
    %225 = vector.extract_strided_slice %125 {offsets = [8, 16], sizes = [8, 8], strides = [1, 1]} : vector<16x32xf32> to vector<8x8xf32>
    %226 = vector.extract_strided_slice %126 {offsets = [8, 16], sizes = [8, 8], strides = [1, 1]} : vector<16x32xf32> to vector<8x8xf32>
    %227 = tpu.transpose %225, [1, 0] : vector<8x8xf32> -> vector<8x8xf32>
    %cst_54 = arith.constant dense<0.000000e+00> : vector<8x8xf32>
    %228 = tpu.matmul %224, %227, %cst_54 {dimension_numbers = #tpu.dot_dimension_numbers<[1], [0], [0], [1], [0, 0, 1, 1], [], []>} : vector<8x8xf32>, vector<8x8xf32>, vector<8x8xf32> -> vector<8x8xf32>
    %cst_55 = arith.constant dense<0xFF800000> : vector<8xf32>
    %229 = vector.multi_reduction <maximumf>, %228, %cst_55 [1] : vector<8x8xf32> to vector<8xf32>
    %230 = vector.shape_cast %229 : vector<8xf32> to vector<8x1xf32>
    %231 = vector.broadcast %230 : vector<8x1xf32> to vector<8x8xf32>
    %232 = arith.subf %228, %231 : vector<8x8xf32>
    %233 = math.exp %232 : vector<8x8xf32>
    %cst_56 = arith.constant dense<0.000000e+00> : vector<8xf32>
    %234 = vector.multi_reduction <add>, %233, %cst_56 [1] : vector<8x8xf32> to vector<8xf32>
    %235 = vector.shape_cast %234 : vector<8xf32> to vector<8x1xf32>
    %236 = tpu.reciprocal %235 {approx = true} : vector<8x1xf32> -> vector<8x1xf32>
    %237 = vector.broadcast %236 : vector<8x1xf32> to vector<8x8xf32>
    %238 = arith.mulf %233, %237 : vector<8x8xf32>
    %cst_57 = arith.constant dense<0.000000e+00> : vector<8x8xf32>
    %239 = tpu.matmul %238, %226, %cst_57 {dimension_numbers = #tpu.dot_dimension_numbers<[1], [0], [0], [1], [0, 0, 1, 1], [], []>} : vector<8x8xf32>, vector<8x8xf32>, vector<8x8xf32> -> vector<8x8xf32>
    %240 = vector.extract_strided_slice %124 {offsets = [8, 24], sizes = [8, 8], strides = [1, 1]} : vector<16x32xf32> to vector<8x8xf32>
    %241 = vector.extract_strided_slice %125 {offsets = [8, 24], sizes = [8, 8], strides = [1, 1]} : vector<16x32xf32> to vector<8x8xf32>
    %242 = vector.extract_strided_slice %126 {offsets = [8, 24], sizes = [8, 8], strides = [1, 1]} : vector<16x32xf32> to vector<8x8xf32>
    %243 = tpu.transpose %241, [1, 0] : vector<8x8xf32> -> vector<8x8xf32>
    %cst_58 = arith.constant dense<0.000000e+00> : vector<8x8xf32>
    %244 = tpu.matmul %240, %243, %cst_58 {dimension_numbers = #tpu.dot_dimension_numbers<[1], [0], [0], [1], [0, 0, 1, 1], [], []>} : vector<8x8xf32>, vector<8x8xf32>, vector<8x8xf32> -> vector<8x8xf32>
    %cst_59 = arith.constant dense<0xFF800000> : vector<8xf32>
    %245 = vector.multi_reduction <maximumf>, %244, %cst_59 [1] : vector<8x8xf32> to vector<8xf32>
    %246 = vector.shape_cast %245 : vector<8xf32> to vector<8x1xf32>
    %247 = vector.broadcast %246 : vector<8x1xf32> to vector<8x8xf32>
    %248 = arith.subf %244, %247 : vector<8x8xf32>
    %249 = math.exp %248 : vector<8x8xf32>
    %cst_60 = arith.constant dense<0.000000e+00> : vector<8xf32>
    %250 = vector.multi_reduction <add>, %249, %cst_60 [1] : vector<8x8xf32> to vector<8xf32>
    %251 = vector.shape_cast %250 : vector<8xf32> to vector<8x1xf32>
    %252 = tpu.reciprocal %251 {approx = true} : vector<8x1xf32> -> vector<8x1xf32>
    %253 = vector.broadcast %252 : vector<8x1xf32> to vector<8x8xf32>
    %254 = arith.mulf %249, %253 : vector<8x8xf32>
    %cst_61 = arith.constant dense<0.000000e+00> : vector<8x8xf32>
    %255 = tpu.matmul %254, %242, %cst_61 {dimension_numbers = #tpu.dot_dimension_numbers<[1], [0], [0], [1], [0, 0, 1, 1], [], []>} : vector<8x8xf32>, vector<8x8xf32>, vector<8x8xf32> -> vector<8x8xf32>
    %256 = tpu.concatenate %207, %223, %239, %255 in 1 : vector<8x8xf32>, vector<8x8xf32>, vector<8x8xf32>, vector<8x8xf32> -> vector<8x32xf32>
    %257 = tpu.concatenate %191, %256 in 0 : vector<8x32xf32>, vector<8x32xf32> -> vector<16x32xf32>
    %c0_62 = arith.constant 0 : index
    %c0_63 = arith.constant 0 : index
    %258 = vector.load %arg5[%c0_62, %c0_63] : memref<32x32xf32, #tpu.memory_space<vmem>>, vector<32x32xf32>
    %cst_64 = arith.constant dense<0.000000e+00> : vector<16x32xf32>
    %259 = tpu.matmul %257, %258, %cst_64 {dimension_numbers = #tpu.dot_dimension_numbers<[1], [0], [0], [1], [0, 0, 1, 1], [], []>} : vector<16x32xf32>, vector<32x32xf32>, vector<16x32xf32> -> vector<16x32xf32>
    %c0_65 = arith.constant 0 : index
    %c0_66 = arith.constant 0 : index
    %260 = vector.load %arg6[%c0_65, %c0_66] : memref<1x32xf32, #tpu.memory_space<vmem>>, vector<1x32xf32>
    %261 = vector.broadcast %260 : vector<1x32xf32> to vector<16x32xf32>
    %262 = arith.addf %259, %261 : vector<16x32xf32>
    %263 = arith.addf %116, %262 : vector<16x32xf32>
    %c0_67 = arith.constant 0 : index
    %c0_68 = arith.constant 0 : index
    %264 = vector.load %arg7[%c0_67, %c0_68] : memref<1x32xf32, #tpu.memory_space<vmem>>, vector<1x32xf32>
    %c0_69 = arith.constant 0 : index
    %c0_70 = arith.constant 0 : index
    %265 = vector.load %arg8[%c0_69, %c0_70] : memref<1x32xf32, #tpu.memory_space<vmem>>, vector<1x32xf32>
    %cst_71 = arith.constant dense<0.000000e+00> : vector<16xf32>
    %266 = vector.multi_reduction <add>, %263, %cst_71 [1] : vector<16x32xf32> to vector<16xf32>
    %267 = vector.shape_cast %266 : vector<16xf32> to vector<16x1xf32>
    %cst_72 = arith.constant 3.200000e+01 : f32
    %268 = vector.broadcast %cst_72 : f32 to vector<16x1xf32>
    %269 = arith.divf %267, %268 : vector<16x1xf32>
    %270 = vector.broadcast %269 : vector<16x1xf32> to vector<16x32xf32>
    %271 = arith.subf %263, %270 : vector<16x32xf32>
    %272 = arith.mulf %271, %271 : vector<16x32xf32>
    %cst_73 = arith.constant dense<0.000000e+00> : vector<16xf32>
    %273 = vector.multi_reduction <add>, %272, %cst_73 [1] : vector<16x32xf32> to vector<16xf32>
    %274 = vector.shape_cast %273 : vector<16xf32> to vector<16x1xf32>
    %cst_74 = arith.constant 3.200000e+01 : f32
    %275 = vector.broadcast %cst_74 : f32 to vector<16x1xf32>
    %276 = arith.divf %274, %275 : vector<16x1xf32>
    %277 = vector.broadcast %269 : vector<16x1xf32> to vector<16x32xf32>
    %278 = arith.subf %263, %277 : vector<16x32xf32>
    %cst_75 = arith.constant 9.99999974E-6 : f32
    %279 = vector.broadcast %cst_75 : f32 to vector<16x1xf32>
    %280 = arith.addf %276, %279 : vector<16x1xf32>
    %281 = math.rsqrt %280 : vector<16x1xf32>
    %282 = vector.broadcast %281 : vector<16x1xf32> to vector<16x32xf32>
    %283 = arith.mulf %278, %282 : vector<16x32xf32>
    %284 = vector.broadcast %264 : vector<1x32xf32> to vector<16x32xf32>
    %285 = arith.mulf %283, %284 : vector<16x32xf32>
    %286 = vector.broadcast %265 : vector<1x32xf32> to vector<16x32xf32>
    %287 = arith.addf %285, %286 : vector<16x32xf32>
    %c0_76 = arith.constant 0 : index
    %c0_77 = arith.constant 0 : index
    %288 = vector.load %arg9[%c0_76, %c0_77] : memref<32x2048xf32, #tpu.memory_space<vmem>>, vector<32x2048xf32>
    %cst_78 = arith.constant dense<0.000000e+00> : vector<16x2048xf32>
    %289 = tpu.matmul %287, %288, %cst_78 {dimension_numbers = #tpu.dot_dimension_numbers<[1], [0], [0], [1], [0, 0, 1, 1], [], []>} : vector<16x32xf32>, vector<32x2048xf32>, vector<16x2048xf32> -> vector<16x2048xf32>
    %c0_79 = arith.constant 0 : index
    %c0_80 = arith.constant 0 : index
    %290 = vector.load %arg10[%c0_79, %c0_80] : memref<1x2048xf32, #tpu.memory_space<vmem>>, vector<1x2048xf32>
    %291 = vector.broadcast %290 : vector<1x2048xf32> to vector<16x2048xf32>
    %292 = arith.addf %289, %291 : vector<16x2048xf32>
    %cst_81 = arith.constant 0.000000e+00 : f32
    %293 = vector.broadcast %cst_81 : f32 to vector<16x2048xf32>
    %294 = arith.maximumf %292, %293 : vector<16x2048xf32>
    %c0_82 = arith.constant 0 : index
    %c0_83 = arith.constant 0 : index
    %295 = vector.load %arg11[%c0_82, %c0_83] : memref<2048x32xf32, #tpu.memory_space<vmem>>, vector<2048x32xf32>
    %cst_84 = arith.constant dense<0.000000e+00> : vector<16x32xf32>
    %296 = tpu.matmul %294, %295, %cst_84 {dimension_numbers = #tpu.dot_dimension_numbers<[1], [0], [0], [1], [0, 0, 1, 1], [], []>} : vector<16x2048xf32>, vector<2048x32xf32>, vector<16x32xf32> -> vector<16x32xf32>
    %c0_85 = arith.constant 0 : index
    %c0_86 = arith.constant 0 : index
    %297 = vector.load %arg12[%c0_85, %c0_86] : memref<1x32xf32, #tpu.memory_space<vmem>>, vector<1x32xf32>
    %298 = vector.broadcast %297 : vector<1x32xf32> to vector<16x32xf32>
    %299 = arith.addf %296, %298 : vector<16x32xf32>
    %300 = arith.addf %287, %299 : vector<16x32xf32>
    %c0_87 = arith.constant 0 : index
    %c0_88 = arith.constant 0 : index
    %301 = vector.load %arg13[%c0_87, %c0_88] : memref<1x32xf32, #tpu.memory_space<vmem>>, vector<1x32xf32>
    %c0_89 = arith.constant 0 : index
    %c0_90 = arith.constant 0 : index
    %302 = vector.load %arg14[%c0_89, %c0_90] : memref<1x32xf32, #tpu.memory_space<vmem>>, vector<1x32xf32>
    %cst_91 = arith.constant dense<0.000000e+00> : vector<16xf32>
    %303 = vector.multi_reduction <add>, %300, %cst_91 [1] : vector<16x32xf32> to vector<16xf32>
    %304 = vector.shape_cast %303 : vector<16xf32> to vector<16x1xf32>
    %cst_92 = arith.constant 3.200000e+01 : f32
    %305 = vector.broadcast %cst_92 : f32 to vector<16x1xf32>
    %306 = arith.divf %304, %305 : vector<16x1xf32>
    %307 = vector.broadcast %306 : vector<16x1xf32> to vector<16x32xf32>
    %308 = arith.subf %300, %307 : vector<16x32xf32>
    %309 = arith.mulf %308, %308 : vector<16x32xf32>
    %cst_93 = arith.constant dense<0.000000e+00> : vector<16xf32>
    %310 = vector.multi_reduction <add>, %309, %cst_93 [1] : vector<16x32xf32> to vector<16xf32>
    %311 = vector.shape_cast %310 : vector<16xf32> to vector<16x1xf32>
    %cst_94 = arith.constant 3.200000e+01 : f32
    %312 = vector.broadcast %cst_94 : f32 to vector<16x1xf32>
    %313 = arith.divf %311, %312 : vector<16x1xf32>
    %314 = vector.broadcast %306 : vector<16x1xf32> to vector<16x32xf32>
    %315 = arith.subf %300, %314 : vector<16x32xf32>
    %cst_95 = arith.constant 9.99999974E-6 : f32
    %316 = vector.broadcast %cst_95 : f32 to vector<16x1xf32>
    %317 = arith.addf %313, %316 : vector<16x1xf32>
    %318 = math.rsqrt %317 : vector<16x1xf32>
    %319 = vector.broadcast %318 : vector<16x1xf32> to vector<16x32xf32>
    %320 = arith.mulf %315, %319 : vector<16x32xf32>
    %321 = vector.broadcast %301 : vector<1x32xf32> to vector<16x32xf32>
    %322 = arith.mulf %320, %321 : vector<16x32xf32>
    %323 = vector.broadcast %302 : vector<1x32xf32> to vector<16x32xf32>
    %324 = arith.addf %322, %323 : vector<16x32xf32>
    %c0_96 = arith.constant 0 : index
    %c0_97 = arith.constant 0 : index
    %325 = vector.load %arg15[%c0_96, %c0_97] : memref<32x16xf32, #tpu.memory_space<vmem>>, vector<32x16xf32>
    %cst_98 = arith.constant dense<0.000000e+00> : vector<16x16xf32>
    %326 = tpu.matmul %324, %325, %cst_98 {dimension_numbers = #tpu.dot_dimension_numbers<[1], [0], [0], [1], [0, 0, 1, 1], [], []>} : vector<16x32xf32>, vector<32x16xf32>, vector<16x16xf32> -> vector<16x16xf32>
    %c0_99 = arith.constant 0 : index
    %c0_100 = arith.constant 0 : index
    %327 = vector.load %arg16[%c0_99, %c0_100] : memref<1x16xf32, #tpu.memory_space<vmem>>, vector<1x16xf32>
    %328 = vector.broadcast %327 : vector<1x16xf32> to vector<16x16xf32>
    %329 = arith.addf %326, %328 : vector<16x16xf32>
    %330 = vector.extract_strided_slice %329 {offsets = [0, 0], sizes = [8, 16], strides = [1, 1]} : vector<16x16xf32> to vector<8x16xf32>
    %c0_101 = arith.constant 0 : index
    %c0_102 = arith.constant 0 : index
    %c0_103 = arith.constant 0 : index
    %331 = vector.load %arg17[%c0_101, %c0_102, %c0_103] : memref<2x8x16xf32, #tpu.memory_space<vmem>>, vector<1x8x16xf32>
    %332 = vector.shape_cast %331 : vector<1x8x16xf32> to vector<8x16xf32>
    %333 = vector.shape_cast %330 : vector<8x16xf32> to vector<1x8x16xf32>
    tpu.vector_store %arg17[%c0_101, %c0_102, %c0_103], %333 {strides = array<i32>} : memref<2x8x16xf32, #tpu.memory_space<vmem>>, vector<1x8x16xf32>,
    %334 = vector.extract_strided_slice %329 {offsets = [8, 0], sizes = [8, 16], strides = [1, 1]} : vector<16x16xf32> to vector<8x16xf32>
    %c1_104 = arith.constant 1 : index
    %c0_105 = arith.constant 0 : index
    %c0_106 = arith.constant 0 : index
    %335 = vector.load %arg17[%c1_104, %c0_105, %c0_106] : memref<2x8x16xf32, #tpu.memory_space<vmem>>, vector<1x8x16xf32>
    %336 = vector.shape_cast %335 : vector<1x8x16xf32> to vector<8x16xf32>
    %337 = vector.shape_cast %334 : vector<8x16xf32> to vector<1x8x16xf32>
    tpu.vector_store %arg17[%c1_104, %c0_105, %c0_106], %337 {strides = array<i32>} : memref<2x8x16xf32, #tpu.memory_space<vmem>>, vector<1x8x16xf32>,
    return
  }
  func.func @transform_0(%arg0: i32, %arg1: memref<2x8xi32, #tpu.memory_space<smem>>) -> (i32, i32) {
    %c0_i32 = arith.constant 0 : i32
    %c0_i32_0 = arith.constant 0 : i32
    %c0_i32_1 = arith.constant 0 : i32
    return %c0_i32, %c0_i32_0 : i32, i32
  }
  func.func @transform_1(%arg0: i32, %arg1: memref<2x8xi32, #tpu.memory_space<smem>>) -> (i32, i32) {
    %c0_i32 = arith.constant 0 : i32
    %c0_i32_0 = arith.constant 0 : i32
    %c0_i32_1 = arith.constant 0 : i32
    return %c0_i32, %c0_i32_0 : i32, i32
  }
  func.func @transform_2(%arg0: i32, %arg1: memref<2x8xi32, #tpu.memory_space<smem>>) -> (i32, i32) {
    %c0_i32 = arith.constant 0 : i32
    %c0_i32_0 = arith.constant 0 : i32
    %c0_i32_1 = arith.constant 0 : i32
    return %c0_i32, %c0_i32_0 : i32, i32
  }
  func.func @transform_3(%arg0: i32, %arg1: memref<2x8xi32, #tpu.memory_space<smem>>) -> (i32, i32) {
    %c0_i32 = arith.constant 0 : i32
    %c0_i32_0 = arith.constant 0 : i32
    %c0_i32_1 = arith.constant 0 : i32
    return %c0_i32, %c0_i32_0 : i32, i32
  }
  func.func @transform_4(%arg0: i32, %arg1: memref<2x8xi32, #tpu.memory_space<smem>>) -> (i32, i32) {
    %c0_i32 = arith.constant 0 : i32
    %c0_i32_0 = arith.constant 0 : i32
    %c0_i32_1 = arith.constant 0 : i32
    return %c0_i32, %c0_i32_0 : i32, i32
  }
  func.func @transform_5(%arg0: i32, %arg1: memref<2x8xi32, #tpu.memory_space<smem>>) -> (i32, i32) {
    %c0_i32 = arith.constant 0 : i32
    %c0_i32_0 = arith.constant 0 : i32
    %c0_i32_1 = arith.constant 0 : i32
    return %c0_i32, %c0_i32_0 : i32, i32
  }
  func.func @transform_6(%arg0: i32, %arg1: memref<2x8xi32, #tpu.memory_space<smem>>) -> (i32, i32) {
    %c0_i32 = arith.constant 0 : i32
    %c0_i32_0 = arith.constant 0 : i32
    %c0_i32_1 = arith.constant 0 : i32
    return %c0_i32, %c0_i32_0 : i32, i32
  }
  func.func @transform_7(%arg0: i32, %arg1: memref<2x8xi32, #tpu.memory_space<smem>>) -> (i32, i32) {
    %c0_i32 = arith.constant 0 : i32
    %c0_i32_0 = arith.constant 0 : i32
    %c0_i32_1 = arith.constant 0 : i32
    return %c0_i32, %c0_i32_0 : i32, i32
  }
  func.func @transform_8(%arg0: i32, %arg1: memref<2x8xi32, #tpu.memory_space<smem>>) -> (i32, i32) {
    %c0_i32 = arith.constant 0 : i32
    %c0_i32_0 = arith.constant 0 : i32
    %c0_i32_1 = arith.constant 0 : i32
    return %c0_i32, %c0_i32_0 : i32, i32
  }
  func.func @transform_9(%arg0: i32, %arg1: memref<2x8xi32, #tpu.memory_space<smem>>) -> (i32, i32) {
    %c0_i32 = arith.constant 0 : i32
    %c0_i32_0 = arith.constant 0 : i32
    %c0_i32_1 = arith.constant 0 : i32
    return %c0_i32, %c0_i32_0 : i32, i32
  }
  func.func @transform_10(%arg0: i32, %arg1: memref<2x8xi32, #tpu.memory_space<smem>>) -> (i32, i32) {
    %c0_i32 = arith.constant 0 : i32
    %c0_i32_0 = arith.constant 0 : i32
    %c0_i32_1 = arith.constant 0 : i32
    return %c0_i32, %c0_i32_0 : i32, i32
  }
  func.func @transform_11(%arg0: i32, %arg1: memref<2x8xi32, #tpu.memory_space<smem>>) -> (i32, i32) {
    %c0_i32 = arith.constant 0 : i32
    %c0_i32_0 = arith.constant 0 : i32
    %c0_i32_1 = arith.constant 0 : i32
    return %c0_i32, %c0_i32_0 : i32, i32
  }
  func.func @transform_12(%arg0: i32, %arg1: memref<2x8xi32, #tpu.memory_space<smem>>) -> (i32, i32) {
    %c0_i32 = arith.constant 0 : i32
    %c0_i32_0 = arith.constant 0 : i32
    %c0_i32_1 = arith.constant 0 : i32
    return %c0_i32, %c0_i32_0 : i32, i32
  }
  func.func @transform_13(%arg0: i32, %arg1: memref<2x8xi32, #tpu.memory_space<smem>>) -> (i32, i32) {
    %c0_i32 = arith.constant 0 : i32
    %c0_i32_0 = arith.constant 0 : i32
    %c0_i32_1 = arith.constant 0 : i32
    return %c0_i32, %c0_i32_0 : i32, i32
  }
  func.func @transform_14(%arg0: i32, %arg1: memref<2x8xi32, #tpu.memory_space<smem>>) -> (i32, i32) {
    %c0_i32 = arith.constant 0 : i32
    %c0_i32_0 = arith.constant 0 : i32
    %c0_i32_1 = arith.constant 0 : i32
    return %c0_i32, %c0_i32_0 : i32, i32
  }
  func.func @transform_15(%arg0: i32, %arg1: memref<2x8xi32, #tpu.memory_space<smem>>) -> (i32, i32, i32) {
    %c0_i32 = arith.constant 0 : i32
    %c0_i32_0 = arith.constant 0 : i32
    %c0_i32_1 = arith.constant 0 : i32
    return %arg0, %c0_i32, %c0_i32_0 : i32, i32, i32
  }
}

</mosaic_0001>

<llo_original>
// kernel: tpu_custom_call.1
$region0: #{tpu_custom_call.1}
  #allocation0 [shape = 'u32[]', space=smem, size = 0x4, offset = 0x4, fixed_abs, tag = 'smem constant byte address 0x4 - core index']
  #allocation1 [shape = 'u32[144,128]{1,0:T(1,128)}', space=vmem, size = 0x12000, scoped, tag = 'internal scratch']
  #allocation2 [shape = 's32[1]{0}', space=sflag, size = 0x4, scoped, tag = 'scoped memory for tpu_custom_call.1']
  #allocation3 [shape = 'u8[1024]{0}', space=smem, size = 0x400, scoped, tag = 'prefetched SMEM operand 0']
  %s0 = inlined_call_operand.vmem [shape: s32[2,8], index: 0, kind: input, shape index: {}]
  %s1 = inlined_call_operand.vmem [shape: f32[64,32], index: 1, kind: input, shape index: {}]
  %s2 = inlined_call_operand.vmem [shape: f32[32,96], index: 2, kind: input, shape index: {}]
  %s3 = inlined_call_operand.vmem [shape: f32[1,96], index: 3, kind: input, shape index: {}]
  %s4 = inlined_call_operand.vmem [shape: f32[32,32], index: 4, kind: input, shape index: {}]
  %s5 = inlined_call_operand.vmem [shape: f32[1,32], index: 5, kind: input, shape index: {}]
  %s6 = inlined_call_operand.vmem [shape: f32[1,32], index: 6, kind: input, shape index: {}]
  %s7 = inlined_call_operand.vmem [shape: f32[1,32], index: 7, kind: input, shape index: {}]
  %s8 = inlined_call_operand.vmem [shape: f32[32,2048], index: 8, kind: input, shape index: {}]
  %s9 = inlined_call_operand.vmem [shape: f32[1,2048], index: 9, kind: input, shape index: {}]
  %s10 = inlined_call_operand.vmem [shape: f32[2048,32], index: 10, kind: input, shape index: {}]
  %s11 = inlined_call_operand.vmem [shape: f32[1,32], index: 11, kind: input, shape index: {}]
  %s12 = inlined_call_operand.vmem [shape: f32[1,32], index: 12, kind: input, shape index: {}]
  %s13 = inlined_call_operand.vmem [shape: f32[1,32], index: 13, kind: input, shape index: {}]
  %s14 = inlined_call_operand.vmem [shape: f32[32,16], index: 14, kind: input, shape index: {}]
  %s15 = inlined_call_operand.vmem [shape: f32[1,16], index: 15, kind: input, shape index: {}]
  %s16 = inlined_call_operand.hbm [shape: f32[2,8,16], index: 16, kind: output, shape index: {}]
  %s17 = sld [smem:[#allocation0]]
  $region70: #{tpu_custom_call.1} parent=0
    _
  %s19 = ssub.s32 1, %s17
  %s20 = scalar_select 0, %s19, %s17
  %s21 = sshll.u32 %s0, 4
  %s22 = int_to_ptr.vmem [resolvable:$true] %s21
  %24 = dma.vmem_to_smem %s22, 32, [#allocation3], [#allocation2]
  %25 = dma.done [#allocation2], 32
  %26 = sfence
  $region1: #{tpu_custom_call.1} parent=0
    #allocation4 [shape = 'u8[8192]{0}', space=vmem, size = 0x2000, scoped, tag = 'output window, operand 0, single buffered']
    #allocation5 [shape = 's32[1]{0}', space=sflag, size = 0x4, scoped, tag = 'scoped memory for tpu_custom_call.1']
    %27 = vsyncpa [#allocation5], 0
    // Predicated region
    $region2: #{tpu_custom_call.1} parent=1 // pred_check
      _
    $region3: #{tpu_custom_call.1} parent=1 // pred_check_branch
      %29 = sbr.rel (0) target = $region5
    $region4: #{tpu_custom_call.1} parent=1 // pred_region
      _
    $region5: #{tpu_custom_call.1} parent=1 // pred_fallthru
      _
    // Predicated region
    $region6: #{tpu_custom_call.1} parent=1 // pred_check
      _
    $region7: #{tpu_custom_call.1} parent=1 // pred_check_branch
      %31 = sbr.rel (0) target = $region9
    $region8: #{tpu_custom_call.1} parent=1 // pred_region
      _
    $region9: #{tpu_custom_call.1} parent=1 // pred_fallthru
      _
    // Predicated region
    $region10: #{tpu_custom_call.1} parent=1 // pred_check
      _
    $region11: #{tpu_custom_call.1} parent=1 // pred_check_branch
      %33 = sbr.rel (0) target = $region13
    $region12: #{tpu_custom_call.1} parent=1 // pred_region
      _
    $region13: #{tpu_custom_call.1} parent=1 // pred_fallthru
      _
    // Predicated region
    $region14: #{tpu_custom_call.1} parent=1 // pred_check
      _
    $region15: #{tpu_custom_call.1} parent=1 // pred_check_branch
      %35 = sbr.rel (0) target = $region17
    $region16: #{tpu_custom_call.1} parent=1 // pred_region
      _
    $region17: #{tpu_custom_call.1} parent=1 // pred_fallthru
      _
    // Predicated region
    $region18: #{tpu_custom_call.1} parent=1 // pred_check
      _
    $region19: #{tpu_custom_call.1} parent=1 // pred_check_branch
      %37 = sbr.rel (0) target = $region21
    $region20: #{tpu_custom_call.1} parent=1 // pred_region
      _
    $region21: #{tpu_custom_call.1} parent=1 // pred_fallthru
      _
    // Predicated region
    $region22: #{tpu_custom_call.1} parent=1 // pred_check
      _
    $region23: #{tpu_custom_call.1} parent=1 // pred_check_branch
      %39 = sbr.rel (0) target = $region25
    $region24: #{tpu_custom_call.1} parent=1 // pred_region
      _
    $region25: #{tpu_custom_call.1} parent=1 // pred_fallthru
      _
    // Predicated region
    $region26: #{tpu_custom_call.1} parent=1 // pred_check
      _
    $region27: #{tpu_custom_call.1} parent=1 // pred_check_branch
      %41 = sbr.rel (0) target = $region29
    $region28: #{tpu_custom_call.1} parent=1 // pred_region
      _
    $region29: #{tpu_custom_call.1} parent=1 // pred_fallthru
      _
    // Predicated region
    $region30: #{tpu_custom_call.1} parent=1 // pred_check
      _
    $region31: #{tpu_custom_call.1} parent=1 // pred_check_branch
      %43 = sbr.rel (0) target = $region33
    $region32: #{tpu_custom_call.1} parent=1 // pred_region
      _
    $region33: #{tpu_custom_call.1} parent=1 // pred_fallthru
      _
    // Predicated region
    $region34: #{tpu_custom_call.1} parent=1 // pred_check
      _
    $region35: #{tpu_custom_call.1} parent=1 // pred_check_branch
      %45 = sbr.rel (0) target = $region37
    $region36: #{tpu_custom_call.1} parent=1 // pred_region
      _
    $region37: #{tpu_custom_call.1} parent=1 // pred_fallthru
      _
    // Predicated region
    $region38: #{tpu_custom_call.1} parent=1 // pred_check
      _
    $region39: #{tpu_custom_call.1} parent=1 // pred_check_branch
      %47 = sbr.rel (0) target = $region41
    $region40: #{tpu_custom_call.1} parent=1 // pred_region
      _
    $region41: #{tpu_custom_call.1} parent=1 // pred_fallthru
      _
    // Predicated region
    $region42: #{tpu_custom_call.1} parent=1 // pred_check
      _
    $region43: #{tpu_custom_call.1} parent=1 // pred_check_branch
      %49 = sbr.rel (0) target = $region45
    $region44: #{tpu_custom_call.1} parent=1 // pred_region
      _
    $region45: #{tpu_custom_call.1} parent=1 // pred_fallthru
      _
    // Predicated region
    $region46: #{tpu_custom_call.1} parent=1 // pred_check
      _
    $region47: #{tpu_custom_call.1} parent=1 // pred_check_branch
      %51 = sbr.rel (0) target = $region49
    $region48: #{tpu_custom_call.1} parent=1 // pred_region
      _
    $region49: #{tpu_custom_call.1} parent=1 // pred_fallthru
      _
    // Predicated region
    $region50: #{tpu_custom_call.1} parent=1 // pred_check
      _
    $region51: #{tpu_custom_call.1} parent=1 // pred_check_branch
      %53 = sbr.rel (0) target = $region53
    $region52: #{tpu_custom_call.1} parent=1 // pred_region
      _
    $region53: #{tpu_custom_call.1} parent=1 // pred_fallthru
      _
    // Predicated region
    $region54: #{tpu_custom_call.1} parent=1 // pred_check
      _
    $region55: #{tpu_custom_call.1} parent=1 // pred_check_branch
      %55 = sbr.rel (0) target = $region57
    $region56: #{tpu_custom_call.1} parent=1 // pred_region
      _
    $region57: #{tpu_custom_call.1} parent=1 // pred_fallthru
      _
    // Predicated region
    $region58: #{tpu_custom_call.1} parent=1 // pred_check
      _
    $region59: #{tpu_custom_call.1} parent=1 // pred_check_branch
      %57 = sbr.rel (0) target = $region61
    $region60: #{tpu_custom_call.1} parent=1 // pred_region
      _
    $region61: #{tpu_custom_call.1} parent=1 // pred_fallthru
      _
    %s58 = smul.u32 0, 2
    %v59 = vlaneseq
    %v60 = vand.u32 %v59, 127
    %s61 = smul.u32 %s58, 128
    %s62 = sld [smem:[#allocation3 + %s61]]
    %v63 = vstv %s62
    %vm64 = vcmp.eq.s32.totalorder %v60, %v63
    %v65 = vsel %vm64, 1, 0
    %v66 = vcvt.s32.f32 %v65
    %s67 = sadd.s32 %s61, 1
    %s68 = sld [smem:[#allocation3 + %s67]]
    %v69 = vstv %s68
    %vm70 = vcmp.eq.s32.totalorder %v60, %v69
    %v71 = vsel %vm70, 1, 0
    %v72 = vcvt.s32.f32 %v71
    %s73 = sadd.s32 %s61, 2
    %s74 = sld [smem:[#allocation3 + %s73]]
    %v75 = vstv %s74
    %vm76 = vcmp.eq.s32.totalorder %v60, %v75
    %v77 = vsel %vm76, 1, 0
    %v78 = vcvt.s32.f32 %v77
    %s79 = sadd.s32 %s61, 3
    %s80 = sld [smem:[#allocation3 + %s79]]
    %v81 = vstv %s80
    %vm82 = vcmp.eq.s32.totalorder %v60, %v81
    %v83 = vsel %vm82, 1, 0
    %v84 = vcvt.s32.f32 %v83
    %s85 = sadd.s32 %s61, 4
    %s86 = sld [smem:[#allocation3 + %s85]]
    %v87 = vstv %s86
    %vm88 = vcmp.eq.s32.totalorder %v60, %v87
    %v89 = vsel %vm88, 1, 0
    %v90 = vcvt.s32.f32 %v89
    %s91 = sadd.s32 %s61, 5
    %s92 = sld [smem:[#allocation3 + %s91]]
    %v93 = vstv %s92
    %vm94 = vcmp.eq.s32.totalorder %v60, %v93
    %v95 = vsel %vm94, 1, 0
    %v96 = vcvt.s32.f32 %v95
    %s97 = sadd.s32 %s61, 6
    %s98 = sld [smem:[#allocation3 + %s97]]
    %v99 = vstv %s98
    %vm100 = vcmp.eq.s32.totalorder %v60, %v99
    %v101 = vsel %vm100, 1, 0
    %v102 = vcvt.s32.f32 %v101
    %s103 = sadd.s32 %s61, 7
    %s104 = sld [smem:[#allocation3 + %s103]]
    %v105 = vstv %s104
    %vm106 = vcmp.eq.s32.totalorder %v60, %v105
    %v107 = vsel %vm106, 1, 0
    %v108 = vcvt.s32.f32 %v107
    %s109 = sadd.s32 %s58, 1
    %s110 = smul.u32 %s109, 128
    %s111 = sld [smem:[#allocation3 + %s110]]
    %v112 = vstv %s111
    %vm113 = vcmp.eq.s32.totalorder %v60, %v112
    %v114 = vsel %vm113, 1, 0
    %v115 = vcvt.s32.f32 %v114
    %s116 = sadd.s32 %s110, 1
    %s117 = sld [smem:[#allocation3 + %s116]]
    %v118 = vstv %s117
    %vm119 = vcmp.eq.s32.totalorder %v60, %v118
    %v120 = vsel %vm119, 1, 0
    %v121 = vcvt.s32.f32 %v120
    %s122 = sadd.s32 %s110, 2
    %s123 = sld [smem:[#allocation3 + %s122]]
    %v124 = vstv %s123
    %vm125 = vcmp.eq.s32.totalorder %v60, %v124
    %v126 = vsel %vm125, 1, 0
    %v127 = vcvt.s32.f32 %v126
    %s128 = sadd.s32 %s110, 3
    %s129 = sld [smem:[#allocation3 + %s128]]
    %v130 = vstv %s129
    %vm131 = vcmp.eq.s32.totalorder %v60, %v130
    %v132 = vsel %vm131, 1, 0
    %v133 = vcvt.s32.f32 %v132
    %s134 = sadd.s32 %s110, 4
    %s135 = sld [smem:[#allocation3 + %s134]]
    %v136 = vstv %s135
    %vm137 = vcmp.eq.s32.totalorder %v60, %v136
    %v138 = vsel %vm137, 1, 0
    %v139 = vcvt.s32.f32 %v138
    %s140 = sadd.s32 %s110, 5
    %s141 = sld [smem:[#allocation3 + %s140]]
    %v142 = vstv %s141
    %vm143 = vcmp.eq.s32.totalorder %v60, %v142
    %v144 = vsel %vm143, 1, 0
    %v145 = vcvt.s32.f32 %v144
    %s146 = sadd.s32 %s110, 6
    %s147 = sld [smem:[#allocation3 + %s146]]
    %v148 = vstv %s147
    %vm149 = vcmp.eq.s32.totalorder %v60, %v148
    %v150 = vsel %vm149, 1, 0
    %v151 = vcvt.s32.f32 %v150
    %s152 = sadd.s32 %s110, 7
    %s153 = sld [smem:[#allocation3 + %s152]]
    %v154 = vstv %s153
    %vm155 = vcmp.eq.s32.totalorder %v60, %v154
    %v156 = vsel %vm155, 1, 0
    %v157 = vcvt.s32.f32 %v156
    %vm158 = vcmask 1040384
    %v159 = vsel %vm158, %v66, %v72
    %vm160 = vcmask 1041408
    %v161 = vsel %vm160, %v159, %v78
    %vm162 = vcmask 1042432
    %v163 = vsel %vm162, %v161, %v84
    %vm164 = vcmask 1043456
    %v165 = vsel %vm164, %v163, %v90
    %vm166 = vcmask 1044480
    %v167 = vsel %vm166, %v165, %v96
    %vm168 = vcmask 1045504
    %v169 = vsel %vm168, %v167, %v102
    %vm170 = vcmask 1046528
    %v171 = vsel %vm170, %v169, %v108
    %v172 = vsel %vm158, %v115, %v121
    %v173 = vsel %vm160, %v172, %v127
    %v174 = vsel %vm162, %v173, %v133
    %v175 = vsel %vm164, %v174, %v139
    %v176 = vsel %vm166, %v175, %v145
    %v177 = vsel %vm168, %v176, %v151
    %v178 = vsel %vm170, %v177, %v157
    %v179 = vld [vmem:[%s1] sm:$0xff]
    %v180 = vld [vmem:[%s1 + $0x8] sm:$0xff]
    %v181 = vld [vmem:[%s1 + $0x10] sm:$0xff]
    %v182 = vld [vmem:[%s1 + $0x18] sm:$0xff]
    %v183 = vld [vmem:[%s1 + $0x20] sm:$0xff]
    %v184 = vld [vmem:[%s1 + $0x28] sm:$0xff]
    %v185 = vld [vmem:[%s1 + $0x30] sm:$0xff]
    %v186 = vld [vmem:[%s1 + $0x38] sm:$0xff]
    %vm187 = vcmask 523264
    %v189 = vsel %vm187, %v171, 0
    %v192 = vsel %vm187, %v178, 0
    %194 = vmatprep.subr.mxu0 0.0
    %195 = vmatpush1.msra.mxu0 0.0
    %196 = vmatprep.subr.mxu0 0.0
    %197 = vmatpush1.msra.mxu0 0.0
    %198 = vmatprep.subr.mxu0 0.0
    %199 = vmatpush1.msra.mxu0 0.0
    %200 = vmatprep.subr.mxu0 0.0
    %201 = vmatpush1.msra.mxu0 0.0
    %202 = vmatprep.subr.mxu0 0.0
    %203 = vmatpush1.msra.mxu0 0.0
    %204 = vmatprep.subr.mxu0 0.0
    %205 = vmatpush1.msra.mxu0 0.0
    %206 = vmatprep.subr.mxu0 0.0
    %207 = vmatpush1.msra.mxu0 0.0
    %208 = vmatprep.subr.mxu0 0.0
    %209 = vmatpush1.msra.mxu0 0.0
    %210 = vmatprep.subr.mxu0 0.0
    %211 = vmatpush1.msra.mxu0 %v186
    %212 = vmatprep.subr.mxu0 0.0
    %213 = vmatpush1.msra.mxu0 %v185
    %214 = vmatprep.subr.mxu0 0.0
    %215 = vmatpush1.msra.mxu0 %v184
    %216 = vmatprep.subr.mxu0 0.0
    %217 = vmatpush1.msra.mxu0 %v183
    %218 = vmatprep.subr.mxu0 0.0
    %219 = vmatpush1.msra.mxu0 %v182
    %220 = vmatprep.subr.mxu0 0.0
    %221 = vmatpush1.msra.mxu0 %v181
    %222 = vmatprep.subr.mxu0 0.0
    %223 = vmatpush1.msra.mxu0 %v180
    %224 = vmatprep.subr.mxu0 0.0
    %225 = vmatpush1.msra.mxu0 %v179
    %226 = vmatprep.subr.mxu0 0.0
    %227 = vmatpush2.msra.mxu0 0.0
    %228 = vmatprep.subr.mxu0 0.0
    %229 = vmatpush2.msra.mxu0 0.0
    %230 = vmatprep.subr.mxu0 0.0
    %231 = vmatpush2.msra.mxu0 0.0
    %232 = vmatprep.subr.mxu0 0.0
    %233 = vmatpush2.msra.mxu0 0.0
    %234 = vmatprep.subr.mxu0 0.0
    %235 = vmatpush2.msra.mxu0 0.0
    %236 = vmatprep.subr.mxu0 0.0
    %237 = vmatpush2.msra.mxu0 0.0
    %238 = vmatprep.subr.mxu0 0.0
    %239 = vmatpush2.msra.mxu0 0.0
    %240 = vmatprep.subr.mxu0 0.0
    %241 = vmatpush2.msra.mxu0 0.0
    %242 = vmatprep.subr.mxu0 0.0
    %243 = vmatpush2.msra.mxu0 0.0
    %244 = vmatprep.subr.mxu0 0.0
    %245 = vmatpush2.msra.mxu0 0.0
    %246 = vmatprep.subr.mxu0 0.0
    %247 = vmatpush2.msra.mxu0 0.0
    %248 = vmatprep.subr.mxu0 0.0
    %249 = vmatpush2.msra.mxu0 0.0
    %250 = vmatprep.subr.mxu0 0.0
    %251 = vmatpush2.msra.mxu0 0.0
    %252 = vmatprep.subr.mxu0 0.0
    %253 = vmatpush2.msra.mxu0 0.0
    %254 = vmatprep.subr.mxu0 0.0
    %255 = vmatpush2.msra.mxu0 0.0
    %256 = vmatprep.subr.mxu0 0.0
    %257 = vmatpush2.msra.mxu0 0.0
    %258 = vmatprep.mubr.f32.mxu0 0.0
    %259 = vmatmul.mubr.f32.gmra.mxu0 %v189
    %v260 = vpop.f32.mrf.mxu0
    %v261 = vadd.f32 0.0, %v260
    %v262 = vpop.f32.mrf.mxu0
    %263 = vmatprep.mubr.f32.mxu0 0.0
    %264 = vmatmul.mubr.f32.gmra.mxu0 %v192
    %v265 = vpop.f32.mrf.mxu0
    %v266 = vadd.f32 0.0, %v265
    %v267 = vpop.f32.mrf.mxu0
    %268 = vdwg.mxu0
    %v269 = vld [vmem:[%s2] sm:$0xff]
    %v270 = vld [vmem:[%s2 + $0x8] sm:$0xff]
    %v271 = vld [vmem:[%s2 + $0x10] sm:$0xff]
    %v272 = vld [vmem:[%s2 + $0x18] sm:$0xff]
    %v273 = vld [vmem:[%s3] sm:$0x1]
    %v275 = vlaneseq
    %v276 = vshrl.u32 %v275, 7
    %v277 = vsub.s32 0, %v276
    %v278 = vrot.slane %v273, %v277
    %vm280 = vcmask 261120
    %v282 = vsel %vm280, %v261, 0
    %v285 = vsel %vm280, %v266, 0
    %287 = vmatprep.subr.mxu0 0.0
    %288 = vmatpush1.msra.mxu0 0.0
    %289 = vmatprep.subr.mxu0 0.0
    %290 = vmatpush1.msra.mxu0 0.0
    %291 = vmatprep.subr.mxu0 0.0
    %292 = vmatpush1.msra.mxu0 0.0
    %293 = vmatprep.subr.mxu0 0.0
    %294 = vmatpush1.msra.mxu0 0.0
    %295 = vmatprep.subr.mxu0 0.0
    %296 = vmatpush1.msra.mxu0 0.0
    %297 = vmatprep.subr.mxu0 0.0
    %298 = vmatpush1.msra.mxu0 0.0
    %299 = vmatprep.subr.mxu0 0.0
    %300 = vmatpush1.msra.mxu0 0.0
    %301 = vmatprep.subr.mxu0 0.0
    %302 = vmatpush1.msra.mxu0 0.0
    %303 = vmatprep.subr.mxu0 0.0
    %304 = vmatpush1.msra.mxu0 0.0
    %305 = vmatprep.subr.mxu0 0.0
    %306 = vmatpush1.msra.mxu0 0.0
    %307 = vmatprep.subr.mxu0 0.0
    %308 = vmatpush1.msra.mxu0 0.0
    %309 = vmatprep.subr.mxu0 0.0
    %310 = vmatpush1.msra.mxu0 0.0
    %311 = vmatprep.subr.mxu0 0.0
    %312 = vmatpush1.msra.mxu0 %v272
    %313 = vmatprep.subr.mxu0 0.0
    %314 = vmatpush1.msra.mxu0 %v271
    %315 = vmatprep.subr.mxu0 0.0
    %316 = vmatpush1.msra.mxu0 %v270
    %317 = vmatprep.subr.mxu0 0.0
    %318 = vmatpush1.msra.mxu0 %v269
    %319 = vmatprep.subr.mxu0 0.0
    %320 = vmatpush2.msra.mxu0 0.0
    %321 = vmatprep.subr.mxu0 0.0
    %322 = vmatpush2.msra.mxu0 0.0
    %323 = vmatprep.subr.mxu0 0.0
    %324 = vmatpush2.msra.mxu0 0.0
    %325 = vmatprep.subr.mxu0 0.0
    %326 = vmatpush2.msra.mxu0 0.0
    %327 = vmatprep.subr.mxu0 0.0
    %328 = vmatpush2.msra.mxu0 0.0
    %329 = vmatprep.subr.mxu0 0.0
    %330 = vmatpush2.msra.mxu0 0.0
    %331 = vmatprep.subr.mxu0 0.0
    %332 = vmatpush2.msra.mxu0 0.0
    %333 = vmatprep.subr.mxu0 0.0
    %334 = vmatpush2.msra.mxu0 0.0
    %335 = vmatprep.subr.mxu0 0.0
    %336 = vmatpush2.msra.mxu0 0.0
    %337 = vmatprep.subr.mxu0 0.0
    %338 = vmatpush2.msra.mxu0 0.0
    %339 = vmatprep.subr.mxu0 0.0
    %340 = vmatpush2.msra.mxu0 0.0
    %341 = vmatprep.subr.mxu0 0.0
    %342 = vmatpush2.msra.mxu0 0.0
    %343 = vmatprep.subr.mxu0 0.0
    %344 = vmatpush2.msra.mxu0 0.0
    %345 = vmatprep.subr.mxu0 0.0
    %346 = vmatpush2.msra.mxu0 0.0
    %347 = vmatprep.subr.mxu0 0.0
    %348 = vmatpush2.msra.mxu0 0.0
    %349 = vmatprep.subr.mxu0 0.0
    %350 = vmatpush2.msra.mxu0 0.0
    %351 = vmatprep.mubr.f32.mxu0 0.0
    %352 = vmatmul.mubr.f32.gmra.mxu0 %v282
    %v353 = vpop.f32.mrf.mxu0
    %v354 = vadd.f32 %v278, %v353
    %v355 = vpop.f32.mrf.mxu0
    %356 = vmatprep.mubr.f32.mxu0 0.0
    %357 = vmatmul.mubr.f32.gmra.mxu0 %v285
    %v358 = vpop.f32.mrf.mxu0
    %v359 = vadd.f32 %v278, %v358
    %v360 = vpop.f32.mrf.mxu0
    %361 = vdwg.mxu0
    %v362 = vmul.f32 %v354, 0.35355338
    %v363 = vmul.f32 %v359, 0.35355338
    %365 = vrot.lane.b32.xlu0 %v354, 96
    %v366 = vpop.permute.xlu0 %365
    %vm367 = vcmask 64512
    %v369 = vsel %vm367, %v362, 0
    %v371 = vsel %vm367, %v366, 0
    %373 = vmatprep.subr.mxu0 0.0
    %374 = vmatpush1.xpose.msra.mxu0 0.0
    %375 = vmatprep.subr.mxu0 0.0
    %376 = vmatpush1.xpose.msra.mxu0 0.0
    %377 = vmatprep.subr.mxu0 0.0
    %378 = vmatpush1.xpose.msra.mxu0 0.0
    %379 = vmatprep.subr.mxu0 0.0
    %380 = vmatpush1.xpose.msra.mxu0 0.0
    %381 = vmatprep.subr.mxu0 0.0
    %382 = vmatpush1.xpose.msra.mxu0 0.0
    %383 = vmatprep.subr.mxu0 0.0
    %384 = vmatpush1.xpose.msra.mxu0 0.0
    %385 = vmatprep.subr.mxu0 0.0
    %386 = vmatpush1.xpose.msra.mxu0 0.0
    %387 = vmatprep.subr.mxu0 0.0
    %388 = vmatpush1.xpose.msra.mxu0 0.0
    %389 = vmatprep.subr.mxu0 0.0
    %390 = vmatpush1.xpose.msra.mxu0 0.0
    %391 = vmatprep.subr.mxu0 0.0
    %392 = vmatpush1.xpose.msra.mxu0 0.0
    %393 = vmatprep.subr.mxu0 0.0
    %394 = vmatpush1.xpose.msra.mxu0 0.0
    %395 = vmatprep.subr.mxu0 0.0
    %396 = vmatpush1.xpose.msra.mxu0 0.0
    %397 = vmatprep.subr.mxu0 0.0
    %398 = vmatpush1.xpose.msra.mxu0 0.0
    %399 = vmatprep.subr.mxu0 0.0
    %400 = vmatpush1.xpose.msra.mxu0 0.0
    %401 = vmatprep.subr.mxu0 0.0
    %402 = vmatpush1.xpose.msra.mxu0 0.0
    %403 = vmatprep.subr.mxu0 0.0
    %404 = vmatpush1.xpose.msra.mxu0 %v371
    %405 = vmatprep.subr.mxu0 0.0
    %406 = vmatpush2.xpose.msra.mxu0 0.0
    %407 = vmatprep.subr.mxu0 0.0
    %408 = vmatpush2.xpose.msra.mxu0 0.0
    %409 = vmatprep.subr.mxu0 0.0
    %410 = vmatpush2.xpose.msra.mxu0 0.0
    %411 = vmatprep.subr.mxu0 0.0
    %412 = vmatpush2.xpose.msra.mxu0 0.0
    %413 = vmatprep.subr.mxu0 0.0
    %414 = vmatpush2.xpose.msra.mxu0 0.0
    %415 = vmatprep.subr.mxu0 0.0
    %416 = vmatpush2.xpose.msra.mxu0 0.0
    %417 = vmatprep.subr.mxu0 0.0
    %418 = vmatpush2.xpose.msra.mxu0 0.0
    %419 = vmatprep.subr.mxu0 0.0
    %420 = vmatpush2.xpose.msra.mxu0 0.0
    %421 = vmatprep.subr.mxu0 0.0
    %422 = vmatpush2.xpose.msra.mxu0 0.0
    %423 = vmatprep.subr.mxu0 0.0
    %424 = vmatpush2.xpose.msra.mxu0 0.0
    %425 = vmatprep.subr.mxu0 0.0
    %426 = vmatpush2.xpose.msra.mxu0 0.0
    %427 = vmatprep.subr.mxu0 0.0
    %428 = vmatpush2.xpose.msra.mxu0 0.0
    %429 = vmatprep.subr.mxu0 0.0
    %430 = vmatpush2.xpose.msra.mxu0 0.0
    %431 = vmatprep.subr.mxu0 0.0
    %432 = vmatpush2.xpose.msra.mxu0 0.0
    %433 = vmatprep.subr.mxu0 0.0
    %434 = vmatpush2.xpose.msra.mxu0 0.0
    %435 = vmatprep.subr.mxu0 0.0
    %436 = vmatpush2.xpose.msra.mxu0 0.0
    %437 = vmatprep.mubr.f32.mxu0 0.0
    %438 = vmatmul.mubr.f32.gmra.mxu0 %v369
    %v439 = vpop.f32.mrf.mxu0
    %v440 = vadd.f32 0.0, %v439
    %v441 = vpop.f32.mrf.mxu0
    %442 = vdwg.mxu0
    %v443 = vsel %vm367, %v440, -inf
    %444 = vmax.xlane.f32.xlu0 %v443
    %v445 = vpop.xlane.xlu0 %444
    %v446 = vsub.f32 %v440, %v445
    %v447 = vmul.f32 %v446, 1.442695
    %v448 = vpow.pop %v447
    %v449 = vsel %vm367, %v448, 0.0
    %450 = vadd.xlane.f32.xlu0 %v449
    %v451 = vpop.xlane.xlu0 %450
    %v452 = vrcp.pop %v451
    %v453 = vmul.f32 %v448, %v452
    %454 = vrot.lane.b32.xlu0 %v354, 64
    %v455 = vpop.permute.xlu0 %454
    %v458 = vsel %vm367, %v453, 0
    %460 = vmatprep.subr.mxu0 0.0
    %461 = vmatpush1.msra.mxu0 0.0
    %462 = vmatprep.subr.mxu0 0.0
    %463 = vmatpush1.msra.mxu0 0.0
    %464 = vmatprep.subr.mxu0 0.0
    %465 = vmatpush1.msra.mxu0 0.0
    %466 = vmatprep.subr.mxu0 0.0
    %467 = vmatpush1.msra.mxu0 0.0
    %468 = vmatprep.subr.mxu0 0.0
    %469 = vmatpush1.msra.mxu0 0.0
    %470 = vmatprep.subr.mxu0 0.0
    %471 = vmatpush1.msra.mxu0 0.0
    %472 = vmatprep.subr.mxu0 0.0
    %473 = vmatpush1.msra.mxu0 0.0
    %474 = vmatprep.subr.mxu0 0.0
    %475 = vmatpush1.msra.mxu0 0.0
    %476 = vmatprep.subr.mxu0 0.0
    %477 = vmatpush1.msra.mxu0 0.0
    %478 = vmatprep.subr.mxu0 0.0
    %479 = vmatpush1.msra.mxu0 0.0
    %480 = vmatprep.subr.mxu0 0.0
    %481 = vmatpush1.msra.mxu0 0.0
    %482 = vmatprep.subr.mxu0 0.0
    %483 = vmatpush1.msra.mxu0 0.0
    %484 = vmatprep.subr.mxu0 0.0
    %485 = vmatpush1.msra.mxu0 0.0
    %486 = vmatprep.subr.mxu0 0.0
    %487 = vmatpush1.msra.mxu0 0.0
    %488 = vmatprep.subr.mxu0 0.0
    %489 = vmatpush1.msra.mxu0 0.0
    %490 = vmatprep.subr.mxu0 0.0
    %491 = vmatpush1.msra.mxu0 %v455
    %492 = vmatprep.subr.mxu0 0.0
    %493 = vmatpush2.msra.mxu0 0.0
    %494 = vmatprep.subr.mxu0 0.0
    %495 = vmatpush2.msra.mxu0 0.0
    %496 = vmatprep.subr.mxu0 0.0
    %497 = vmatpush2.msra.mxu0 0.0
    %498 = vmatprep.subr.mxu0 0.0
    %499 = vmatpush2.msra.mxu0 0.0
    %500 = vmatprep.subr.mxu0 0.0
    %501 = vmatpush2.msra.mxu0 0.0
    %502 = vmatprep.subr.mxu0 0.0
    %503 = vmatpush2.msra.mxu0 0.0
    %504 = vmatprep.subr.mxu0 0.0
    %505 = vmatpush2.msra.mxu0 0.0
    %506 = vmatprep.subr.mxu0 0.0
    %507 = vmatpush2.msra.mxu0 0.0
    %508 = vmatprep.subr.mxu0 0.0
    %509 = vmatpush2.msra.mxu0 0.0
    %510 = vmatprep.subr.mxu0 0.0
    %511 = vmatpush2.msra.mxu0 0.0
    %512 = vmatprep.subr.mxu0 0.0
    %513 = vmatpush2.msra.mxu0 0.0
    %514 = vmatprep.subr.mxu0 0.0
    %515 = vmatpush2.msra.mxu0 0.0
    %516 = vmatprep.subr.mxu0 0.0
    %517 = vmatpush2.msra.mxu0 0.0
    %518 = vmatprep.subr.mxu0 0.0
    %519 = vmatpush2.msra.mxu0 0.0
    %520 = vmatprep.subr.mxu0 0.0
    %521 = vmatpush2.msra.mxu0 0.0
    %522 = vmatprep.subr.mxu0 0.0
    %523 = vmatpush2.msra.mxu0 0.0
    %524 = vmatprep.mubr.f32.mxu0 0.0
    %525 = vmatmul.mubr.f32.gmra.mxu0 %v458
    %v526 = vpop.f32.mrf.mxu0
    %v527 = vadd.f32 0.0, %v526
    %v528 = vpop.f32.mrf.mxu0
    %529 = vdwg.mxu0
    %530 = vrot.lane.b32.xlu0 %v362, 120
    %v531 = vpop.permute.xlu0 %530
    %532 = vrot.lane.b32.xlu0 %v354, 88
    %v533 = vpop.permute.xlu0 %532
    %v534 = vsel %vm367, %v531, 0
    %v536 = vsel %vm367, %v533, 0
    %538 = vmatprep.subr.mxu0 0.0
    %539 = vmatpush1.xpose.msra.mxu0 0.0
    %540 = vmatprep.subr.mxu0 0.0
    %541 = vmatpush1.xpose.msra.mxu0 0.0
    %542 = vmatprep.subr.mxu0 0.0
    %543 = vmatpush1.xpose.msra.mxu0 0.0
    %544 = vmatprep.subr.mxu0 0.0
    %545 = vmatpush1.xpose.msra.mxu0 0.0
    %546 = vmatprep.subr.mxu0 0.0
    %547 = vmatpush1.xpose.msra.mxu0 0.0
    %548 = vmatprep.subr.mxu0 0.0
    %549 = vmatpush1.xpose.msra.mxu0 0.0
    %550 = vmatprep.subr.mxu0 0.0
    %551 = vmatpush1.xpose.msra.mxu0 0.0
    %552 = vmatprep.subr.mxu0 0.0
    %553 = vmatpush1.xpose.msra.mxu0 0.0
    %554 = vmatprep.subr.mxu0 0.0
    %555 = vmatpush1.xpose.msra.mxu0 0.0
    %556 = vmatprep.subr.mxu0 0.0
    %557 = vmatpush1.xpose.msra.mxu0 0.0
    %558 = vmatprep.subr.mxu0 0.0
    %559 = vmatpush1.xpose.msra.mxu0 0.0
    %560 = vmatprep.subr.mxu0 0.0
    %561 = vmatpush1.xpose.msra.mxu0 0.0
    %562 = vmatprep.subr.mxu0 0.0
    %563 = vmatpush1.xpose.msra.mxu0 0.0
    %564 = vmatprep.subr.mxu0 0.0
    %565 = vmatpush1.xpose.msra.mxu0 0.0
    %566 = vmatprep.subr.mxu0 0.0
    %567 = vmatpush1.xpose.msra.mxu0 0.0
    %568 = vmatprep.subr.mxu0 0.0
    %569 = vmatpush1.xpose.msra.mxu0 %v536
    %570 = vmatprep.subr.mxu0 0.0
    %571 = vmatpush2.xpose.msra.mxu0 0.0
    %572 = vmatprep.subr.mxu0 0.0
    %573 = vmatpush2.xpose.msra.mxu0 0.0
    %574 = vmatprep.subr.mxu0 0.0
    %575 = vmatpush2.xpose.msra.mxu0 0.0
    %576 = vmatprep.subr.mxu0 0.0
    %577 = vmatpush2.xpose.msra.mxu0 0.0
    %578 = vmatprep.subr.mxu0 0.0
    %579 = vmatpush2.xpose.msra.mxu0 0.0
    %580 = vmatprep.subr.mxu0 0.0
    %581 = vmatpush2.xpose.msra.mxu0 0.0
    %582 = vmatprep.subr.mxu0 0.0
    %583 = vmatpush2.xpose.msra.mxu0 0.0
    %584 = vmatprep.subr.mxu0 0.0
    %585 = vmatpush2.xpose.msra.mxu0 0.0
    %586 = vmatprep.subr.mxu0 0.0
    %587 = vmatpush2.xpose.msra.mxu0 0.0
    %588 = vmatprep.subr.mxu0 0.0
    %589 = vmatpush2.xpose.msra.mxu0 0.0
    %590 = vmatprep.subr.mxu0 0.0
    %591 = vmatpush2.xpose.msra.mxu0 0.0
    %592 = vmatprep.subr.mxu0 0.0
    %593 = vmatpush2.xpose.msra.mxu0 0.0
    %594 = vmatprep.subr.mxu0 0.0
    %595 = vmatpush2.xpose.msra.mxu0 0.0
    %596 = vmatprep.subr.mxu0 0.0
    %597 = vmatpush2.xpose.msra.mxu0 0.0
    %598 = vmatprep.subr.mxu0 0.0
    %599 = vmatpush2.xpose.msra.mxu0 0.0
    %600 = vmatprep.subr.mxu0 0.0
    %601 = vmatpush2.xpose.msra.mxu0 0.0
    %602 = vmatprep.mubr.f32.mxu0 0.0
    %603 = vmatmul.mubr.f32.gmra.mxu0 %v534
    %v604 = vpop.f32.mrf.mxu0
    %v605 = vadd.f32 0.0, %v604
    %v606 = vpop.f32.mrf.mxu0
    %607 = vdwg.mxu0
    %v608 = vsel %vm367, %v605, -inf
    %609 = vmax.xlane.f32.xlu0 %v608
    %v610 = vpop.xlane.xlu0 %609
    %v611 = vsub.f32 %v605, %v610
    %v612 = vmul.f32 %v611, 1.442695
    %v613 = vpow.pop %v612
    %v614 = vsel %vm367, %v613, 0.0
    %615 = vadd.xlane.f32.xlu0 %v614
    %v616 = vpop.xlane.xlu0 %615
    %v617 = vrcp.pop %v616
    %v618 = vmul.f32 %v613, %v617
    %619 = vrot.lane.b32.xlu0 %v354, 56
    %v620 = vpop.permute.xlu0 %619
    %v623 = vsel %vm367, %v618, 0
    %625 = vmatprep.subr.mxu0 0.0
    %626 = vmatpush1.msra.mxu0 0.0
    %627 = vmatprep.subr.mxu0 0.0
    %628 = vmatpush1.msra.mxu0 0.0
    %629 = vmatprep.subr.mxu0 0.0
    %630 = vmatpush1.msra.mxu0 0.0
    %631 = vmatprep.subr.mxu0 0.0
    %632 = vmatpush1.msra.mxu0 0.0
    %633 = vmatprep.subr.mxu0 0.0
    %634 = vmatpush1.msra.mxu0 0.0
    %635 = vmatprep.subr.mxu0 0.0
    %636 = vmatpush1.msra.mxu0 0.0
    %637 = vmatprep.subr.mxu0 0.0
    %638 = vmatpush1.msra.mxu0 0.0
    %639 = vmatprep.subr.mxu0 0.0
    %640 = vmatpush1.msra.mxu0 0.0
    %641 = vmatprep.subr.mxu0 0.0
    %642 = vmatpush1.msra.mxu0 0.0
    %643 = vmatprep.subr.mxu0 0.0
    %644 = vmatpush1.msra.mxu0 0.0
    %645 = vmatprep.subr.mxu0 0.0
    %646 = vmatpush1.msra.mxu0 0.0
    %647 = vmatprep.subr.mxu0 0.0
    %648 = vmatpush1.msra.mxu0 0.0
    %649 = vmatprep.subr.mxu0 0.0
    %650 = vmatpush1.msra.mxu0 0.0
    %651 = vmatprep.subr.mxu0 0.0
    %652 = vmatpush1.msra.mxu0 0.0
    %653 = vmatprep.subr.mxu0 0.0
    %654 = vmatpush1.msra.mxu0 0.0
    %655 = vmatprep.subr.mxu0 0.0
    %656 = vmatpush1.msra.mxu0 %v620
    %657 = vmatprep.subr.mxu0 0.0
    %658 = vmatpush2.msra.mxu0 0.0
    %659 = vmatprep.subr.mxu0 0.0
    %660 = vmatpush2.msra.mxu0 0.0
    %661 = vmatprep.subr.mxu0 0.0
    %662 = vmatpush2.msra.mxu0 0.0
    %663 = vmatprep.subr.mxu0 0.0
    %664 = vmatpush2.msra.mxu0 0.0
    %665 = vmatprep.subr.mxu0 0.0
    %666 = vmatpush2.msra.mxu0 0.0
    %667 = vmatprep.subr.mxu0 0.0
    %668 = vmatpush2.msra.mxu0 0.0
    %669 = vmatprep.subr.mxu0 0.0
    %670 = vmatpush2.msra.mxu0 0.0
    %671 = vmatprep.subr.mxu0 0.0
    %672 = vmatpush2.msra.mxu0 0.0
    %673 = vmatprep.subr.mxu0 0.0
    %674 = vmatpush2.msra.mxu0 0.0
    %675 = vmatprep.subr.mxu0 0.0
    %676 = vmatpush2.msra.mxu0 0.0
    %677 = vmatprep.subr.mxu0 0.0
    %678 = vmatpush2.msra.mxu0 0.0
    %679 = vmatprep.subr.mxu0 0.0
    %680 = vmatpush2.msra.mxu0 0.0
    %681 = vmatprep.subr.mxu0 0.0
    %682 = vmatpush2.msra.mxu0 0.0
    %683 = vmatprep.subr.mxu0 0.0
    %684 = vmatpush2.msra.mxu0 0.0
    %685 = vmatprep.subr.mxu0 0.0
    %686 = vmatpush2.msra.mxu0 0.0
    %687 = vmatprep.subr.mxu0 0.0
    %688 = vmatpush2.msra.mxu0 0.0
    %689 = vmatprep.mubr.f32.mxu0 0.0
    %690 = vmatmul.mubr.f32.gmra.mxu0 %v623
    %v691 = vpop.f32.mrf.mxu0
    %v692 = vadd.f32 0.0, %v691
    %v693 = vpop.f32.mrf.mxu0
    %694 = vdwg.mxu0
    %695 = vrot.lane.b32.xlu0 %v362, 112
    %v696 = vpop.permute.xlu0 %695
    %697 = vrot.lane.b32.xlu0 %v354, 80
    %v698 = vpop.permute.xlu0 %697
    %v699 = vsel %vm367, %v696, 0
    %v701 = vsel %vm367, %v698, 0
    %703 = vmatprep.subr.mxu0 0.0
    %704 = vmatpush1.xpose.msra.mxu0 0.0
    %705 = vmatprep.subr.mxu0 0.0
    %706 = vmatpush1.xpose.msra.mxu0 0.0
    %707 = vmatprep.subr.mxu0 0.0
    %708 = vmatpush1.xpose.msra.mxu0 0.0
    %709 = vmatprep.subr.mxu0 0.0
    %710 = vmatpush1.xpose.msra.mxu0 0.0
    %711 = vmatprep.subr.mxu0 0.0
    %712 = vmatpush1.xpose.msra.mxu0 0.0
    %713 = vmatprep.subr.mxu0 0.0
    %714 = vmatpush1.xpose.msra.mxu0 0.0
    %715 = vmatprep.subr.mxu0 0.0
    %716 = vmatpush1.xpose.msra.mxu0 0.0
    %717 = vmatprep.subr.mxu0 0.0
    %718 = vmatpush1.xpose.msra.mxu0 0.0
    %719 = vmatprep.subr.mxu0 0.0
    %720 = vmatpush1.xpose.msra.mxu0 0.0
    %721 = vmatprep.subr.mxu0 0.0
    %722 = vmatpush1.xpose.msra.mxu0 0.0
    %723 = vmatprep.subr.mxu0 0.0
    %724 = vmatpush1.xpose.msra.mxu0 0.0
    %725 = vmatprep.subr.mxu0 0.0
    %726 = vmatpush1.xpose.msra.mxu0 0.0
    %727 = vmatprep.subr.mxu0 0.0
    %728 = vmatpush1.xpose.msra.mxu0 0.0
    %729 = vmatprep.subr.mxu0 0.0
    %730 = vmatpush1.xpose.msra.mxu0 0.0
    %731 = vmatprep.subr.mxu0 0.0
    %732 = vmatpush1.xpose.msra.mxu0 0.0
    %733 = vmatprep.subr.mxu0 0.0
    %734 = vmatpush1.xpose.msra.mxu0 %v701
    %735 = vmatprep.subr.mxu0 0.0
    %736 = vmatpush2.xpose.msra.mxu0 0.0
    %737 = vmatprep.subr.mxu0 0.0
    %738 = vmatpush2.xpose.msra.mxu0 0.0
    %739 = vmatprep.subr.mxu0 0.0
    %740 = vmatpush2.xpose.msra.mxu0 0.0
    %741 = vmatprep.subr.mxu0 0.0
    %742 = vmatpush2.xpose.msra.mxu0 0.0
    %743 = vmatprep.subr.mxu0 0.0
    %744 = vmatpush2.xpose.msra.mxu0 0.0
    %745 = vmatprep.subr.mxu0 0.0
    %746 = vmatpush2.xpose.msra.mxu0 0.0
    %747 = vmatprep.subr.mxu0 0.0
    %748 = vmatpush2.xpose.msra.mxu0 0.0
    %749 = vmatprep.subr.mxu0 0.0
    %750 = vmatpush2.xpose.msra.mxu0 0.0
    %751 = vmatprep.subr.mxu0 0.0
    %752 = vmatpush2.xpose.msra.mxu0 0.0
    %753 = vmatprep.subr.mxu0 0.0
    %754 = vmatpush2.xpose.msra.mxu0 0.0
    %755 = vmatprep.subr.mxu0 0.0
    %756 = vmatpush2.xpose.msra.mxu0 0.0
    %757 = vmatprep.subr.mxu0 0.0
    %758 = vmatpush2.xpose.msra.mxu0 0.0
    %759 = vmatprep.subr.mxu0 0.0
    %760 = vmatpush2.xpose.msra.mxu0 0.0
    %761 = vmatprep.subr.mxu0 0.0
    %762 = vmatpush2.xpose.msra.mxu0 0.0
    %763 = vmatprep.subr.mxu0 0.0
    %764 = vmatpush2.xpose.msra.mxu0 0.0
    %765 = vmatprep.subr.mxu0 0.0
    %766 = vmatpush2.xpose.msra.mxu0 0.0
    %767 = vmatprep.mubr.f32.mxu0 0.0
    %768 = vmatmul.mubr.f32.gmra.mxu0 %v699
    %v769 = vpop.f32.mrf.mxu0
    %v770 = vadd.f32 0.0, %v769
    %v771 = vpop.f32.mrf.mxu0
    %772 = vdwg.mxu0
    %v773 = vsel %vm367, %v770, -inf
    %774 = vmax.xlane.f32.xlu0 %v773
    %v775 = vpop.xlane.xlu0 %774
    %v776 = vsub.f32 %v770, %v775
    %v777 = vmul.f32 %v776, 1.442695
    %v778 = vpow.pop %v777
    %v779 = vsel %vm367, %v778, 0.0
    %780 = vadd.xlane.f32.xlu0 %v779
    %v781 = vpop.xlane.xlu0 %780
    %v782 = vrcp.pop %v781
    %v783 = vmul.f32 %v778, %v782
    %784 = vrot.lane.b32.xlu0 %v354, 48
    %v785 = vpop.permute.xlu0 %784
    %v788 = vsel %vm367, %v783, 0
    %790 = vmatprep.subr.mxu0 0.0
    %791 = vmatpush1.msra.mxu0 0.0
    %792 = vmatprep.subr.mxu0 0.0
    %793 = vmatpush1.msra.mxu0 0.0
    %794 = vmatprep.subr.mxu0 0.0
    %795 = vmatpush1.msra.mxu0 0.0
    %796 = vmatprep.subr.mxu0 0.0
    %797 = vmatpush1.msra.mxu0 0.0
    %798 = vmatprep.subr.mxu0 0.0
    %799 = vmatpush1.msra.mxu0 0.0
    %800 = vmatprep.subr.mxu0 0.0
    %801 = vmatpush1.msra.mxu0 0.0
    %802 = vmatprep.subr.mxu0 0.0
    %803 = vmatpush1.msra.mxu0 0.0
    %804 = vmatprep.subr.mxu0 0.0
    %805 = vmatpush1.msra.mxu0 0.0
    %806 = vmatprep.subr.mxu0 0.0
    %807 = vmatpush1.msra.mxu0 0.0
    %808 = vmatprep.subr.mxu0 0.0
    %809 = vmatpush1.msra.mxu0 0.0
    %810 = vmatprep.subr.mxu0 0.0
    %811 = vmatpush1.msra.mxu0 0.0
    %812 = vmatprep.subr.mxu0 0.0
    %813 = vmatpush1.msra.mxu0 0.0
    %814 = vmatprep.subr.mxu0 0.0
    %815 = vmatpush1.msra.mxu0 0.0
    %816 = vmatprep.subr.mxu0 0.0
    %817 = vmatpush1.msra.mxu0 0.0
    %818 = vmatprep.subr.mxu0 0.0
    %819 = vmatpush1.msra.mxu0 0.0
    %820 = vmatprep.subr.mxu0 0.0
    %821 = vmatpush1.msra.mxu0 %v785
    %822 = vmatprep.subr.mxu0 0.0
    %823 = vmatpush2.msra.mxu0 0.0
    %824 = vmatprep.subr.mxu0 0.0
    %825 = vmatpush2.msra.mxu0 0.0
    %826 = vmatprep.subr.mxu0 0.0
    %827 = vmatpush2.msra.mxu0 0.0
    %828 = vmatprep.subr.mxu0 0.0
    %829 = vmatpush2.msra.mxu0 0.0
    %830 = vmatprep.subr.mxu0 0.0
    %831 = vmatpush2.msra.mxu0 0.0
    %832 = vmatprep.subr.mxu0 0.0
    %833 = vmatpush2.msra.mxu0 0.0
    %834 = vmatprep.subr.mxu0 0.0
    %835 = vmatpush2.msra.mxu0 0.0
    %836 = vmatprep.subr.mxu0 0.0
    %837 = vmatpush2.msra.mxu0 0.0
    %838 = vmatprep.subr.mxu0 0.0
    %839 = vmatpush2.msra.mxu0 0.0
    %840 = vmatprep.subr.mxu0 0.0
    %841 = vmatpush2.msra.mxu0 0.0
    %842 = vmatprep.subr.mxu0 0.0
    %843 = vmatpush2.msra.mxu0 0.0
    %844 = vmatprep.subr.mxu0 0.0
    %845 = vmatpush2.msra.mxu0 0.0
    %846 = vmatprep.subr.mxu0 0.0
    %847 = vmatpush2.msra.mxu0 0.0
    %848 = vmatprep.subr.mxu0 0.0
    %849 = vmatpush2.msra.mxu0 0.0
    %850 = vmatprep.subr.mxu0 0.0
    %851 = vmatpush2.msra.mxu0 0.0
    %852 = vmatprep.subr.mxu0 0.0
    %853 = vmatpush2.msra.mxu0 0.0
    %854 = vmatprep.mubr.f32.mxu0 0.0
    %855 = vmatmul.mubr.f32.gmra.mxu0 %v788
    %v856 = vpop.f32.mrf.mxu0
    %v857 = vadd.f32 0.0, %v856
    %v858 = vpop.f32.mrf.mxu0
    %859 = vdwg.mxu0
    %860 = vrot.lane.b32.xlu0 %v362, 104
    %v861 = vpop.permute.xlu0 %860
    %862 = vrot.lane.b32.xlu0 %v354, 72
    %v863 = vpop.permute.xlu0 %862
    %v864 = vsel %vm367, %v861, 0
    %v866 = vsel %vm367, %v863, 0
    %868 = vmatprep.subr.mxu0 0.0
    %869 = vmatpush1.xpose.msra.mxu0 0.0
    %870 = vmatprep.subr.mxu0 0.0
    %871 = vmatpush1.xpose.msra.mxu0 0.0
    %872 = vmatprep.subr.mxu0 0.0
    %873 = vmatpush1.xpose.msra.mxu0 0.0
    %874 = vmatprep.subr.mxu0 0.0
    %875 = vmatpush1.xpose.msra.mxu0 0.0
    %876 = vmatprep.subr.mxu0 0.0
    %877 = vmatpush1.xpose.msra.mxu0 0.0
    %878 = vmatprep.subr.mxu0 0.0
    %879 = vmatpush1.xpose.msra.mxu0 0.0
    %880 = vmatprep.subr.mxu0 0.0
    %881 = vmatpush1.xpose.msra.mxu0 0.0
    %882 = vmatprep.subr.mxu0 0.0
    %883 = vmatpush1.xpose.msra.mxu0 0.0
    %884 = vmatprep.subr.mxu0 0.0
    %885 = vmatpush1.xpose.msra.mxu0 0.0
    %886 = vmatprep.subr.mxu0 0.0
    %887 = vmatpush1.xpose.msra.mxu0 0.0
    %888 = vmatprep.subr.mxu0 0.0
    %889 = vmatpush1.xpose.msra.mxu0 0.0
    %890 = vmatprep.subr.mxu0 0.0
    %891 = vmatpush1.xpose.msra.mxu0 0.0
    %892 = vmatprep.subr.mxu0 0.0
    %893 = vmatpush1.xpose.msra.mxu0 0.0
    %894 = vmatprep.subr.mxu0 0.0
    %895 = vmatpush1.xpose.msra.mxu0 0.0
    %896 = vmatprep.subr.mxu0 0.0
    %897 = vmatpush1.xpose.msra.mxu0 0.0
    %898 = vmatprep.subr.mxu0 0.0
    %899 = vmatpush1.xpose.msra.mxu0 %v866
    %900 = vmatprep.subr.mxu0 0.0
    %901 = vmatpush2.xpose.msra.mxu0 0.0
    %902 = vmatprep.subr.mxu0 0.0
    %903 = vmatpush2.xpose.msra.mxu0 0.0
    %904 = vmatprep.subr.mxu0 0.0
    %905 = vmatpush2.xpose.msra.mxu0 0.0
    %906 = vmatprep.subr.mxu0 0.0
    %907 = vmatpush2.xpose.msra.mxu0 0.0
    %908 = vmatprep.subr.mxu0 0.0
    %909 = vmatpush2.xpose.msra.mxu0 0.0
    %910 = vmatprep.subr.mxu0 0.0
    %911 = vmatpush2.xpose.msra.mxu0 0.0
    %912 = vmatprep.subr.mxu0 0.0
    %913 = vmatpush2.xpose.msra.mxu0 0.0
    %914 = vmatprep.subr.mxu0 0.0
    %915 = vmatpush2.xpose.msra.mxu0 0.0
    %916 = vmatprep.subr.mxu0 0.0
    %917 = vmatpush2.xpose.msra.mxu0 0.0
    %918 = vmatprep.subr.mxu0 0.0
    %919 = vmatpush2.xpose.msra.mxu0 0.0
    %920 = vmatprep.subr.mxu0 0.0
    %921 = vmatpush2.xpose.msra.mxu0 0.0
    %922 = vmatprep.subr.mxu0 0.0
    %923 = vmatpush2.xpose.msra.mxu0 0.0
    %924 = vmatprep.subr.mxu0 0.0
    %925 = vmatpush2.xpose.msra.mxu0 0.0
    %926 = vmatprep.subr.mxu0 0.0
    %927 = vmatpush2.xpose.msra.mxu0 0.0
    %928 = vmatprep.subr.mxu0 0.0
    %929 = vmatpush2.xpose.msra.mxu0 0.0
    %930 = vmatprep.subr.mxu0 0.0
    %931 = vmatpush2.xpose.msra.mxu0 0.0
    %932 = vmatprep.mubr.f32.mxu0 0.0
    %933 = vmatmul.mubr.f32.gmra.mxu0 %v864
    %v934 = vpop.f32.mrf.mxu0
    %v935 = vadd.f32 0.0, %v934
    %v936 = vpop.f32.mrf.mxu0
    %937 = vdwg.mxu0
    %v938 = vsel %vm367, %v935, -inf
    %939 = vmax.xlane.f32.xlu0 %v938
    %v940 = vpop.xlane.xlu0 %939
    %v941 = vsub.f32 %v935, %v940
    %v942 = vmul.f32 %v941, 1.442695
    %v943 = vpow.pop %v942
    %v944 = vsel %vm367, %v943, 0.0
    %945 = vadd.xlane.f32.xlu0 %v944
    %v946 = vpop.xlane.xlu0 %945
    %v947 = vrcp.pop %v946
    %v948 = vmul.f32 %v943, %v947
    %949 = vrot.lane.b32.xlu0 %v354, 40
    %v950 = vpop.permute.xlu0 %949
    %v953 = vsel %vm367, %v948, 0
    %955 = vmatprep.subr.mxu0 0.0
    %956 = vmatpush1.msra.mxu0 0.0
    %957 = vmatprep.subr.mxu0 0.0
    %958 = vmatpush1.msra.mxu0 0.0
    %959 = vmatprep.subr.mxu0 0.0
    %960 = vmatpush1.msra.mxu0 0.0
    %961 = vmatprep.subr.mxu0 0.0
    %962 = vmatpush1.msra.mxu0 0.0
    %963 = vmatprep.subr.mxu0 0.0
    %964 = vmatpush1.msra.mxu0 0.0
    %965 = vmatprep.subr.mxu0 0.0
    %966 = vmatpush1.msra.mxu0 0.0
    %967 = vmatprep.subr.mxu0 0.0
    %968 = vmatpush1.msra.mxu0 0.0
    %969 = vmatprep.subr.mxu0 0.0
    %970 = vmatpush1.msra.mxu0 0.0
    %971 = vmatprep.subr.mxu0 0.0
    %972 = vmatpush1.msra.mxu0 0.0
    %973 = vmatprep.subr.mxu0 0.0
    %974 = vmatpush1.msra.mxu0 0.0
    %975 = vmatprep.subr.mxu0 0.0
    %976 = vmatpush1.msra.mxu0 0.0
    %977 = vmatprep.subr.mxu0 0.0
    %978 = vmatpush1.msra.mxu0 0.0
    %979 = vmatprep.subr.mxu0 0.0
    %980 = vmatpush1.msra.mxu0 0.0
    %981 = vmatprep.subr.mxu0 0.0
    %982 = vmatpush1.msra.mxu0 0.0
    %983 = vmatprep.subr.mxu0 0.0
    %984 = vmatpush1.msra.mxu0 0.0
    %985 = vmatprep.subr.mxu0 0.0
    %986 = vmatpush1.msra.mxu0 %v950
    %987 = vmatprep.subr.mxu0 0.0
    %988 = vmatpush2.msra.mxu0 0.0
    %989 = vmatprep.subr.mxu0 0.0
    %990 = vmatpush2.msra.mxu0 0.0
    %991 = vmatprep.subr.mxu0 0.0
    %992 = vmatpush2.msra.mxu0 0.0
    %993 = vmatprep.subr.mxu0 0.0
    %994 = vmatpush2.msra.mxu0 0.0
    %995 = vmatprep.subr.mxu0 0.0
    %996 = vmatpush2.msra.mxu0 0.0
    %997 = vmatprep.subr.mxu0 0.0
    %998 = vmatpush2.msra.mxu0 0.0
    %999 = vmatprep.subr.mxu0 0.0
    %1000 = vmatpush2.msra.mxu0 0.0
    %1001 = vmatprep.subr.mxu0 0.0
    %1002 = vmatpush2.msra.mxu0 0.0
    %1003 = vmatprep.subr.mxu0 0.0
    %1004 = vmatpush2.msra.mxu0 0.0
    %1005 = vmatprep.subr.mxu0 0.0
    %1006 = vmatpush2.msra.mxu0 0.0
    %1007 = vmatprep.subr.mxu0 0.0
    %1008 = vmatpush2.msra.mxu0 0.0
    %1009 = vmatprep.subr.mxu0 0.0
    %1010 = vmatpush2.msra.mxu0 0.0
    %1011 = vmatprep.subr.mxu0 0.0
    %1012 = vmatpush2.msra.mxu0 0.0
    %1013 = vmatprep.subr.mxu0 0.0
    %1014 = vmatpush2.msra.mxu0 0.0
    %1015 = vmatprep.subr.mxu0 0.0
    %1016 = vmatpush2.msra.mxu0 0.0
    %1017 = vmatprep.subr.mxu0 0.0
    %1018 = vmatpush2.msra.mxu0 0.0
    %1019 = vmatprep.mubr.f32.mxu0 0.0
    %1020 = vmatmul.mubr.f32.gmra.mxu0 %v953
    %v1021 = vpop.f32.mrf.mxu0
    %v1022 = vadd.f32 0.0, %v1021
    %v1023 = vpop.f32.mrf.mxu0
    %1024 = vdwg.mxu0
    %1026 = vrot.lane.b32.xlu0 %v692, 8
    %v1027 = vpop.permute.xlu0 %1026
    %1030 = vrot.lane.b32.xlu0 %v857, 16
    %v1031 = vpop.permute.xlu0 %1030
    %1034 = vrot.lane.b32.xlu0 %v1022, 24
    %v1035 = vpop.permute.xlu0 %1034
    %v1037 = vsel %vm367, %v527, %v1027
    %vm1038 = vcmask 130048
    %v1039 = vsel %vm1038, %v1037, %v1031
    %vm1040 = vcmask 195584
    %v1041 = vsel %vm1040, %v1039, %v1035
    %1043 = vrot.lane.b32.xlu0 %v359, 96
    %v1044 = vpop.permute.xlu0 %1043
    %v1046 = vsel %vm367, %v363, 0
    %v1048 = vsel %vm367, %v1044, 0
    %1050 = vmatprep.subr.mxu0 0.0
    %1051 = vmatpush1.xpose.msra.mxu0 0.0
    %1052 = vmatprep.subr.mxu0 0.0
    %1053 = vmatpush1.xpose.msra.mxu0 0.0
    %1054 = vmatprep.subr.mxu0 0.0
    %1055 = vmatpush1.xpose.msra.mxu0 0.0
    %1056 = vmatprep.subr.mxu0 0.0
    %1057 = vmatpush1.xpose.msra.mxu0 0.0
    %1058 = vmatprep.subr.mxu0 0.0
    %1059 = vmatpush1.xpose.msra.mxu0 0.0
    %1060 = vmatprep.subr.mxu0 0.0
    %1061 = vmatpush1.xpose.msra.mxu0 0.0
    %1062 = vmatprep.subr.mxu0 0.0
    %1063 = vmatpush1.xpose.msra.mxu0 0.0
    %1064 = vmatprep.subr.mxu0 0.0
    %1065 = vmatpush1.xpose.msra.mxu0 0.0
    %1066 = vmatprep.subr.mxu0 0.0
    %1067 = vmatpush1.xpose.msra.mxu0 0.0
    %1068 = vmatprep.subr.mxu0 0.0
    %1069 = vmatpush1.xpose.msra.mxu0 0.0
    %1070 = vmatprep.subr.mxu0 0.0
    %1071 = vmatpush1.xpose.msra.mxu0 0.0
    %1072 = vmatprep.subr.mxu0 0.0
    %1073 = vmatpush1.xpose.msra.mxu0 0.0
    %1074 = vmatprep.subr.mxu0 0.0
    %1075 = vmatpush1.xpose.msra.mxu0 0.0
    %1076 = vmatprep.subr.mxu0 0.0
    %1077 = vmatpush1.xpose.msra.mxu0 0.0
    %1078 = vmatprep.subr.mxu0 0.0
    %1079 = vmatpush1.xpose.msra.mxu0 0.0
    %1080 = vmatprep.subr.mxu0 0.0
    %1081 = vmatpush1.xpose.msra.mxu0 %v1048
    %1082 = vmatprep.subr.mxu0 0.0
    %1083 = vmatpush2.xpose.msra.mxu0 0.0
    %1084 = vmatprep.subr.mxu0 0.0
    %1085 = vmatpush2.xpose.msra.mxu0 0.0
    %1086 = vmatprep.subr.mxu0 0.0
    %1087 = vmatpush2.xpose.msra.mxu0 0.0
    %1088 = vmatprep.subr.mxu0 0.0
    %1089 = vmatpush2.xpose.msra.mxu0 0.0
    %1090 = vmatprep.subr.mxu0 0.0
    %1091 = vmatpush2.xpose.msra.mxu0 0.0
    %1092 = vmatprep.subr.mxu0 0.0
    %1093 = vmatpush2.xpose.msra.mxu0 0.0
    %1094 = vmatprep.subr.mxu0 0.0
    %1095 = vmatpush2.xpose.msra.mxu0 0.0
    %1096 = vmatprep.subr.mxu0 0.0
    %1097 = vmatpush2.xpose.msra.mxu0 0.0
    %1098 = vmatprep.subr.mxu0 0.0
    %1099 = vmatpush2.xpose.msra.mxu0 0.0
    %1100 = vmatprep.subr.mxu0 0.0
    %1101 = vmatpush2.xpose.msra.mxu0 0.0
    %1102 = vmatprep.subr.mxu0 0.0
    %1103 = vmatpush2.xpose.msra.mxu0 0.0
    %1104 = vmatprep.subr.mxu0 0.0
    %1105 = vmatpush2.xpose.msra.mxu0 0.0
    %1106 = vmatprep.subr.mxu0 0.0
    %1107 = vmatpush2.xpose.msra.mxu0 0.0
    %1108 = vmatprep.subr.mxu0 0.0
    %1109 = vmatpush2.xpose.msra.mxu0 0.0
    %1110 = vmatprep.subr.mxu0 0.0
    %1111 = vmatpush2.xpose.msra.mxu0 0.0
    %1112 = vmatprep.subr.mxu0 0.0
    %1113 = vmatpush2.xpose.msra.mxu0 0.0
    %1114 = vmatprep.mubr.f32.mxu0 0.0
    %1115 = vmatmul.mubr.f32.gmra.mxu0 %v1046
    %v1116 = vpop.f32.mrf.mxu0
    %v1117 = vadd.f32 0.0, %v1116
    %v1118 = vpop.f32.mrf.mxu0
    %1119 = vdwg.mxu0
    %v1120 = vsel %vm367, %v1117, -inf
    %1121 = vmax.xlane.f32.xlu0 %v1120
    %v1122 = vpop.xlane.xlu0 %1121
    %v1123 = vsub.f32 %v1117, %v1122
    %v1124 = vmul.f32 %v1123, 1.442695
    %v1125 = vpow.pop %v1124
    %v1126 = vsel %vm367, %v1125, 0.0
    %1127 = vadd.xlane.f32.xlu0 %v1126
    %v1128 = vpop.xlane.xlu0 %1127
    %v1129 = vrcp.pop %v1128
    %v1130 = vmul.f32 %v1125, %v1129
    %1131 = vrot.lane.b32.xlu0 %v359, 64
    %v1132 = vpop.permute.xlu0 %1131
    %v1135 = vsel %vm367, %v1130, 0
    %1137 = vmatprep.subr.mxu0 0.0
    %1138 = vmatpush1.msra.mxu0 0.0
    %1139 = vmatprep.subr.mxu0 0.0
    %1140 = vmatpush1.msra.mxu0 0.0
    %1141 = vmatprep.subr.mxu0 0.0
    %1142 = vmatpush1.msra.mxu0 0.0
    %1143 = vmatprep.subr.mxu0 0.0
    %1144 = vmatpush1.msra.mxu0 0.0
    %1145 = vmatprep.subr.mxu0 0.0
    %1146 = vmatpush1.msra.mxu0 0.0
    %1147 = vmatprep.subr.mxu0 0.0
    %1148 = vmatpush1.msra.mxu0 0.0
    %1149 = vmatprep.subr.mxu0 0.0
    %1150 = vmatpush1.msra.mxu0 0.0
    %1151 = vmatprep.subr.mxu0 0.0
    %1152 = vmatpush1.msra.mxu0 0.0
    %1153 = vmatprep.subr.mxu0 0.0
    %1154 = vmatpush1.msra.mxu0 0.0
    %1155 = vmatprep.subr.mxu0 0.0
    %1156 = vmatpush1.msra.mxu0 0.0
    %1157 = vmatprep.subr.mxu0 0.0
    %1158 = vmatpush1.msra.mxu0 0.0
    %1159 = vmatprep.subr.mxu0 0.0
    %1160 = vmatpush1.msra.mxu0 0.0
    %1161 = vmatprep.subr.mxu0 0.0
    %1162 = vmatpush1.msra.mxu0 0.0
    %1163 = vmatprep.subr.mxu0 0.0
    %1164 = vmatpush1.msra.mxu0 0.0
    %1165 = vmatprep.subr.mxu0 0.0
    %1166 = vmatpush1.msra.mxu0 0.0
    %1167 = vmatprep.subr.mxu0 0.0
    %1168 = vmatpush1.msra.mxu0 %v1132
    %1169 = vmatprep.subr.mxu0 0.0
    %1170 = vmatpush2.msra.mxu0 0.0
    %1171 = vmatprep.subr.mxu0 0.0
    %1172 = vmatpush2.msra.mxu0 0.0
    %1173 = vmatprep.subr.mxu0 0.0
    %1174 = vmatpush2.msra.mxu0 0.0
    %1175 = vmatprep.subr.mxu0 0.0
    %1176 = vmatpush2.msra.mxu0 0.0
    %1177 = vmatprep.subr.mxu0 0.0
    %1178 = vmatpush2.msra.mxu0 0.0
    %1179 = vmatprep.subr.mxu0 0.0
    %1180 = vmatpush2.msra.mxu0 0.0
    %1181 = vmatprep.subr.mxu0 0.0
    %1182 = vmatpush2.msra.mxu0 0.0
    %1183 = vmatprep.subr.mxu0 0.0
    %1184 = vmatpush2.msra.mxu0 0.0
    %1185 = vmatprep.subr.mxu0 0.0
    %1186 = vmatpush2.msra.mxu0 0.0
    %1187 = vmatprep.subr.mxu0 0.0
    %1188 = vmatpush2.msra.mxu0 0.0
    %1189 = vmatprep.subr.mxu0 0.0
    %1190 = vmatpush2.msra.mxu0 0.0
    %1191 = vmatprep.subr.mxu0 0.0
    %1192 = vmatpush2.msra.mxu0 0.0
    %1193 = vmatprep.subr.mxu0 0.0
    %1194 = vmatpush2.msra.mxu0 0.0
    %1195 = vmatprep.subr.mxu0 0.0
    %1196 = vmatpush2.msra.mxu0 0.0
    %1197 = vmatprep.subr.mxu0 0.0
    %1198 = vmatpush2.msra.mxu0 0.0
    %1199 = vmatprep.subr.mxu0 0.0
    %1200 = vmatpush2.msra.mxu0 0.0
    %1201 = vmatprep.mubr.f32.mxu0 0.0
    %1202 = vmatmul.mubr.f32.gmra.mxu0 %v1135
    %v1203 = vpop.f32.mrf.mxu0
    %v1204 = vadd.f32 0.0, %v1203
    %v1205 = vpop.f32.mrf.mxu0
    %1206 = vdwg.mxu0
    %1207 = vrot.lane.b32.xlu0 %v363, 120
    %v1208 = vpop.permute.xlu0 %1207
    %1209 = vrot.lane.b32.xlu0 %v359, 88
    %v1210 = vpop.permute.xlu0 %1209
    %v1211 = vsel %vm367, %v1208, 0
    %v1213 = vsel %vm367, %v1210, 0
    %1215 = vmatprep.subr.mxu0 0.0
    %1216 = vmatpush1.xpose.msra.mxu0 0.0
    %1217 = vmatprep.subr.mxu0 0.0
    %1218 = vmatpush1.xpose.msra.mxu0 0.0
    %1219 = vmatprep.subr.mxu0 0.0
    %1220 = vmatpush1.xpose.msra.mxu0 0.0
    %1221 = vmatprep.subr.mxu0 0.0
    %1222 = vmatpush1.xpose.msra.mxu0 0.0
    %1223 = vmatprep.subr.mxu0 0.0
    %1224 = vmatpush1.xpose.msra.mxu0 0.0
    %1225 = vmatprep.subr.mxu0 0.0
    %1226 = vmatpush1.xpose.msra.mxu0 0.0
    %1227 = vmatprep.subr.mxu0 0.0
    %1228 = vmatpush1.xpose.msra.mxu0 0.0
    %1229 = vmatprep.subr.mxu0 0.0
    %1230 = vmatpush1.xpose.msra.mxu0 0.0
    %1231 = vmatprep.subr.mxu0 0.0
    %1232 = vmatpush1.xpose.msra.mxu0 0.0
    %1233 = vmatprep.subr.mxu0 0.0
    %1234 = vmatpush1.xpose.msra.mxu0 0.0
    %1235 = vmatprep.subr.mxu0 0.0
    %1236 = vmatpush1.xpose.msra.mxu0 0.0
    %1237 = vmatprep.subr.mxu0 0.0
    %1238 = vmatpush1.xpose.msra.mxu0 0.0
    %1239 = vmatprep.subr.mxu0 0.0
    %1240 = vmatpush1.xpose.msra.mxu0 0.0
    %1241 = vmatprep.subr.mxu0 0.0
    %1242 = vmatpush1.xpose.msra.mxu0 0.0
    %1243 = vmatprep.subr.mxu0 0.0
    %1244 = vmatpush1.xpose.msra.mxu0 0.0
    %1245 = vmatprep.subr.mxu0 0.0
    %1246 = vmatpush1.xpose.msra.mxu0 %v1213
    %1247 = vmatprep.subr.mxu0 0.0
    %1248 = vmatpush2.xpose.msra.mxu0 0.0
    %1249 = vmatprep.subr.mxu0 0.0
    %1250 = vmatpush2.xpose.msra.mxu0 0.0
    %1251 = vmatprep.subr.mxu0 0.0
    %1252 = vmatpush2.xpose.msra.mxu0 0.0
    %1253 = vmatprep.subr.mxu0 0.0
    %1254 = vmatpush2.xpose.msra.mxu0 0.0
    %1255 = vmatprep.subr.mxu0 0.0
    %1256 = vmatpush2.xpose.msra.mxu0 0.0
    %1257 = vmatprep.subr.mxu0 0.0
    %1258 = vmatpush2.xpose.msra.mxu0 0.0
    %1259 = vmatprep.subr.mxu0 0.0
    %1260 = vmatpush2.xpose.msra.mxu0 0.0
    %1261 = vmatprep.subr.mxu0 0.0
    %1262 = vmatpush2.xpose.msra.mxu0 0.0
    %1263 = vmatprep.subr.mxu0 0.0
    %1264 = vmatpush2.xpose.msra.mxu0 0.0
    %1265 = vmatprep.subr.mxu0 0.0
    %1266 = vmatpush2.xpose.msra.mxu0 0.0
    %1267 = vmatprep.subr.mxu0 0.0
    %1268 = vmatpush2.xpose.msra.mxu0 0.0
    %1269 = vmatprep.subr.mxu0 0.0
    %1270 = vmatpush2.xpose.msra.mxu0 0.0
    %1271 = vmatprep.subr.mxu0 0.0
    %1272 = vmatpush2.xpose.msra.mxu0 0.0
    %1273 = vmatprep.subr.mxu0 0.0
    %1274 = vmatpush2.xpose.msra.mxu0 0.0
    %1275 = vmatprep.subr.mxu0 0.0
    %1276 = vmatpush2.xpose.msra.mxu0 0.0
    %1277 = vmatprep.subr.mxu0 0.0
    %1278 = vmatpush2.xpose.msra.mxu0 0.0
    %1279 = vmatprep.mubr.f32.mxu0 0.0
    %1280 = vmatmul.mubr.f32.gmra.mxu0 %v1211
    %v1281 = vpop.f32.mrf.mxu0
    %v1282 = vadd.f32 0.0, %v1281
    %v1283 = vpop.f32.mrf.mxu0
    %1284 = vdwg.mxu0
    %v1285 = vsel %vm367, %v1282, -inf
    %1286 = vmax.xlane.f32.xlu0 %v1285
    %v1287 = vpop.xlane.xlu0 %1286
    %v1288 = vsub.f32 %v1282, %v1287
    %v1289 = vmul.f32 %v1288, 1.442695
    %v1290 = vpow.pop %v1289
    %v1291 = vsel %vm367, %v1290, 0.0
    %1292 = vadd.xlane.f32.xlu0 %v1291
    %v1293 = vpop.xlane.xlu0 %1292
    %v1294 = vrcp.pop %v1293
    %v1295 = vmul.f32 %v1290, %v1294
    %1296 = vrot.lane.b32.xlu0 %v359, 56
    %v1297 = vpop.permute.xlu0 %1296
    %v1300 = vsel %vm367, %v1295, 0
    %1302 = vmatprep.subr.mxu0 0.0
    %1303 = vmatpush1.msra.mxu0 0.0
    %1304 = vmatprep.subr.mxu0 0.0
    %1305 = vmatpush1.msra.mxu0 0.0
    %1306 = vmatprep.subr.mxu0 0.0
    %1307 = vmatpush1.msra.mxu0 0.0
    %1308 = vmatprep.subr.mxu0 0.0
    %1309 = vmatpush1.msra.mxu0 0.0
    %1310 = vmatprep.subr.mxu0 0.0
    %1311 = vmatpush1.msra.mxu0 0.0
    %1312 = vmatprep.subr.mxu0 0.0
    %1313 = vmatpush1.msra.mxu0 0.0
    %1314 = vmatprep.subr.mxu0 0.0
    %1315 = vmatpush1.msra.mxu0 0.0
    %1316 = vmatprep.subr.mxu0 0.0
    %1317 = vmatpush1.msra.mxu0 0.0
    %1318 = vmatprep.subr.mxu0 0.0
    %1319 = vmatpush1.msra.mxu0 0.0
    %1320 = vmatprep.subr.mxu0 0.0
    %1321 = vmatpush1.msra.mxu0 0.0
    %1322 = vmatprep.subr.mxu0 0.0
    %1323 = vmatpush1.msra.mxu0 0.0
    %1324 = vmatprep.subr.mxu0 0.0
    %1325 = vmatpush1.msra.mxu0 0.0
    %1326 = vmatprep.subr.mxu0 0.0
    %1327 = vmatpush1.msra.mxu0 0.0
    %1328 = vmatprep.subr.mxu0 0.0
    %1329 = vmatpush1.msra.mxu0 0.0
    %1330 = vmatprep.subr.mxu0 0.0
    %1331 = vmatpush1.msra.mxu0 0.0
    %1332 = vmatprep.subr.mxu0 0.0
    %1333 = vmatpush1.msra.mxu0 %v1297
    %1334 = vmatprep.subr.mxu0 0.0
    %1335 = vmatpush2.msra.mxu0 0.0
    %1336 = vmatprep.subr.mxu0 0.0
    %1337 = vmatpush2.msra.mxu0 0.0
    %1338 = vmatprep.subr.mxu0 0.0
    %1339 = vmatpush2.msra.mxu0 0.0
    %1340 = vmatprep.subr.mxu0 0.0
    %1341 = vmatpush2.msra.mxu0 0.0
    %1342 = vmatprep.subr.mxu0 0.0
    %1343 = vmatpush2.msra.mxu0 0.0
    %1344 = vmatprep.subr.mxu0 0.0
    %1345 = vmatpush2.msra.mxu0 0.0
    %1346 = vmatprep.subr.mxu0 0.0
    %1347 = vmatpush2.msra.mxu0 0.0
    %1348 = vmatprep.subr.mxu0 0.0
    %1349 = vmatpush2.msra.mxu0 0.0
    %1350 = vmatprep.subr.mxu0 0.0
    %1351 = vmatpush2.msra.mxu0 0.0
    %1352 = vmatprep.subr.mxu0 0.0
    %1353 = vmatpush2.msra.mxu0 0.0
    %1354 = vmatprep.subr.mxu0 0.0
    %1355 = vmatpush2.msra.mxu0 0.0
    %1356 = vmatprep.subr.mxu0 0.0
    %1357 = vmatpush2.msra.mxu0 0.0
    %1358 = vmatprep.subr.mxu0 0.0
    %1359 = vmatpush2.msra.mxu0 0.0
    %1360 = vmatprep.subr.mxu0 0.0
    %1361 = vmatpush2.msra.mxu0 0.0
    %1362 = vmatprep.subr.mxu0 0.0
    %1363 = vmatpush2.msra.mxu0 0.0
    %1364 = vmatprep.subr.mxu0 0.0
    %1365 = vmatpush2.msra.mxu0 0.0
    %1366 = vmatprep.mubr.f32.mxu0 0.0
    %1367 = vmatmul.mubr.f32.gmra.mxu0 %v1300
    %v1368 = vpop.f32.mrf.mxu0
    %v1369 = vadd.f32 0.0, %v1368
    %v1370 = vpop.f32.mrf.mxu0
    %1371 = vdwg.mxu0
    %1372 = vrot.lane.b32.xlu0 %v363, 112
    %v1373 = vpop.permute.xlu0 %1372
    %1374 = vrot.lane.b32.xlu0 %v359, 80
    %v1375 = vpop.permute.xlu0 %1374
    %v1376 = vsel %vm367, %v1373, 0
    %v1378 = vsel %vm367, %v1375, 0
    %1380 = vmatprep.subr.mxu0 0.0
    %1381 = vmatpush1.xpose.msra.mxu0 0.0
    %1382 = vmatprep.subr.mxu0 0.0
    %1383 = vmatpush1.xpose.msra.mxu0 0.0
    %1384 = vmatprep.subr.mxu0 0.0
    %1385 = vmatpush1.xpose.msra.mxu0 0.0
    %1386 = vmatprep.subr.mxu0 0.0
    %1387 = vmatpush1.xpose.msra.mxu0 0.0
    %1388 = vmatprep.subr.mxu0 0.0
    %1389 = vmatpush1.xpose.msra.mxu0 0.0
    %1390 = vmatprep.subr.mxu0 0.0
    %1391 = vmatpush1.xpose.msra.mxu0 0.0
    %1392 = vmatprep.subr.mxu0 0.0
    %1393 = vmatpush1.xpose.msra.mxu0 0.0
    %1394 = vmatprep.subr.mxu0 0.0
    %1395 = vmatpush1.xpose.msra.mxu0 0.0
    %1396 = vmatprep.subr.mxu0 0.0
    %1397 = vmatpush1.xpose.msra.mxu0 0.0
    %1398 = vmatprep.subr.mxu0 0.0
    %1399 = vmatpush1.xpose.msra.mxu0 0.0
    %1400 = vmatprep.subr.mxu0 0.0
    %1401 = vmatpush1.xpose.msra.mxu0 0.0
    %1402 = vmatprep.subr.mxu0 0.0
    %1403 = vmatpush1.xpose.msra.mxu0 0.0
    %1404 = vmatprep.subr.mxu0 0.0
    %1405 = vmatpush1.xpose.msra.mxu0 0.0
    %1406 = vmatprep.subr.mxu0 0.0
    %1407 = vmatpush1.xpose.msra.mxu0 0.0
    %1408 = vmatprep.subr.mxu0 0.0
    %1409 = vmatpush1.xpose.msra.mxu0 0.0
    %1410 = vmatprep.subr.mxu0 0.0
    %1411 = vmatpush1.xpose.msra.mxu0 %v1378
    %1412 = vmatprep.subr.mxu0 0.0
    %1413 = vmatpush2.xpose.msra.mxu0 0.0
    %1414 = vmatprep.subr.mxu0 0.0
    %1415 = vmatpush2.xpose.msra.mxu0 0.0
    %1416 = vmatprep.subr.mxu0 0.0
    %1417 = vmatpush2.xpose.msra.mxu0 0.0
    %1418 = vmatprep.subr.mxu0 0.0
    %1419 = vmatpush2.xpose.msra.mxu0 0.0
    %1420 = vmatprep.subr.mxu0 0.0
    %1421 = vmatpush2.xpose.msra.mxu0 0.0
    %1422 = vmatprep.subr.mxu0 0.0
    %1423 = vmatpush2.xpose.msra.mxu0 0.0
    %1424 = vmatprep.subr.mxu0 0.0
    %1425 = vmatpush2.xpose.msra.mxu0 0.0
    %1426 = vmatprep.subr.mxu0 0.0
    %1427 = vmatpush2.xpose.msra.mxu0 0.0
    %1428 = vmatprep.subr.mxu0 0.0
    %1429 = vmatpush2.xpose.msra.mxu0 0.0
    %1430 = vmatprep.subr.mxu0 0.0
    %1431 = vmatpush2.xpose.msra.mxu0 0.0
    %1432 = vmatprep.subr.mxu0 0.0
    %1433 = vmatpush2.xpose.msra.mxu0 0.0
    %1434 = vmatprep.subr.mxu0 0.0
    %1435 = vmatpush2.xpose.msra.mxu0 0.0
    %1436 = vmatprep.subr.mxu0 0.0
    %1437 = vmatpush2.xpose.msra.mxu0 0.0
    %1438 = vmatprep.subr.mxu0 0.0
    %1439 = vmatpush2.xpose.msra.mxu0 0.0
    %1440 = vmatprep.subr.mxu0 0.0
    %1441 = vmatpush2.xpose.msra.mxu0 0.0
    %1442 = vmatprep.subr.mxu0 0.0
    %1443 = vmatpush2.xpose.msra.mxu0 0.0
    %1444 = vmatprep.mubr.f32.mxu0 0.0
    %1445 = vmatmul.mubr.f32.gmra.mxu0 %v1376
    %v1446 = vpop.f32.mrf.mxu0
    %v1447 = vadd.f32 0.0, %v1446
    %v1448 = vpop.f32.mrf.mxu0
    %1449 = vdwg.mxu0
    %v1450 = vsel %vm367, %v1447, -inf
    %1451 = vmax.xlane.f32.xlu0 %v1450
    %v1452 = vpop.xlane.xlu0 %1451
    %v1453 = vsub.f32 %v1447, %v1452
    %v1454 = vmul.f32 %v1453, 1.442695
    %v1455 = vpow.pop %v1454
    %v1456 = vsel %vm367, %v1455, 0.0
    %1457 = vadd.xlane.f32.xlu0 %v1456
    %v1458 = vpop.xlane.xlu0 %1457
    %v1459 = vrcp.pop %v1458
    %v1460 = vmul.f32 %v1455, %v1459
    %1461 = vrot.lane.b32.xlu0 %v359, 48
    %v1462 = vpop.permute.xlu0 %1461
    %v1465 = vsel %vm367, %v1460, 0
    %1467 = vmatprep.subr.mxu0 0.0
    %1468 = vmatpush1.msra.mxu0 0.0
    %1469 = vmatprep.subr.mxu0 0.0
    %1470 = vmatpush1.msra.mxu0 0.0
    %1471 = vmatprep.subr.mxu0 0.0
    %1472 = vmatpush1.msra.mxu0 0.0
    %1473 = vmatprep.subr.mxu0 0.0
    %1474 = vmatpush1.msra.mxu0 0.0
    %1475 = vmatprep.subr.mxu0 0.0
    %1476 = vmatpush1.msra.mxu0 0.0
    %1477 = vmatprep.subr.mxu0 0.0
    %1478 = vmatpush1.msra.mxu0 0.0
    %1479 = vmatprep.subr.mxu0 0.0
    %1480 = vmatpush1.msra.mxu0 0.0
    %1481 = vmatprep.subr.mxu0 0.0
    %1482 = vmatpush1.msra.mxu0 0.0
    %1483 = vmatprep.subr.mxu0 0.0
    %1484 = vmatpush1.msra.mxu0 0.0
    %1485 = vmatprep.subr.mxu0 0.0
    %1486 = vmatpush1.msra.mxu0 0.0
    %1487 = vmatprep.subr.mxu0 0.0
    %1488 = vmatpush1.msra.mxu0 0.0
    %1489 = vmatprep.subr.mxu0 0.0
    %1490 = vmatpush1.msra.mxu0 0.0
    %1491 = vmatprep.subr.mxu0 0.0
    %1492 = vmatpush1.msra.mxu0 0.0
    %1493 = vmatprep.subr.mxu0 0.0
    %1494 = vmatpush1.msra.mxu0 0.0
    %1495 = vmatprep.subr.mxu0 0.0
    %1496 = vmatpush1.msra.mxu0 0.0
    %1497 = vmatprep.subr.mxu0 0.0
    %1498 = vmatpush1.msra.mxu0 %v1462
    %1499 = vmatprep.subr.mxu0 0.0
    %1500 = vmatpush2.msra.mxu0 0.0
    %1501 = vmatprep.subr.mxu0 0.0
    %1502 = vmatpush2.msra.mxu0 0.0
    %1503 = vmatprep.subr.mxu0 0.0
    %1504 = vmatpush2.msra.mxu0 0.0
    %1505 = vmatprep.subr.mxu0 0.0
    %1506 = vmatpush2.msra.mxu0 0.0
    %1507 = vmatprep.subr.mxu0 0.0
    %1508 = vmatpush2.msra.mxu0 0.0
    %1509 = vmatprep.subr.mxu0 0.0
    %1510 = vmatpush2.msra.mxu0 0.0
    %1511 = vmatprep.subr.mxu0 0.0
    %1512 = vmatpush2.msra.mxu0 0.0
    %1513 = vmatprep.subr.mxu0 0.0
    %1514 = vmatpush2.msra.mxu0 0.0
    %1515 = vmatprep.subr.mxu0 0.0
    %1516 = vmatpush2.msra.mxu0 0.0
    %1517 = vmatprep.subr.mxu0 0.0
    %1518 = vmatpush2.msra.mxu0 0.0
    %1519 = vmatprep.subr.mxu0 0.0
    %1520 = vmatpush2.msra.mxu0 0.0
    %1521 = vmatprep.subr.mxu0 0.0
    %1522 = vmatpush2.msra.mxu0 0.0
    %1523 = vmatprep.subr.mxu0 0.0
    %1524 = vmatpush2.msra.mxu0 0.0
    %1525 = vmatprep.subr.mxu0 0.0
    %1526 = vmatpush2.msra.mxu0 0.0
    %1527 = vmatprep.subr.mxu0 0.0
    %1528 = vmatpush2.msra.mxu0 0.0
    %1529 = vmatprep.subr.mxu0 0.0
    %1530 = vmatpush2.msra.mxu0 0.0
    %1531 = vmatprep.mubr.f32.mxu0 0.0
    %1532 = vmatmul.mubr.f32.gmra.mxu0 %v1465
    %v1533 = vpop.f32.mrf.mxu0
    %v1534 = vadd.f32 0.0, %v1533
    %v1535 = vpop.f32.mrf.mxu0
    %1536 = vdwg.mxu0
    %1537 = vrot.lane.b32.xlu0 %v363, 104
    %v1538 = vpop.permute.xlu0 %1537
    %1539 = vrot.lane.b32.xlu0 %v359, 72
    %v1540 = vpop.permute.xlu0 %1539
    %v1541 = vsel %vm367, %v1538, 0
    %v1543 = vsel %vm367, %v1540, 0
    %1545 = vmatprep.subr.mxu0 0.0
    %1546 = vmatpush1.xpose.msra.mxu0 0.0
    %1547 = vmatprep.subr.mxu0 0.0
    %1548 = vmatpush1.xpose.msra.mxu0 0.0
    %1549 = vmatprep.subr.mxu0 0.0
    %1550 = vmatpush1.xpose.msra.mxu0 0.0
    %1551 = vmatprep.subr.mxu0 0.0
    %1552 = vmatpush1.xpose.msra.mxu0 0.0
    %1553 = vmatprep.subr.mxu0 0.0
    %1554 = vmatpush1.xpose.msra.mxu0 0.0
    %1555 = vmatprep.subr.mxu0 0.0
    %1556 = vmatpush1.xpose.msra.mxu0 0.0
    %1557 = vmatprep.subr.mxu0 0.0
    %1558 = vmatpush1.xpose.msra.mxu0 0.0
    %1559 = vmatprep.subr.mxu0 0.0
    %1560 = vmatpush1.xpose.msra.mxu0 0.0
    %1561 = vmatprep.subr.mxu0 0.0
    %1562 = vmatpush1.xpose.msra.mxu0 0.0
    %1563 = vmatprep.subr.mxu0 0.0
    %1564 = vmatpush1.xpose.msra.mxu0 0.0
    %1565 = vmatprep.subr.mxu0 0.0
    %1566 = vmatpush1.xpose.msra.mxu0 0.0
    %1567 = vmatprep.subr.mxu0 0.0
    %1568 = vmatpush1.xpose.msra.mxu0 0.0
    %1569 = vmatprep.subr.mxu0 0.0
    %1570 = vmatpush1.xpose.msra.mxu0 0.0
    %1571 = vmatprep.subr.mxu0 0.0
    %1572 = vmatpush1.xpose.msra.mxu0 0.0
    %1573 = vmatprep.subr.mxu0 0.0
    %1574 = vmatpush1.xpose.msra.mxu0 0.0
    %1575 = vmatprep.subr.mxu0 0.0
    %1576 = vmatpush1.xpose.msra.mxu0 %v1543
    %1577 = vmatprep.subr.mxu0 0.0
    %1578 = vmatpush2.xpose.msra.mxu0 0.0
    %1579 = vmatprep.subr.mxu0 0.0
    %1580 = vmatpush2.xpose.msra.mxu0 0.0
    %1581 = vmatprep.subr.mxu0 0.0
    %1582 = vmatpush2.xpose.msra.mxu0 0.0
    %1583 = vmatprep.subr.mxu0 0.0
    %1584 = vmatpush2.xpose.msra.mxu0 0.0
    %1585 = vmatprep.subr.mxu0 0.0
    %1586 = vmatpush2.xpose.msra.mxu0 0.0
    %1587 = vmatprep.subr.mxu0 0.0
    %1588 = vmatpush2.xpose.msra.mxu0 0.0
    %1589 = vmatprep.subr.mxu0 0.0
    %1590 = vmatpush2.xpose.msra.mxu0 0.0
    %1591 = vmatprep.subr.mxu0 0.0
    %1592 = vmatpush2.xpose.msra.mxu0 0.0
    %1593 = vmatprep.subr.mxu0 0.0
    %1594 = vmatpush2.xpose.msra.mxu0 0.0
    %1595 = vmatprep.subr.mxu0 0.0
    %1596 = vmatpush2.xpose.msra.mxu0 0.0
    %1597 = vmatprep.subr.mxu0 0.0
    %1598 = vmatpush2.xpose.msra.mxu0 0.0
    %1599 = vmatprep.subr.mxu0 0.0
    %1600 = vmatpush2.xpose.msra.mxu0 0.0
    %1601 = vmatprep.subr.mxu0 0.0
    %1602 = vmatpush2.xpose.msra.mxu0 0.0
    %1603 = vmatprep.subr.mxu0 0.0
    %1604 = vmatpush2.xpose.msra.mxu0 0.0
    %1605 = vmatprep.subr.mxu0 0.0
    %1606 = vmatpush2.xpose.msra.mxu0 0.0
    %1607 = vmatprep.subr.mxu0 0.0
    %1608 = vmatpush2.xpose.msra.mxu0 0.0
    %1609 = vmatprep.mubr.f32.mxu0 0.0
    %1610 = vmatmul.mubr.f32.gmra.mxu0 %v1541
    %v1611 = vpop.f32.mrf.mxu0
    %v1612 = vadd.f32 0.0, %v1611
    %v1613 = vpop.f32.mrf.mxu0
    %1614 = vdwg.mxu0
    %v1615 = vsel %vm367, %v1612, -inf
    %1616 = vmax.xlane.f32.xlu0 %v1615
    %v1617 = vpop.xlane.xlu0 %1616
    %v1618 = vsub.f32 %v1612, %v1617
    %v1619 = vmul.f32 %v1618, 1.442695
    %v1620 = vpow.pop %v1619
    %v1621 = vsel %vm367, %v1620, 0.0
    %1622 = vadd.xlane.f32.xlu0 %v1621
    %v1623 = vpop.xlane.xlu0 %1622
    %v1624 = vrcp.pop %v1623
    %v1625 = vmul.f32 %v1620, %v1624
    %1626 = vrot.lane.b32.xlu0 %v359, 40
    %v1627 = vpop.permute.xlu0 %1626
    %v1630 = vsel %vm367, %v1625, 0
    %1632 = vmatprep.subr.mxu0 0.0
    %1633 = vmatpush1.msra.mxu0 0.0
    %1634 = vmatprep.subr.mxu0 0.0
    %1635 = vmatpush1.msra.mxu0 0.0
    %1636 = vmatprep.subr.mxu0 0.0
    %1637 = vmatpush1.msra.mxu0 0.0
    %1638 = vmatprep.subr.mxu0 0.0
    %1639 = vmatpush1.msra.mxu0 0.0
    %1640 = vmatprep.subr.mxu0 0.0
    %1641 = vmatpush1.msra.mxu0 0.0
    %1642 = vmatprep.subr.mxu0 0.0
    %1643 = vmatpush1.msra.mxu0 0.0
    %1644 = vmatprep.subr.mxu0 0.0
    %1645 = vmatpush1.msra.mxu0 0.0
    %1646 = vmatprep.subr.mxu0 0.0
    %1647 = vmatpush1.msra.mxu0 0.0
    %1648 = vmatprep.subr.mxu0 0.0
    %1649 = vmatpush1.msra.mxu0 0.0
    %1650 = vmatprep.subr.mxu0 0.0
    %1651 = vmatpush1.msra.mxu0 0.0
    %1652 = vmatprep.subr.mxu0 0.0
    %1653 = vmatpush1.msra.mxu0 0.0
    %1654 = vmatprep.subr.mxu0 0.0
    %1655 = vmatpush1.msra.mxu0 0.0
    %1656 = vmatprep.subr.mxu0 0.0
    %1657 = vmatpush1.msra.mxu0 0.0
    %1658 = vmatprep.subr.mxu0 0.0
    %1659 = vmatpush1.msra.mxu0 0.0
    %1660 = vmatprep.subr.mxu0 0.0
    %1661 = vmatpush1.msra.mxu0 0.0
    %1662 = vmatprep.subr.mxu0 0.0
    %1663 = vmatpush1.msra.mxu0 %v1627
    %1664 = vmatprep.subr.mxu0 0.0
    %1665 = vmatpush2.msra.mxu0 0.0
    %1666 = vmatprep.subr.mxu0 0.0
    %1667 = vmatpush2.msra.mxu0 0.0
    %1668 = vmatprep.subr.mxu0 0.0
    %1669 = vmatpush2.msra.mxu0 0.0
    %1670 = vmatprep.subr.mxu0 0.0
    %1671 = vmatpush2.msra.mxu0 0.0
    %1672 = vmatprep.subr.mxu0 0.0
    %1673 = vmatpush2.msra.mxu0 0.0
    %1674 = vmatprep.subr.mxu0 0.0
    %1675 = vmatpush2.msra.mxu0 0.0
    %1676 = vmatprep.subr.mxu0 0.0
    %1677 = vmatpush2.msra.mxu0 0.0
    %1678 = vmatprep.subr.mxu0 0.0
    %1679 = vmatpush2.msra.mxu0 0.0
    %1680 = vmatprep.subr.mxu0 0.0
    %1681 = vmatpush2.msra.mxu0 0.0
    %1682 = vmatprep.subr.mxu0 0.0
    %1683 = vmatpush2.msra.mxu0 0.0
    %1684 = vmatprep.subr.mxu0 0.0
    %1685 = vmatpush2.msra.mxu0 0.0
    %1686 = vmatprep.subr.mxu0 0.0
    %1687 = vmatpush2.msra.mxu0 0.0
    %1688 = vmatprep.subr.mxu0 0.0
    %1689 = vmatpush2.msra.mxu0 0.0
    %1690 = vmatprep.subr.mxu0 0.0
    %1691 = vmatpush2.msra.mxu0 0.0
    %1692 = vmatprep.subr.mxu0 0.0
    %1693 = vmatpush2.msra.mxu0 0.0
    %1694 = vmatprep.subr.mxu0 0.0
    %1695 = vmatpush2.msra.mxu0 0.0
    %1696 = vmatprep.mubr.f32.mxu0 0.0
    %1697 = vmatmul.mubr.f32.gmra.mxu0 %v1630
    %v1698 = vpop.f32.mrf.mxu0
    %v1699 = vadd.f32 0.0, %v1698
    %v1700 = vpop.f32.mrf.mxu0
    %1701 = vdwg.mxu0
    %1703 = vrot.lane.b32.xlu0 %v1369, 8
    %v1704 = vpop.permute.xlu0 %1703
    %1707 = vrot.lane.b32.xlu0 %v1534, 16
    %v1708 = vpop.permute.xlu0 %1707
    %1711 = vrot.lane.b32.xlu0 %v1699, 24
    %v1712 = vpop.permute.xlu0 %1711
    %v1714 = vsel %vm367, %v1204, %v1704
    %v1715 = vsel %vm1038, %v1714, %v1708
    %v1716 = vsel %vm1040, %v1715, %v1712
    %v1717 = vld [vmem:[%s4] sm:$0xff]
    %v1718 = vld [vmem:[%s4 + $0x8] sm:$0xff]
    %v1719 = vld [vmem:[%s4 + $0x10] sm:$0xff]
    %v1720 = vld [vmem:[%s4 + $0x18] sm:$0xff]
    %v1721 = vld [vmem:[%s5] sm:$0x1]
    %v1723 = vlaneseq
    %v1724 = vshrl.u32 %v1723, 7
    %v1725 = vsub.s32 0, %v1724
    %v1726 = vrot.slane %v1721, %v1725
    %v1729 = vsel %vm280, %v1041, 0
    %v1732 = vsel %vm280, %v1716, 0
    %1734 = vmatprep.subr.mxu0 0.0
    %1735 = vmatpush1.msra.mxu0 0.0
    %1736 = vmatprep.subr.mxu0 0.0
    %1737 = vmatpush1.msra.mxu0 0.0
    %1738 = vmatprep.subr.mxu0 0.0
    %1739 = vmatpush1.msra.mxu0 0.0
    %1740 = vmatprep.subr.mxu0 0.0
    %1741 = vmatpush1.msra.mxu0 0.0
    %1742 = vmatprep.subr.mxu0 0.0
    %1743 = vmatpush1.msra.mxu0 0.0
    %1744 = vmatprep.subr.mxu0 0.0
    %1745 = vmatpush1.msra.mxu0 0.0
    %1746 = vmatprep.subr.mxu0 0.0
    %1747 = vmatpush1.msra.mxu0 0.0
    %1748 = vmatprep.subr.mxu0 0.0
    %1749 = vmatpush1.msra.mxu0 0.0
    %1750 = vmatprep.subr.mxu0 0.0
    %1751 = vmatpush1.msra.mxu0 0.0
    %1752 = vmatprep.subr.mxu0 0.0
    %1753 = vmatpush1.msra.mxu0 0.0
    %1754 = vmatprep.subr.mxu0 0.0
    %1755 = vmatpush1.msra.mxu0 0.0
    %1756 = vmatprep.subr.mxu0 0.0
    %1757 = vmatpush1.msra.mxu0 0.0
    %1758 = vmatprep.subr.mxu0 0.0
    %1759 = vmatpush1.msra.mxu0 %v1720
    %1760 = vmatprep.subr.mxu0 0.0
    %1761 = vmatpush1.msra.mxu0 %v1719
    %1762 = vmatprep.subr.mxu0 0.0
    %1763 = vmatpush1.msra.mxu0 %v1718
    %1764 = vmatprep.subr.mxu0 0.0
    %1765 = vmatpush1.msra.mxu0 %v1717
    %1766 = vmatprep.subr.mxu0 0.0
    %1767 = vmatpush2.msra.mxu0 0.0
    %1768 = vmatprep.subr.mxu0 0.0
    %1769 = vmatpush2.msra.mxu0 0.0
    %1770 = vmatprep.subr.mxu0 0.0
    %1771 = vmatpush2.msra.mxu0 0.0
    %1772 = vmatprep.subr.mxu0 0.0
    %1773 = vmatpush2.msra.mxu0 0.0
    %1774 = vmatprep.subr.mxu0 0.0
    %1775 = vmatpush2.msra.mxu0 0.0
    %1776 = vmatprep.subr.mxu0 0.0
    %1777 = vmatpush2.msra.mxu0 0.0
    %1778 = vmatprep.subr.mxu0 0.0
    %1779 = vmatpush2.msra.mxu0 0.0
    %1780 = vmatprep.subr.mxu0 0.0
    %1781 = vmatpush2.msra.mxu0 0.0
    %1782 = vmatprep.subr.mxu0 0.0
    %1783 = vmatpush2.msra.mxu0 0.0
    %1784 = vmatprep.subr.mxu0 0.0
    %1785 = vmatpush2.msra.mxu0 0.0
    %1786 = vmatprep.subr.mxu0 0.0
    %1787 = vmatpush2.msra.mxu0 0.0
    %1788 = vmatprep.subr.mxu0 0.0
    %1789 = vmatpush2.msra.mxu0 0.0
    %1790 = vmatprep.subr.mxu0 0.0
    %1791 = vmatpush2.msra.mxu0 0.0
    %1792 = vmatprep.subr.mxu0 0.0
    %1793 = vmatpush2.msra.mxu0 0.0
    %1794 = vmatprep.subr.mxu0 0.0
    %1795 = vmatpush2.msra.mxu0 0.0
    %1796 = vmatprep.subr.mxu0 0.0
    %1797 = vmatpush2.msra.mxu0 0.0
    %1798 = vmatprep.mubr.f32.mxu0 0.0
    %1799 = vmatmul.mubr.f32.gmra.mxu0 %v1729
    %v1800 = vpop.f32.mrf.mxu0
    %v1801 = vadd.f32 %v1726, %v1800
    %v1802 = vpop.f32.mrf.mxu0
    %1803 = vmatprep.mubr.f32.mxu0 0.0
    %1804 = vmatmul.mubr.f32.gmra.mxu0 %v1732
    %v1805 = vpop.f32.mrf.mxu0
    %v1806 = vadd.f32 %v1726, %v1805
    %v1807 = vpop.f32.mrf.mxu0
    %1808 = vdwg.mxu0
    %v1809 = vadd.f32 %v261, %v1801
    %v1810 = vadd.f32 %v266, %v1806
    %v1811 = vld [vmem:[%s6] sm:$0x1]
    %v1812 = vld [vmem:[%s7] sm:$0x1]
    %v1813 = vsel %vm280, %v1809, 0.0
    %1814 = vadd.xlane.f32.xlu0 %v1813
    %v1815 = vpop.xlane.xlu0 %1814
    %v1816 = vsel %vm280, %v1810, 0.0
    %1817 = vadd.xlane.f32.xlu0 %v1816
    %v1818 = vpop.xlane.xlu0 %1817
    %v1819 = vrcp.pop 32.0
    %v1820 = vmul.f32 %v1815, %v1819
    %v1821 = vmul.f32 %v1818, %v1819
    %v1822 = vsub.f32 %v1809, %v1820
    %v1823 = vsub.f32 %v1810, %v1821
    %v1824 = vmul.f32 %v1822, %v1822
    %v1825 = vmul.f32 %v1823, %v1823
    %v1826 = vsel %vm280, %v1824, 0.0
    %1827 = vadd.xlane.f32.xlu0 %v1826
    %v1828 = vpop.xlane.xlu0 %1827
    %v1829 = vsel %vm280, %v1825, 0.0
    %1830 = vadd.xlane.f32.xlu0 %v1829
    %v1831 = vpop.xlane.xlu0 %1830
    %v1832 = vmul.f32 %v1828, %v1819
    %v1833 = vmul.f32 %v1831, %v1819
    %v1834 = vadd.f32 %v1832, 1e-05
    %v1835 = vadd.f32 %v1833, 1e-05
    %v1836 = vrsqrt.pop %v1834
    %v1837 = vrsqrt.pop %v1835
    %v1838 = vmul.f32 %v1822, %v1836
    %v1839 = vmul.f32 %v1823, %v1837
    %v1841 = vlaneseq
    %v1842 = vshrl.u32 %v1841, 7
    %v1843 = vsub.s32 0, %v1842
    %v1844 = vrot.slane %v1811, %v1843
    %v1846 = vmul.f32 %v1838, %v1844
    %v1847 = vmul.f32 %v1839, %v1844
    %v1849 = vlaneseq
    %v1850 = vshrl.u32 %v1849, 7
    %v1851 = vsub.s32 0, %v1850
    %v1852 = vrot.slane %v1812, %v1851
    %v1854 = vadd.f32 %v1846, %v1852
    %v1855 = vadd.f32 %v1847, %v1852
    %v1856 = vld [vmem:[%s8] sm:$0xff]
    %v1857 = vld [vmem:[%s8 + $0x8] sm:$0xff]
    %v1858 = vld [vmem:[%s8 + $0x10] sm:$0xff]
    %v1859 = vld [vmem:[%s8 + $0x18] sm:$0xff]
    %v1860 = vld [vmem:[%s8 + $0x20] sm:$0xff]
    %v1861 = vld [vmem:[%s8 + $0x28] sm:$0xff]
    %v1862 = vld [vmem:[%s8 + $0x30] sm:$0xff]
    %v1863 = vld [vmem:[%s8 + $0x38] sm:$0xff]
    %v1864 = vld [vmem:[%s8 + $0x40] sm:$0xff]
    %v1865 = vld [vmem:[%s8 + $0x48] sm:$0xff]
    %v1866 = vld [vmem:[%s8 + $0x50] sm:$0xff]
    %v1867 = vld [vmem:[%s8 + $0x58] sm:$0xff]
    %v1868 = vld [vmem:[%s8 + $0x60] sm:$0xff]
    %v1869 = vld [vmem:[%s8 + $0x68] sm:$0xff]
    %v1870 = vld [vmem:[%s8 + $0x70] sm:$0xff]
    %v1871 = vld [vmem:[%s8 + $0x78] sm:$0xff]
    %v1872 = vld [vmem:[%s8 + $0x80] sm:$0xff]
    %v1873 = vld [vmem:[%s8 + $0x88] sm:$0xff]
    %v1874 = vld [vmem:[%s8 + $0x90] sm:$0xff]
    %v1875 = vld [vmem:[%s8 + $0x98] sm:$0xff]
    %v1876 = vld [vmem:[%s8 + $0xa0] sm:$0xff]
    %v1877 = vld [vmem:[%s8 + $0xa8] sm:$0xff]
    %v1878 = vld [vmem:[%s8 + $0xb0] sm:$0xff]
    %v1879 = vld [vmem:[%s8 + $0xb8] sm:$0xff]
    %v1880 = vld [vmem:[%s8 + $0xc0] sm:$0xff]
    %v1881 = vld [vmem:[%s8 + $0xc8] sm:$0xff]
    %v1882 = vld [vmem:[%s8 + $0xd0] sm:$0xff]
    %v1883 = vld [vmem:[%s8 + $0xd8] sm:$0xff]
    %v1884 = vld [vmem:[%s8 + $0xe0] sm:$0xff]
    %v1885 = vld [vmem:[%s8 + $0xe8] sm:$0xff]
    %v1886 = vld [vmem:[%s8 + $0xf0] sm:$0xff]
    %v1887 = vld [vmem:[%s8 + $0xf8] sm:$0xff]
    %v1888 = vld [vmem:[%s8 + $0x100] sm:$0xff]
    %v1889 = vld [vmem:[%s8 + $0x108] sm:$0xff]
    %v1890 = vld [vmem:[%s8 + $0x110] sm:$0xff]
    %v1891 = vld [vmem:[%s8 + $0x118] sm:$0xff]
    %v1892 = vld [vmem:[%s8 + $0x120] sm:$0xff]
    %v1893 = vld [vmem:[%s8 + $0x128] sm:$0xff]
    %v1894 = vld [vmem:[%s8 + $0x130] sm:$0xff]
    %v1895 = vld [vmem:[%s8 + $0x138] sm:$0xff]
    %v1896 = vld [vmem:[%s8 + $0x140] sm:$0xff]
    %v1897 = vld [vmem:[%s8 + $0x148] sm:$0xff]
    %v1898 = vld [vmem:[%s8 + $0x150] sm:$0xff]
    %v1899 = vld [vmem:[%s8 + $0x158] sm:$0xff]
    %v1900 = vld [vmem:[%s8 + $0x160] sm:$0xff]
    %v1901 = vld [vmem:[%s8 + $0x168] sm:$0xff]
    %v1902 = vld [vmem:[%s8 + $0x170] sm:$0xff]
    %v1903 = vld [vmem:[%s8 + $0x178] sm:$0xff]
    %v1904 = vld [vmem:[%s8 + $0x180] sm:$0xff]
    %v1905 = vld [vmem:[%s8 + $0x188] sm:$0xff]
    %v1906 = vld [vmem:[%s8 + $0x190] sm:$0xff]
    %v1907 = vld [vmem:[%s8 + $0x198] sm:$0xff]
    %v1908 = vld [vmem:[%s8 + $0x1a0] sm:$0xff]
    %v1909 = vld [vmem:[%s8 + $0x1a8] sm:$0xff]
    %v1910 = vld [vmem:[%s8 + $0x1b0] sm:$0xff]
    %v1911 = vld [vmem:[%s8 + $0x1b8] sm:$0xff]
    %v1912 = vld [vmem:[%s8 + $0x1c0] sm:$0xff]
    %v1913 = vld [vmem:[%s8 + $0x1c8] sm:$0xff]
    %v1914 = vld [vmem:[%s8 + $0x1d0] sm:$0xff]
    %v1915 = vld [vmem:[%s8 + $0x1d8] sm:$0xff]
    %v1916 = vld [vmem:[%s8 + $0x1e0] sm:$0xff]
    %v1917 = vld [vmem:[%s8 + $0x1e8] sm:$0xff]
    %v1918 = vld [vmem:[%s8 + $0x1f0] sm:$0xff]
    %v1919 = vld [vmem:[%s8 + $0x1f8] sm:$0xff]
    %v1920 = vld [vmem:[%s9] sm:$0xff]
    %v1921 = vld [vmem:[%s9 + $0x8] sm:$0xff]
    %v1924 = vlaneseq
    %v1925 = vshrl.u32 %v1924, 7
    %v1926 = vsub.s32 0, %v1925
    %v1927 = vrot.slane %v1920, %v1926
    %v1928 = vlaneseq
    %v1929 = vshrl.u32 %v1928, 7
    %v1930 = vsub.s32 1, %v1929
    %v1931 = vrot.slane %v1920, %v1930
    %v1932 = vlaneseq
    %v1933 = vshrl.u32 %v1932, 7
    %v1934 = vsub.s32 2, %v1933
    %v1935 = vrot.slane %v1920, %v1934
    %v1936 = vlaneseq
    %v1937 = vshrl.u32 %v1936, 7
    %v1938 = vsub.s32 3, %v1937
    %v1939 = vrot.slane %v1920, %v1938
    %v1940 = vlaneseq
    %v1941 = vshrl.u32 %v1940, 7
    %v1942 = vsub.s32 4, %v1941
    %v1943 = vrot.slane %v1920, %v1942
    %v1944 = vlaneseq
    %v1945 = vshrl.u32 %v1944, 7
    %v1946 = vsub.s32 5, %v1945
    %v1947 = vrot.slane %v1920, %v1946
    %v1948 = vlaneseq
    %v1949 = vshrl.u32 %v1948, 7
    %v1950 = vsub.s32 6, %v1949
    %v1951 = vrot.slane %v1920, %v1950
    %v1952 = vlaneseq
    %v1953 = vshrl.u32 %v1952, 7
    %v1954 = vsub.s32 7, %v1953
    %v1955 = vrot.slane %v1920, %v1954
    %v1956 = vlaneseq
    %v1957 = vshrl.u32 %v1956, 7
    %v1958 = vsub.s32 0, %v1957
    %v1959 = vrot.slane %v1921, %v1958
    %v1960 = vlaneseq
    %v1961 = vshrl.u32 %v1960, 7
    %v1962 = vsub.s32 1, %v1961
    %v1963 = vrot.slane %v1921, %v1962
    %v1964 = vlaneseq
    %v1965 = vshrl.u32 %v1964, 7
    %v1966 = vsub.s32 2, %v1965
    %v1967 = vrot.slane %v1921, %v1966
    %v1968 = vlaneseq
    %v1969 = vshrl.u32 %v1968, 7
    %v1970 = vsub.s32 3, %v1969
    %v1971 = vrot.slane %v1921, %v1970
    %v1972 = vlaneseq
    %v1973 = vshrl.u32 %v1972, 7
    %v1974 = vsub.s32 4, %v1973
    %v1975 = vrot.slane %v1921, %v1974
    %v1976 = vlaneseq
    %v1977 = vshrl.u32 %v1976, 7
    %v1978 = vsub.s32 5, %v1977
    %v1979 = vrot.slane %v1921, %v1978
    %v1980 = vlaneseq
    %v1981 = vshrl.u32 %v1980, 7
    %v1982 = vsub.s32 6, %v1981
    %v1983 = vrot.slane %v1921, %v1982
    %v1984 = vlaneseq
    %v1985 = vshrl.u32 %v1984, 7
    %v1986 = vsub.s32 7, %v1985
    %v1987 = vrot.slane %v1921, %v1986
    %v2005 = vsel %vm280, %v1854, 0
    %v2008 = vsel %vm280, %v1855, 0
    %2010 = vmatprep.subr.mxu0 0.0
    %2011 = vmatpush1.msra.mxu0 0.0
    %2012 = vmatprep.subr.mxu0 0.0
    %2013 = vmatpush1.msra.mxu0 0.0
    %2014 = vmatprep.subr.mxu0 0.0
    %2015 = vmatpush1.msra.mxu0 0.0
    %2016 = vmatprep.subr.mxu0 0.0
    %2017 = vmatpush1.msra.mxu0 0.0
    %2018 = vmatprep.subr.mxu0 0.0
    %2019 = vmatpush1.msra.mxu0 0.0
    %2020 = vmatprep.subr.mxu0 0.0
    %2021 = vmatpush1.msra.mxu0 0.0
    %2022 = vmatprep.subr.mxu0 0.0
    %2023 = vmatpush1.msra.mxu0 0.0
    %2024 = vmatprep.subr.mxu0 0.0
    %2025 = vmatpush1.msra.mxu0 0.0
    %2026 = vmatprep.subr.mxu0 0.0
    %2027 = vmatpush1.msra.mxu0 0.0
    %2028 = vmatprep.subr.mxu0 0.0
    %2029 = vmatpush1.msra.mxu0 0.0
    %2030 = vmatprep.subr.mxu0 0.0
    %2031 = vmatpush1.msra.mxu0 0.0
    %2032 = vmatprep.subr.mxu0 0.0
    %2033 = vmatpush1.msra.mxu0 0.0
    %2034 = vmatprep.subr.mxu0 %v1905
    %2035 = vmatpush1.msra.mxu0 %v1904
    %2036 = vmatprep.subr.mxu0 %v1889
    %2037 = vmatpush1.msra.mxu0 %v1888
    %2038 = vmatprep.subr.mxu0 %v1873
    %2039 = vmatpush1.msra.mxu0 %v1872
    %2040 = vmatprep.subr.mxu0 %v1857
    %2041 = vmatpush1.msra.mxu0 %v1856
    %2042 = vmatprep.subr.mxu0 0.0
    %2043 = vmatpush2.msra.mxu0 0.0
    %2044 = vmatprep.subr.mxu0 0.0
    %2045 = vmatpush2.msra.mxu0 0.0
    %2046 = vmatprep.subr.mxu0 0.0
    %2047 = vmatpush2.msra.mxu0 0.0
    %2048 = vmatprep.subr.mxu0 0.0
    %2049 = vmatpush2.msra.mxu0 0.0
    %2050 = vmatprep.subr.mxu0 0.0
    %2051 = vmatpush2.msra.mxu0 0.0
    %2052 = vmatprep.subr.mxu0 0.0
    %2053 = vmatpush2.msra.mxu0 0.0
    %2054 = vmatprep.subr.mxu0 0.0
    %2055 = vmatpush2.msra.mxu0 0.0
    %2056 = vmatprep.subr.mxu0 0.0
    %2057 = vmatpush2.msra.mxu0 0.0
    %2058 = vmatprep.subr.mxu0 0.0
    %2059 = vmatpush2.msra.mxu0 0.0
    %2060 = vmatprep.subr.mxu0 0.0
    %2061 = vmatpush2.msra.mxu0 0.0
    %2062 = vmatprep.subr.mxu0 0.0
    %2063 = vmatpush2.msra.mxu0 0.0
    %2064 = vmatprep.subr.mxu0 0.0
    %2065 = vmatpush2.msra.mxu0 0.0
    %2066 = vmatprep.subr.mxu0 0.0
    %2067 = vmatpush2.msra.mxu0 0.0
    %2068 = vmatprep.subr.mxu0 0.0
    %2069 = vmatpush2.msra.mxu0 0.0
    %2070 = vmatprep.subr.mxu0 0.0
    %2071 = vmatpush2.msra.mxu0 0.0
    %2072 = vmatprep.subr.mxu0 0.0
    %2073 = vmatpush2.msra.mxu0 0.0
    %2074 = vmatprep.mubr.f32.mxu0 0.0
    %2075 = vmatmul.mubr.f32.gmra.mxu0 %v2005
    %v2076 = vpop.f32.mrf.mxu0
    %v2077 = vadd.f32 %v1927, %v2076
    %v2078 = vpop.f32.mrf.mxu0
    %v2079 = vadd.f32 %v1931, %v2078
    %2080 = vmatprep.mubr.f32.mxu0 0.0
    %2081 = vmatmul.mubr.f32.gmra.mxu0 %v2008
    %v2082 = vpop.f32.mrf.mxu0
    %v2083 = vadd.f32 %v1927, %v2082
    %v2084 = vpop.f32.mrf.mxu0
    %v2085 = vadd.f32 %v1931, %v2084
    %2086 = vdwg.mxu0
    %2087 = vmatprep.subr.mxu0 0.0
    %2088 = vmatpush1.msra.mxu0 0.0
    %2089 = vmatprep.subr.mxu0 0.0
    %2090 = vmatpush1.msra.mxu0 0.0
    %2091 = vmatprep.subr.mxu0 0.0
    %2092 = vmatpush1.msra.mxu0 0.0
    %2093 = vmatprep.subr.mxu0 0.0
    %2094 = vmatpush1.msra.mxu0 0.0
    %2095 = vmatprep.subr.mxu0 0.0
    %2096 = vmatpush1.msra.mxu0 0.0
    %2097 = vmatprep.subr.mxu0 0.0
    %2098 = vmatpush1.msra.mxu0 0.0
    %2099 = vmatprep.subr.mxu0 0.0
    %2100 = vmatpush1.msra.mxu0 0.0
    %2101 = vmatprep.subr.mxu0 0.0
    %2102 = vmatpush1.msra.mxu0 0.0
    %2103 = vmatprep.subr.mxu0 0.0
    %2104 = vmatpush1.msra.mxu0 0.0
    %2105 = vmatprep.subr.mxu0 0.0
    %2106 = vmatpush1.msra.mxu0 0.0
    %2107 = vmatprep.subr.mxu0 0.0
    %2108 = vmatpush1.msra.mxu0 0.0
    %2109 = vmatprep.subr.mxu0 0.0
    %2110 = vmatpush1.msra.mxu0 0.0
    %2111 = vmatprep.subr.mxu0 %v1907
    %2112 = vmatpush1.msra.mxu0 %v1906
    %2113 = vmatprep.subr.mxu0 %v1891
    %2114 = vmatpush1.msra.mxu0 %v1890
    %2115 = vmatprep.subr.mxu0 %v1875
    %2116 = vmatpush1.msra.mxu0 %v1874
    %2117 = vmatprep.subr.mxu0 %v1859
    %2118 = vmatpush1.msra.mxu0 %v1858
    %2119 = vmatprep.subr.mxu0 0.0
    %2120 = vmatpush2.msra.mxu0 0.0
    %2121 = vmatprep.subr.mxu0 0.0
    %2122 = vmatpush2.msra.mxu0 0.0
    %2123 = vmatprep.subr.mxu0 0.0
    %2124 = vmatpush2.msra.mxu0 0.0
    %2125 = vmatprep.subr.mxu0 0.0
    %2126 = vmatpush2.msra.mxu0 0.0
    %2127 = vmatprep.subr.mxu0 0.0
    %2128 = vmatpush2.msra.mxu0 0.0
    %2129 = vmatprep.subr.mxu0 0.0
    %2130 = vmatpush2.msra.mxu0 0.0
    %2131 = vmatprep.subr.mxu0 0.0
    %2132 = vmatpush2.msra.mxu0 0.0
    %2133 = vmatprep.subr.mxu0 0.0
    %2134 = vmatpush2.msra.mxu0 0.0
    %2135 = vmatprep.subr.mxu0 0.0
    %2136 = vmatpush2.msra.mxu0 0.0
    %2137 = vmatprep.subr.mxu0 0.0
    %2138 = vmatpush2.msra.mxu0 0.0
    %2139 = vmatprep.subr.mxu0 0.0
    %2140 = vmatpush2.msra.mxu0 0.0
    %2141 = vmatprep.subr.mxu0 0.0
    %2142 = vmatpush2.msra.mxu0 0.0
    %2143 = vmatprep.subr.mxu0 0.0
    %2144 = vmatpush2.msra.mxu0 0.0
    %2145 = vmatprep.subr.mxu0 0.0
    %2146 = vmatpush2.msra.mxu0 0.0
    %2147 = vmatprep.subr.mxu0 0.0
    %2148 = vmatpush2.msra.mxu0 0.0
    %2149 = vmatprep.subr.mxu0 0.0
    %2150 = vmatpush2.msra.mxu0 0.0
    %2151 = vmatprep.mubr.f32.mxu0 0.0
    %2152 = vmatmul.mubr.f32.gmra.mxu0 %v2005
    %v2153 = vpop.f32.mrf.mxu0
    %v2154 = vadd.f32 %v1935, %v2153
    %v2155 = vpop.f32.mrf.mxu0
    %v2156 = vadd.f32 %v1939, %v2155
    %2157 = vmatprep.mubr.f32.mxu0 0.0
    %2158 = vmatmul.mubr.f32.gmra.mxu0 %v2008
    %v2159 = vpop.f32.mrf.mxu0
    %v2160 = vadd.f32 %v1935, %v2159
    %v2161 = vpop.f32.mrf.mxu0
    %v2162 = vadd.f32 %v1939, %v2161
    %2163 = vdwg.mxu0
    %2164 = vmatprep.subr.mxu0 0.0
    %2165 = vmatpush1.msra.mxu0 0.0
    %2166 = vmatprep.subr.mxu0 0.0
    %2167 = vmatpush1.msra.mxu0 0.0
    %2168 = vmatprep.subr.mxu0 0.0
    %2169 = vmatpush1.msra.mxu0 0.0
    %2170 = vmatprep.subr.mxu0 0.0
    %2171 = vmatpush1.msra.mxu0 0.0
    %2172 = vmatprep.subr.mxu0 0.0
    %2173 = vmatpush1.msra.mxu0 0.0
    %2174 = vmatprep.subr.mxu0 0.0
    %2175 = vmatpush1.msra.mxu0 0.0
    %2176 = vmatprep.subr.mxu0 0.0
    %2177 = vmatpush1.msra.mxu0 0.0
    %2178 = vmatprep.subr.mxu0 0.0
    %2179 = vmatpush1.msra.mxu0 0.0
    %2180 = vmatprep.subr.mxu0 0.0
    %2181 = vmatpush1.msra.mxu0 0.0
    %2182 = vmatprep.subr.mxu0 0.0
    %2183 = vmatpush1.msra.mxu0 0.0
    %2184 = vmatprep.subr.mxu0 0.0
    %2185 = vmatpush1.msra.mxu0 0.0
    %2186 = vmatprep.subr.mxu0 0.0
    %2187 = vmatpush1.msra.mxu0 0.0
    %2188 = vmatprep.subr.mxu0 %v1909
    %2189 = vmatpush1.msra.mxu0 %v1908
    %2190 = vmatprep.subr.mxu0 %v1893
    %2191 = vmatpush1.msra.mxu0 %v1892
    %2192 = vmatprep.subr.mxu0 %v1877
    %2193 = vmatpush1.msra.mxu0 %v1876
    %2194 = vmatprep.subr.mxu0 %v1861
    %2195 = vmatpush1.msra.mxu0 %v1860
    %2196 = vmatprep.subr.mxu0 0.0
    %2197 = vmatpush2.msra.mxu0 0.0
    %2198 = vmatprep.subr.mxu0 0.0
    %2199 = vmatpush2.msra.mxu0 0.0
    %2200 = vmatprep.subr.mxu0 0.0
    %2201 = vmatpush2.msra.mxu0 0.0
    %2202 = vmatprep.subr.mxu0 0.0
    %2203 = vmatpush2.msra.mxu0 0.0
    %2204 = vmatprep.subr.mxu0 0.0
    %2205 = vmatpush2.msra.mxu0 0.0
    %2206 = vmatprep.subr.mxu0 0.0
    %2207 = vmatpush2.msra.mxu0 0.0
    %2208 = vmatprep.subr.mxu0 0.0
    %2209 = vmatpush2.msra.mxu0 0.0
    %2210 = vmatprep.subr.mxu0 0.0
    %2211 = vmatpush2.msra.mxu0 0.0
    %2212 = vmatprep.subr.mxu0 0.0
    %2213 = vmatpush2.msra.mxu0 0.0
    %2214 = vmatprep.subr.mxu0 0.0
    %2215 = vmatpush2.msra.mxu0 0.0
    %2216 = vmatprep.subr.mxu0 0.0
    %2217 = vmatpush2.msra.mxu0 0.0
    %2218 = vmatprep.subr.mxu0 0.0
    %2219 = vmatpush2.msra.mxu0 0.0
    %2220 = vmatprep.subr.mxu0 0.0
    %2221 = vmatpush2.msra.mxu0 0.0
    %2222 = vmatprep.subr.mxu0 0.0
    %2223 = vmatpush2.msra.mxu0 0.0
    %2224 = vmatprep.subr.mxu0 0.0
    %2225 = vmatpush2.msra.mxu0 0.0
    %2226 = vmatprep.subr.mxu0 0.0
    %2227 = vmatpush2.msra.mxu0 0.0
    %2228 = vmatprep.mubr.f32.mxu0 0.0
    %2229 = vmatmul.mubr.f32.gmra.mxu0 %v2005
    %v2230 = vpop.f32.mrf.mxu0
    %v2231 = vadd.f32 %v1943, %v2230
    %v2232 = vpop.f32.mrf.mxu0
    %v2233 = vadd.f32 %v1947, %v2232
    %2234 = vmatprep.mubr.f32.mxu0 0.0
    %2235 = vmatmul.mubr.f32.gmra.mxu0 %v2008
    %v2236 = vpop.f32.mrf.mxu0
    %v2237 = vadd.f32 %v1943, %v2236
    %v2238 = vpop.f32.mrf.mxu0
    %v2239 = vadd.f32 %v1947, %v2238
    %2240 = vdwg.mxu0
    %2241 = vmatprep.subr.mxu0 0.0
    %2242 = vmatpush1.msra.mxu0 0.0
    %2243 = vmatprep.subr.mxu0 0.0
    %2244 = vmatpush1.msra.mxu0 0.0
    %2245 = vmatprep.subr.mxu0 0.0
    %2246 = vmatpush1.msra.mxu0 0.0
    %2247 = vmatprep.subr.mxu0 0.0
    %2248 = vmatpush1.msra.mxu0 0.0
    %2249 = vmatprep.subr.mxu0 0.0
    %2250 = vmatpush1.msra.mxu0 0.0
    %2251 = vmatprep.subr.mxu0 0.0
    %2252 = vmatpush1.msra.mxu0 0.0
    %2253 = vmatprep.subr.mxu0 0.0
    %2254 = vmatpush1.msra.mxu0 0.0
    %2255 = vmatprep.subr.mxu0 0.0
    %2256 = vmatpush1.msra.mxu0 0.0
    %2257 = vmatprep.subr.mxu0 0.0
    %2258 = vmatpush1.msra.mxu0 0.0
    %2259 = vmatprep.subr.mxu0 0.0
    %2260 = vmatpush1.msra.mxu0 0.0
    %2261 = vmatprep.subr.mxu0 0.0
    %2262 = vmatpush1.msra.mxu0 0.0
    %2263 = vmatprep.subr.mxu0 0.0
    %2264 = vmatpush1.msra.mxu0 0.0
    %2265 = vmatprep.subr.mxu0 %v1911
    %2266 = vmatpush1.msra.mxu0 %v1910
    %2267 = vmatprep.subr.mxu0 %v1895
    %2268 = vmatpush1.msra.mxu0 %v1894
    %2269 = vmatprep.subr.mxu0 %v1879
    %2270 = vmatpush1.msra.mxu0 %v1878
    %2271 = vmatprep.subr.mxu0 %v1863
    %2272 = vmatpush1.msra.mxu0 %v1862
    %2273 = vmatprep.subr.mxu0 0.0
    %2274 = vmatpush2.msra.mxu0 0.0
    %2275 = vmatprep.subr.mxu0 0.0
    %2276 = vmatpush2.msra.mxu0 0.0
    %2277 = vmatprep.subr.mxu0 0.0
    %2278 = vmatpush2.msra.mxu0 0.0
    %2279 = vmatprep.subr.mxu0 0.0
    %2280 = vmatpush2.msra.mxu0 0.0
    %2281 = vmatprep.subr.mxu0 0.0
    %2282 = vmatpush2.msra.mxu0 0.0
    %2283 = vmatprep.subr.mxu0 0.0
    %2284 = vmatpush2.msra.mxu0 0.0
    %2285 = vmatprep.subr.mxu0 0.0
    %2286 = vmatpush2.msra.mxu0 0.0
    %2287 = vmatprep.subr.mxu0 0.0
    %2288 = vmatpush2.msra.mxu0 0.0
    %2289 = vmatprep.subr.mxu0 0.0
    %2290 = vmatpush2.msra.mxu0 0.0
    %2291 = vmatprep.subr.mxu0 0.0
    %2292 = vmatpush2.msra.mxu0 0.0
    %2293 = vmatprep.subr.mxu0 0.0
    %2294 = vmatpush2.msra.mxu0 0.0
    %2295 = vmatprep.subr.mxu0 0.0
    %2296 = vmatpush2.msra.mxu0 0.0
    %2297 = vmatprep.subr.mxu0 0.0
    %2298 = vmatpush2.msra.mxu0 0.0
    %2299 = vmatprep.subr.mxu0 0.0
    %2300 = vmatpush2.msra.mxu0 0.0
    %2301 = vmatprep.subr.mxu0 0.0
    %2302 = vmatpush2.msra.mxu0 0.0
    %2303 = vmatprep.subr.mxu0 0.0
    %2304 = vmatpush2.msra.mxu0 0.0
    %2305 = vmatprep.mubr.f32.mxu0 0.0
    %2306 = vmatmul.mubr.f32.gmra.mxu0 %v2005
    %v2307 = vpop.f32.mrf.mxu0
    %v2308 = vadd.f32 %v1951, %v2307
    %v2309 = vpop.f32.mrf.mxu0
    %v2310 = vadd.f32 %v1955, %v2309
    %2311 = vmatprep.mubr.f32.mxu0 0.0
    %2312 = vmatmul.mubr.f32.gmra.mxu0 %v2008
    %v2313 = vpop.f32.mrf.mxu0
    %v2314 = vadd.f32 %v1951, %v2313
    %v2315 = vpop.f32.mrf.mxu0
    %v2316 = vadd.f32 %v1955, %v2315
    %2317 = vdwg.mxu0
    %2318 = vmatprep.subr.mxu0 0.0
    %2319 = vmatpush1.msra.mxu0 0.0
    %2320 = vmatprep.subr.mxu0 0.0
    %2321 = vmatpush1.msra.mxu0 0.0
    %2322 = vmatprep.subr.mxu0 0.0
    %2323 = vmatpush1.msra.mxu0 0.0
    %2324 = vmatprep.subr.mxu0 0.0
    %2325 = vmatpush1.msra.mxu0 0.0
    %2326 = vmatprep.subr.mxu0 0.0
    %2327 = vmatpush1.msra.mxu0 0.0
    %2328 = vmatprep.subr.mxu0 0.0
    %2329 = vmatpush1.msra.mxu0 0.0
    %2330 = vmatprep.subr.mxu0 0.0
    %2331 = vmatpush1.msra.mxu0 0.0
    %2332 = vmatprep.subr.mxu0 0.0
    %2333 = vmatpush1.msra.mxu0 0.0
    %2334 = vmatprep.subr.mxu0 0.0
    %2335 = vmatpush1.msra.mxu0 0.0
    %2336 = vmatprep.subr.mxu0 0.0
    %2337 = vmatpush1.msra.mxu0 0.0
    %2338 = vmatprep.subr.mxu0 0.0
    %2339 = vmatpush1.msra.mxu0 0.0
    %2340 = vmatprep.subr.mxu0 0.0
    %2341 = vmatpush1.msra.mxu0 0.0
    %2342 = vmatprep.subr.mxu0 %v1913
    %2343 = vmatpush1.msra.mxu0 %v1912
    %2344 = vmatprep.subr.mxu0 %v1897
    %2345 = vmatpush1.msra.mxu0 %v1896
    %2346 = vmatprep.subr.mxu0 %v1881
    %2347 = vmatpush1.msra.mxu0 %v1880
    %2348 = vmatprep.subr.mxu0 %v1865
    %2349 = vmatpush1.msra.mxu0 %v1864
    %2350 = vmatprep.subr.mxu0 0.0
    %2351 = vmatpush2.msra.mxu0 0.0
    %2352 = vmatprep.subr.mxu0 0.0
    %2353 = vmatpush2.msra.mxu0 0.0
    %2354 = vmatprep.subr.mxu0 0.0
    %2355 = vmatpush2.msra.mxu0 0.0
    %2356 = vmatprep.subr.mxu0 0.0
    %2357 = vmatpush2.msra.mxu0 0.0
    %2358 = vmatprep.subr.mxu0 0.0
    %2359 = vmatpush2.msra.mxu0 0.0
    %2360 = vmatprep.subr.mxu0 0.0
    %2361 = vmatpush2.msra.mxu0 0.0
    %2362 = vmatprep.subr.mxu0 0.0
    %2363 = vmatpush2.msra.mxu0 0.0
    %2364 = vmatprep.subr.mxu0 0.0
    %2365 = vmatpush2.msra.mxu0 0.0
    %2366 = vmatprep.subr.mxu0 0.0
    %2367 = vmatpush2.msra.mxu0 0.0
    %2368 = vmatprep.subr.mxu0 0.0
    %2369 = vmatpush2.msra.mxu0 0.0
    %2370 = vmatprep.subr.mxu0 0.0
    %2371 = vmatpush2.msra.mxu0 0.0
    %2372 = vmatprep.subr.mxu0 0.0
    %2373 = vmatpush2.msra.mxu0 0.0
    %2374 = vmatprep.subr.mxu0 0.0
    %2375 = vmatpush2.msra.mxu0 0.0
    %2376 = vmatprep.subr.mxu0 0.0
    %2377 = vmatpush2.msra.mxu0 0.0
    %2378 = vmatprep.subr.mxu0 0.0
    %2379 = vmatpush2.msra.mxu0 0.0
    %2380 = vmatprep.subr.mxu0 0.0
    %2381 = vmatpush2.msra.mxu0 0.0
    %2382 = vmatprep.mubr.f32.mxu0 0.0
    %2383 = vmatmul.mubr.f32.gmra.mxu0 %v2005
    %v2384 = vpop.f32.mrf.mxu0
    %v2385 = vadd.f32 %v1959, %v2384
    %v2386 = vpop.f32.mrf.mxu0
    %v2387 = vadd.f32 %v1963, %v2386
    %2388 = vmatprep.mubr.f32.mxu0 0.0
    %2389 = vmatmul.mubr.f32.gmra.mxu0 %v2008
    %v2390 = vpop.f32.mrf.mxu0
    %v2391 = vadd.f32 %v1959, %v2390
    %v2392 = vpop.f32.mrf.mxu0
    %v2393 = vadd.f32 %v1963, %v2392
    %2394 = vdwg.mxu0
    %2395 = vmatprep.subr.mxu0 0.0
    %2396 = vmatpush1.msra.mxu0 0.0
    %2397 = vmatprep.subr.mxu0 0.0
    %2398 = vmatpush1.msra.mxu0 0.0
    %2399 = vmatprep.subr.mxu0 0.0
    %2400 = vmatpush1.msra.mxu0 0.0
    %2401 = vmatprep.subr.mxu0 0.0
    %2402 = vmatpush1.msra.mxu0 0.0
    %2403 = vmatprep.subr.mxu0 0.0
    %2404 = vmatpush1.msra.mxu0 0.0
    %2405 = vmatprep.subr.mxu0 0.0
    %2406 = vmatpush1.msra.mxu0 0.0
    %2407 = vmatprep.subr.mxu0 0.0
    %2408 = vmatpush1.msra.mxu0 0.0
    %2409 = vmatprep.subr.mxu0 0.0
    %2410 = vmatpush1.msra.mxu0 0.0
    %2411 = vmatprep.subr.mxu0 0.0
    %2412 = vmatpush1.msra.mxu0 0.0
    %2413 = vmatprep.subr.mxu0 0.0
    %2414 = vmatpush1.msra.mxu0 0.0
    %2415 = vmatprep.subr.mxu0 0.0
    %2416 = vmatpush1.msra.mxu0 0.0
    %2417 = vmatprep.subr.mxu0 0.0
    %2418 = vmatpush1.msra.mxu0 0.0
    %2419 = vmatprep.subr.mxu0 %v1915
    %2420 = vmatpush1.msra.mxu0 %v1914
    %2421 = vmatprep.subr.mxu0 %v1899
    %2422 = vmatpush1.msra.mxu0 %v1898
    %2423 = vmatprep.subr.mxu0 %v1883
    %2424 = vmatpush1.msra.mxu0 %v1882
    %2425 = vmatprep.subr.mxu0 %v1867
    %2426 = vmatpush1.msra.mxu0 %v1866
    %2427 = vmatprep.subr.mxu0 0.0
    %2428 = vmatpush2.msra.mxu0 0.0
    %2429 = vmatprep.subr.mxu0 0.0
    %2430 = vmatpush2.msra.mxu0 0.0
    %2431 = vmatprep.subr.mxu0 0.0
    %2432 = vmatpush2.msra.mxu0 0.0
    %2433 = vmatprep.subr.mxu0 0.0
    %2434 = vmatpush2.msra.mxu0 0.0
    %2435 = vmatprep.subr.mxu0 0.0
    %2436 = vmatpush2.msra.mxu0 0.0
    %2437 = vmatprep.subr.mxu0 0.0
    %2438 = vmatpush2.msra.mxu0 0.0
    %2439 = vmatprep.subr.mxu0 0.0
    %2440 = vmatpush2.msra.mxu0 0.0
    %2441 = vmatprep.subr.mxu0 0.0
    %2442 = vmatpush2.msra.mxu0 0.0
    %2443 = vmatprep.subr.mxu0 0.0
    %2444 = vmatpush2.msra.mxu0 0.0
    %2445 = vmatprep.subr.mxu0 0.0
    %2446 = vmatpush2.msra.mxu0 0.0
    %2447 = vmatprep.subr.mxu0 0.0
    %2448 = vmatpush2.msra.mxu0 0.0
    %2449 = vmatprep.subr.mxu0 0.0
    %2450 = vmatpush2.msra.mxu0 0.0
    %2451 = vmatprep.subr.mxu0 0.0
    %2452 = vmatpush2.msra.mxu0 0.0
    %2453 = vmatprep.subr.mxu0 0.0
    %2454 = vmatpush2.msra.mxu0 0.0
    %2455 = vmatprep.subr.mxu0 0.0
    %2456 = vmatpush2.msra.mxu0 0.0
    %2457 = vmatprep.subr.mxu0 0.0
    %2458 = vmatpush2.msra.mxu0 0.0
    %2459 = vmatprep.mubr.f32.mxu0 0.0
    %2460 = vmatmul.mubr.f32.gmra.mxu0 %v2005
    %v2461 = vpop.f32.mrf.mxu0
    %v2462 = vadd.f32 %v1967, %v2461
    %v2463 = vpop.f32.mrf.mxu0
    %v2464 = vadd.f32 %v1971, %v2463
    %2465 = vmatprep.mubr.f32.mxu0 0.0
    %2466 = vmatmul.mubr.f32.gmra.mxu0 %v2008
    %v2467 = vpop.f32.mrf.mxu0
    %v2468 = vadd.f32 %v1967, %v2467
    %v2469 = vpop.f32.mrf.mxu0
    %v2470 = vadd.f32 %v1971, %v2469
    %2471 = vdwg.mxu0
    %2472 = vmatprep.subr.mxu0 0.0
    %2473 = vmatpush1.msra.mxu0 0.0
    %2474 = vmatprep.subr.mxu0 0.0
    %2475 = vmatpush1.msra.mxu0 0.0
    %2476 = vmatprep.subr.mxu0 0.0
    %2477 = vmatpush1.msra.mxu0 0.0
    %2478 = vmatprep.subr.mxu0 0.0
    %2479 = vmatpush1.msra.mxu0 0.0
    %2480 = vmatprep.subr.mxu0 0.0
    %2481 = vmatpush1.msra.mxu0 0.0
    %2482 = vmatprep.subr.mxu0 0.0
    %2483 = vmatpush1.msra.mxu0 0.0
    %2484 = vmatprep.subr.mxu0 0.0
    %2485 = vmatpush1.msra.mxu0 0.0
    %2486 = vmatprep.subr.mxu0 0.0
    %2487 = vmatpush1.msra.mxu0 0.0
    %2488 = vmatprep.subr.mxu0 0.0
    %2489 = vmatpush1.msra.mxu0 0.0
    %2490 = vmatprep.subr.mxu0 0.0
    %2491 = vmatpush1.msra.mxu0 0.0
    %2492 = vmatprep.subr.mxu0 0.0
    %2493 = vmatpush1.msra.mxu0 0.0
    %2494 = vmatprep.subr.mxu0 0.0
    %2495 = vmatpush1.msra.mxu0 0.0
    %2496 = vmatprep.subr.mxu0 %v1917
    %2497 = vmatpush1.msra.mxu0 %v1916
    %2498 = vmatprep.subr.mxu0 %v1901
    %2499 = vmatpush1.msra.mxu0 %v1900
    %2500 = vmatprep.subr.mxu0 %v1885
    %2501 = vmatpush1.msra.mxu0 %v1884
    %2502 = vmatprep.subr.mxu0 %v1869
    %2503 = vmatpush1.msra.mxu0 %v1868
    %2504 = vmatprep.subr.mxu0 0.0
    %2505 = vmatpush2.msra.mxu0 0.0
    %2506 = vmatprep.subr.mxu0 0.0
    %2507 = vmatpush2.msra.mxu0 0.0
    %2508 = vmatprep.subr.mxu0 0.0
    %2509 = vmatpush2.msra.mxu0 0.0
    %2510 = vmatprep.subr.mxu0 0.0
    %2511 = vmatpush2.msra.mxu0 0.0
    %2512 = vmatprep.subr.mxu0 0.0
    %2513 = vmatpush2.msra.mxu0 0.0
    %2514 = vmatprep.subr.mxu0 0.0
    %2515 = vmatpush2.msra.mxu0 0.0
    %2516 = vmatprep.subr.mxu0 0.0
    %2517 = vmatpush2.msra.mxu0 0.0
    %2518 = vmatprep.subr.mxu0 0.0
    %2519 = vmatpush2.msra.mxu0 0.0
    %2520 = vmatprep.subr.mxu0 0.0
    %2521 = vmatpush2.msra.mxu0 0.0
    %2522 = vmatprep.subr.mxu0 0.0
    %2523 = vmatpush2.msra.mxu0 0.0
    %2524 = vmatprep.subr.mxu0 0.0
    %2525 = vmatpush2.msra.mxu0 0.0
    %2526 = vmatprep.subr.mxu0 0.0
    %2527 = vmatpush2.msra.mxu0 0.0
    %2528 = vmatprep.subr.mxu0 0.0
    %2529 = vmatpush2.msra.mxu0 0.0
    %2530 = vmatprep.subr.mxu0 0.0
    %2531 = vmatpush2.msra.mxu0 0.0
    %2532 = vmatprep.subr.mxu0 0.0
    %2533 = vmatpush2.msra.mxu0 0.0
    %2534 = vmatprep.subr.mxu0 0.0
    %2535 = vmatpush2.msra.mxu0 0.0
    %2536 = vmatprep.mubr.f32.mxu0 0.0
    %2537 = vmatmul.mubr.f32.gmra.mxu0 %v2005
    %v2538 = vpop.f32.mrf.mxu0
    %v2539 = vadd.f32 %v1975, %v2538
    %v2540 = vpop.f32.mrf.mxu0
    %v2541 = vadd.f32 %v1979, %v2540
    %2542 = vmatprep.mubr.f32.mxu0 0.0
    %2543 = vmatmul.mubr.f32.gmra.mxu0 %v2008
    %v2544 = vpop.f32.mrf.mxu0
    %v2545 = vadd.f32 %v1975, %v2544
    %v2546 = vpop.f32.mrf.mxu0
    %v2547 = vadd.f32 %v1979, %v2546
    %2548 = vdwg.mxu0
    %2549 = vmatprep.subr.mxu0 0.0
    %2550 = vmatpush1.msra.mxu0 0.0
    %2551 = vmatprep.subr.mxu0 0.0
    %2552 = vmatpush1.msra.mxu0 0.0
    %2553 = vmatprep.subr.mxu0 0.0
    %2554 = vmatpush1.msra.mxu0 0.0
    %2555 = vmatprep.subr.mxu0 0.0
    %2556 = vmatpush1.msra.mxu0 0.0
    %2557 = vmatprep.subr.mxu0 0.0
    %2558 = vmatpush1.msra.mxu0 0.0
    %2559 = vmatprep.subr.mxu0 0.0
    %2560 = vmatpush1.msra.mxu0 0.0
    %2561 = vmatprep.subr.mxu0 0.0
    %2562 = vmatpush1.msra.mxu0 0.0
    %2563 = vmatprep.subr.mxu0 0.0
    %2564 = vmatpush1.msra.mxu0 0.0
    %2565 = vmatprep.subr.mxu0 0.0
    %2566 = vmatpush1.msra.mxu0 0.0
    %2567 = vmatprep.subr.mxu0 0.0
    %2568 = vmatpush1.msra.mxu0 0.0
    %2569 = vmatprep.subr.mxu0 0.0
    %2570 = vmatpush1.msra.mxu0 0.0
    %2571 = vmatprep.subr.mxu0 0.0
    %2572 = vmatpush1.msra.mxu0 0.0
    %2573 = vmatprep.subr.mxu0 %v1919
    %2574 = vmatpush1.msra.mxu0 %v1918
    %2575 = vmatprep.subr.mxu0 %v1903
    %2576 = vmatpush1.msra.mxu0 %v1902
    %2577 = vmatprep.subr.mxu0 %v1887
    %2578 = vmatpush1.msra.mxu0 %v1886
    %2579 = vmatprep.subr.mxu0 %v1871
    %2580 = vmatpush1.msra.mxu0 %v1870
    %2581 = vmatprep.subr.mxu0 0.0
    %2582 = vmatpush2.msra.mxu0 0.0
    %2583 = vmatprep.subr.mxu0 0.0
    %2584 = vmatpush2.msra.mxu0 0.0
    %2585 = vmatprep.subr.mxu0 0.0
    %2586 = vmatpush2.msra.mxu0 0.0
    %2587 = vmatprep.subr.mxu0 0.0
    %2588 = vmatpush2.msra.mxu0 0.0
    %2589 = vmatprep.subr.mxu0 0.0
    %2590 = vmatpush2.msra.mxu0 0.0
    %2591 = vmatprep.subr.mxu0 0.0
    %2592 = vmatpush2.msra.mxu0 0.0
    %2593 = vmatprep.subr.mxu0 0.0
    %2594 = vmatpush2.msra.mxu0 0.0
    %2595 = vmatprep.subr.mxu0 0.0
    %2596 = vmatpush2.msra.mxu0 0.0
    %2597 = vmatprep.subr.mxu0 0.0
    %2598 = vmatpush2.msra.mxu0 0.0
    %2599 = vmatprep.subr.mxu0 0.0
    %2600 = vmatpush2.msra.mxu0 0.0
    %2601 = vmatprep.subr.mxu0 0.0
    %2602 = vmatpush2.msra.mxu0 0.0
    %2603 = vmatprep.subr.mxu0 0.0
    %2604 = vmatpush2.msra.mxu0 0.0
    %2605 = vmatprep.subr.mxu0 0.0
    %2606 = vmatpush2.msra.mxu0 0.0
    %2607 = vmatprep.subr.mxu0 0.0
    %2608 = vmatpush2.msra.mxu0 0.0
    %2609 = vmatprep.subr.mxu0 0.0
    %2610 = vmatpush2.msra.mxu0 0.0
    %2611 = vmatprep.subr.mxu0 0.0
    %2612 = vmatpush2.msra.mxu0 0.0
    %2613 = vmatprep.mubr.f32.mxu0 0.0
    %2614 = vmatmul.mubr.f32.gmra.mxu0 %v2005
    %v2615 = vpop.f32.mrf.mxu0
    %v2616 = vadd.f32 %v1983, %v2615
    %v2617 = vpop.f32.mrf.mxu0
    %v2618 = vadd.f32 %v1987, %v2617
    %2619 = vmatprep.mubr.f32.mxu0 0.0
    %2620 = vmatmul.mubr.f32.gmra.mxu0 %v2008
    %v2621 = vpop.f32.mrf.mxu0
    %v2622 = vadd.f32 %v1983, %v2621
    %v2623 = vpop.f32.mrf.mxu0
    %v2624 = vadd.f32 %v1987, %v2623
    %2625 = vdwg.mxu0
    %v2626 = vmax.f32 %v2077, 0.0
    %v2627 = vmax.f32 %v2079, 0.0
    %v2628 = vmax.f32 %v2154, 0.0
    %v2629 = vmax.f32 %v2156, 0.0
    %v2630 = vmax.f32 %v2231, 0.0
    %v2631 = vmax.f32 %v2233, 0.0
    %v2632 = vmax.f32 %v2308, 0.0
    %v2633 = vmax.f32 %v2310, 0.0
    %v2634 = vmax.f32 %v2385, 0.0
    %v2635 = vmax.f32 %v2387, 0.0
    %v2636 = vmax.f32 %v2462, 0.0
    %v2637 = vmax.f32 %v2464, 0.0
    %v2638 = vmax.f32 %v2539, 0.0
    %v2639 = vmax.f32 %v2541, 0.0
    %v2640 = vmax.f32 %v2616, 0.0
    %v2641 = vmax.f32 %v2618, 0.0
    %v2642 = vmax.f32 %v2083, 0.0
    %v2643 = vmax.f32 %v2085, 0.0
    %v2644 = vmax.f32 %v2160, 0.0
    %v2645 = vmax.f32 %v2162, 0.0
    %v2646 = vmax.f32 %v2237, 0.0
    %v2647 = vmax.f32 %v2239, 0.0
    %v2648 = vmax.f32 %v2314, 0.0
    %v2649 = vmax.f32 %v2316, 0.0
    %v2650 = vmax.f32 %v2391, 0.0
    %v2651 = vmax.f32 %v2393, 0.0
    %v2652 = vmax.f32 %v2468, 0.0
    %v2653 = vmax.f32 %v2470, 0.0
    %v2654 = vmax.f32 %v2545, 0.0
    %v2655 = vmax.f32 %v2547, 0.0
    %v2656 = vmax.f32 %v2622, 0.0
    %v2657 = vmax.f32 %v2624, 0.0
    %v2658 = vld [vmem:[%s10] sm:$0xff]
    %v2659 = vld [vmem:[%s10 + $0x8] sm:$0xff]
    %v2660 = vld [vmem:[%s10 + $0x10] sm:$0xff]
    %v2661 = vld [vmem:[%s10 + $0x18] sm:$0xff]
    %v2662 = vld [vmem:[%s10 + $0x20] sm:$0xff]
    %v2663 = vld [vmem:[%s10 + $0x28] sm:$0xff]
    %v2664 = vld [vmem:[%s10 + $0x30] sm:$0xff]
    %v2665 = vld [vmem:[%s10 + $0x38] sm:$0xff]
    %v2666 = vld [vmem:[%s10 + $0x40] sm:$0xff]
    %v2667 = vld [vmem:[%s10 + $0x48] sm:$0xff]
    %v2668 = vld [vmem:[%s10 + $0x50] sm:$0xff]
    %v2669 = vld [vmem:[%s10 + $0x58] sm:$0xff]
    %v2670 = vld [vmem:[%s10 + $0x60] sm:$0xff]
    %v2671 = vld [vmem:[%s10 + $0x68] sm:$0xff]
    %v2672 = vld [vmem:[%s10 + $0x70] sm:$0xff]
    %v2673 = vld [vmem:[%s10 + $0x78] sm:$0xff]
    %v2674 = vld [vmem:[%s10 + $0x80] sm:$0xff]
    %v2675 = vld [vmem:[%s10 + $0x88] sm:$0xff]
    %v2676 = vld [vmem:[%s10 + $0x90] sm:$0xff]
    %v2677 = vld [vmem:[%s10 + $0x98] sm:$0xff]
    %v2678 = vld [vmem:[%s10 + $0xa0] sm:$0xff]
    %v2679 = vld [vmem:[%s10 + $0xa8] sm:$0xff]
    %v2680 = vld [vmem:[%s10 + $0xb0] sm:$0xff]
    %v2681 = vld [vmem:[%s10 + $0xb8] sm:$0xff]
    %v2682 = vld [vmem:[%s10 + $0xc0] sm:$0xff]
    %v2683 = vld [vmem:[%s10 + $0xc8] sm:$0xff]
    %v2684 = vld [vmem:[%s10 + $0xd0] sm:$0xff]
    %v2685 = vld [vmem:[%s10 + $0xd8] sm:$0xff]
    %v2686 = vld [vmem:[%s10 + $0xe0] sm:$0xff]
    %v2687 = vld [vmem:[%s10 + $0xe8] sm:$0xff]
    %v2688 = vld [vmem:[%s10 + $0xf0] sm:$0xff]
    %v2689 = vld [vmem:[%s10 + $0xf8] sm:$0xff]
    %v2690 = vld [vmem:[%s10 + $0x100] sm:$0xff]
    %v2691 = vld [vmem:[%s10 + $0x108] sm:$0xff]
    %v2692 = vld [vmem:[%s10 + $0x110] sm:$0xff]
    %v2693 = vld [vmem:[%s10 + $0x118] sm:$0xff]
    %v2694 = vld [vmem:[%s10 + $0x120] sm:$0xff]
    %v2695 = vld [vmem:[%s10 + $0x128] sm:$0xff]
    %v2696 = vld [vmem:[%s10 + $0x130] sm:$0xff]
    %v2697 = vld [vmem:[%s10 + $0x138] sm:$0xff]
    %v2698 = vld [vmem:[%s10 + $0x140] sm:$0xff]
    %v2699 = vld [vmem:[%s10 + $0x148] sm:$0xff]
    %v2700 = vld [vmem:[%s10 + $0x150] sm:$0xff]
    %v2701 = vld [vmem:[%s10 + $0x158] sm:$0xff]
    %v2702 = vld [vmem:[%s10 + $0x160] sm:$0xff]
    %v2703 = vld [vmem:[%s10 + $0x168] sm:$0xff]
    %v2704 = vld [vmem:[%s10 + $0x170] sm:$0xff]
    %v2705 = vld [vmem:[%s10 + $0x178] sm:$0xff]
    %v2706 = vld [vmem:[%s10 + $0x180] sm:$0xff]
    %v2707 = vld [vmem:[%s10 + $0x188] sm:$0xff]
    %v2708 = vld [vmem:[%s10 + $0x190] sm:$0xff]
    %v2709 = vld [vmem:[%s10 + $0x198] sm:$0xff]
    %v2710 = vld [vmem:[%s10 + $0x1a0] sm:$0xff]
    %v2711 = vld [vmem:[%s10 + $0x1a8] sm:$0xff]
    %v2712 = vld [vmem:[%s10 + $0x1b0] sm:$0xff]
    %v2713 = vld [vmem:[%s10 + $0x1b8] sm:$0xff]
    %v2714 = vld [vmem:[%s10 + $0x1c0] sm:$0xff]
    %v2715 = vld [vmem:[%s10 + $0x1c8] sm:$0xff]
    %v2716 = vld [vmem:[%s10 + $0x1d0] sm:$0xff]
    %v2717 = vld [vmem:[%s10 + $0x1d8] sm:$0xff]
    %v2718 = vld [vmem:[%s10 + $0x1e0] sm:$0xff]
    %v2719 = vld [vmem:[%s10 + $0x1e8] sm:$0xff]
    %v2720 = vld [vmem:[%s10 + $0x1f0] sm:$0xff]
    %v2721 = vld [vmem:[%s10 + $0x1f8] sm:$0xff]
    %v2722 = vld [vmem:[%s10 + $0x200] sm:$0xff]
    %v2723 = vld [vmem:[%s10 + $0x208] sm:$0xff]
    %v2724 = vld [vmem:[%s10 + $0x210] sm:$0xff]
    %v2725 = vld [vmem:[%s10 + $0x218] sm:$0xff]
    %v2726 = vld [vmem:[%s10 + $0x220] sm:$0xff]
    %v2727 = vld [vmem:[%s10 + $0x228] sm:$0xff]
    %v2728 = vld [vmem:[%s10 + $0x230] sm:$0xff]
    %v2729 = vld [vmem:[%s10 + $0x238] sm:$0xff]
    %v2730 = vld [vmem:[%s10 + $0x240] sm:$0xff]
    %v2731 = vld [vmem:[%s10 + $0x248] sm:$0xff]
    %v2732 = vld [vmem:[%s10 + $0x250] sm:$0xff]
    %v2733 = vld [vmem:[%s10 + $0x258] sm:$0xff]
    %v2734 = vld [vmem:[%s10 + $0x260] sm:$0xff]
    %v2735 = vld [vmem:[%s10 + $0x268] sm:$0xff]
    %v2736 = vld [vmem:[%s10 + $0x270] sm:$0xff]
    %v2737 = vld [vmem:[%s10 + $0x278] sm:$0xff]
    %v2738 = vld [vmem:[%s10 + $0x280] sm:$0xff]
    %v2739 = vld [vmem:[%s10 + $0x288] sm:$0xff]
    %v2740 = vld [vmem:[%s10 + $0x290] sm:$0xff]
    %v2741 = vld [vmem:[%s10 + $0x298] sm:$0xff]
    %v2742 = vld [vmem:[%s10 + $0x2a0] sm:$0xff]
    %v2743 = vld [vmem:[%s10 + $0x2a8] sm:$0xff]
    %v2744 = vld [vmem:[%s10 + $0x2b0] sm:$0xff]
    %v2745 = vld [vmem:[%s10 + $0x2b8] sm:$0xff]
    %v2746 = vld [vmem:[%s10 + $0x2c0] sm:$0xff]
    %v2747 = vld [vmem:[%s10 + $0x2c8] sm:$0xff]
    %v2748 = vld [vmem:[%s10 + $0x2d0] sm:$0xff]
    %v2749 = vld [vmem:[%s10 + $0x2d8] sm:$0xff]
    %v2750 = vld [vmem:[%s10 + $0x2e0] sm:$0xff]
    %v2751 = vld [vmem:[%s10 + $0x2e8] sm:$0xff]
    %v2752 = vld [vmem:[%s10 + $0x2f0] sm:$0xff]
    %v2753 = vld [vmem:[%s10 + $0x2f8] sm:$0xff]
    %v2754 = vld [vmem:[%s10 + $0x300] sm:$0xff]
    %v2755 = vld [vmem:[%s10 + $0x308] sm:$0xff]
    %v2756 = vld [vmem:[%s10 + $0x310] sm:$0xff]
    %v2757 = vld [vmem:[%s10 + $0x318] sm:$0xff]
    %v2758 = vld [vmem:[%s10 + $0x320] sm:$0xff]
    %v2759 = vld [vmem:[%s10 + $0x328] sm:$0xff]
    %v2760 = vld [vmem:[%s10 + $0x330] sm:$0xff]
    %v2761 = vld [vmem:[%s10 + $0x338] sm:$0xff]
    %v2762 = vld [vmem:[%s10 + $0x340] sm:$0xff]
    %v2763 = vld [vmem:[%s10 + $0x348] sm:$0xff]
    %v2764 = vld [vmem:[%s10 + $0x350] sm:$0xff]
    %v2765 = vld [vmem:[%s10 + $0x358] sm:$0xff]
    %v2766 = vld [vmem:[%s10 + $0x360] sm:$0xff]
    %v2767 = vld [vmem:[%s10 + $0x368] sm:$0xff]
    %v2768 = vld [vmem:[%s10 + $0x370] sm:$0xff]
    %v2769 = vld [vmem:[%s10 + $0x378] sm:$0xff]
    %v2770 = vld [vmem:[%s10 + $0x380] sm:$0xff]
    %v2771 = vld [vmem:[%s10 + $0x388] sm:$0xff]
    %v2772 = vld [vmem:[%s10 + $0x390] sm:$0xff]
    %v2773 = vld [vmem:[%s10 + $0x398] sm:$0xff]
    %v2774 = vld [vmem:[%s10 + $0x3a0] sm:$0xff]
    %v2775 = vld [vmem:[%s10 + $0x3a8] sm:$0xff]
    %v2776 = vld [vmem:[%s10 + $0x3b0] sm:$0xff]
    %v2777 = vld [vmem:[%s10 + $0x3b8] sm:$0xff]
    %v2778 = vld [vmem:[%s10 + $0x3c0] sm:$0xff]
    %v2779 = vld [vmem:[%s10 + $0x3c8] sm:$0xff]
    %v2780 = vld [vmem:[%s10 + $0x3d0] sm:$0xff]
    %v2781 = vld [vmem:[%s10 + $0x3d8] sm:$0xff]
    %v2782 = vld [vmem:[%s10 + $0x3e0] sm:$0xff]
    %v2783 = vld [vmem:[%s10 + $0x3e8] sm:$0xff]
    %v2784 = vld [vmem:[%s10 + $0x3f0] sm:$0xff]
    %v2785 = vld [vmem:[%s10 + $0x3f8] sm:$0xff]
    %v2786 = vld [vmem:[%s10 + $0x400] sm:$0xff]
    %v2787 = vld [vmem:[%s10 + $0x408] sm:$0xff]
    %v2788 = vld [vmem:[%s10 + $0x410] sm:$0xff]
    %v2789 = vld [vmem:[%s10 + $0x418] sm:$0xff]
    %v2790 = vld [vmem:[%s10 + $0x420] sm:$0xff]
    %v2791 = vld [vmem:[%s10 + $0x428] sm:$0xff]
    %v2792 = vld [vmem:[%s10 + $0x430] sm:$0xff]
    %v2793 = vld [vmem:[%s10 + $0x438] sm:$0xff]
    %v2794 = vld [vmem:[%s10 + $0x440] sm:$0xff]
    %v2795 = vld [vmem:[%s10 + $0x448] sm:$0xff]
    %v2796 = vld [vmem:[%s10 + $0x450] sm:$0xff]
    %v2797 = vld [vmem:[%s10 + $0x458] sm:$0xff]
    %v2798 = vld [vmem:[%s10 + $0x460] sm:$0xff]
    %v2799 = vld [vmem:[%s10 + $0x468] sm:$0xff]
    %v2800 = vld [vmem:[%s10 + $0x470] sm:$0xff]
    %v2801 = vld [vmem:[%s10 + $0x478] sm:$0xff]
    %v2802 = vld [vmem:[%s10 + $0x480] sm:$0xff]
    %v2803 = vld [vmem:[%s10 + $0x488] sm:$0xff]
    %v2804 = vld [vmem:[%s10 + $0x490] sm:$0xff]
    %v2805 = vld [vmem:[%s10 + $0x498] sm:$0xff]
    %v2806 = vld [vmem:[%s10 + $0x4a0] sm:$0xff]
    %v2807 = vld [vmem:[%s10 + $0x4a8] sm:$0xff]
    %v2808 = vld [vmem:[%s10 + $0x4b0] sm:$0xff]
    %v2809 = vld [vmem:[%s10 + $0x4b8] sm:$0xff]
    %v2810 = vld [vmem:[%s10 + $0x4c0] sm:$0xff]
    %v2811 = vld [vmem:[%s10 + $0x4c8] sm:$0xff]
    %v2812 = vld [vmem:[%s10 + $0x4d0] sm:$0xff]
    %v2813 = vld [vmem:[%s10 + $0x4d8] sm:$0xff]
    %v2814 = vld [vmem:[%s10 + $0x4e0] sm:$0xff]
    %v2815 = vld [vmem:[%s10 + $0x4e8] sm:$0xff]
    %v2816 = vld [vmem:[%s10 + $0x4f0] sm:$0xff]
    %v2817 = vld [vmem:[%s10 + $0x4f8] sm:$0xff]
    %v2818 = vld [vmem:[%s10 + $0x500] sm:$0xff]
    %v2819 = vld [vmem:[%s10 + $0x508] sm:$0xff]
    %v2820 = vld [vmem:[%s10 + $0x510] sm:$0xff]
    %v2821 = vld [vmem:[%s10 + $0x518] sm:$0xff]
    %v2822 = vld [vmem:[%s10 + $0x520] sm:$0xff]
    %v2823 = vld [vmem:[%s10 + $0x528] sm:$0xff]
    %v2824 = vld [vmem:[%s10 + $0x530] sm:$0xff]
    %v2825 = vld [vmem:[%s10 + $0x538] sm:$0xff]
    %v2826 = vld [vmem:[%s10 + $0x540] sm:$0xff]
    %v2827 = vld [vmem:[%s10 + $0x548] sm:$0xff]
    %v2828 = vld [vmem:[%s10 + $0x550] sm:$0xff]
    %v2829 = vld [vmem:[%s10 + $0x558] sm:$0xff]
    %v2830 = vld [vmem:[%s10 + $0x560] sm:$0xff]
    %v2831 = vld [vmem:[%s10 + $0x568] sm:$0xff]
    %v2832 = vld [vmem:[%s10 + $0x570] sm:$0xff]
    %v2833 = vld [vmem:[%s10 + $0x578] sm:$0xff]
    %v2834 = vld [vmem:[%s10 + $0x580] sm:$0xff]
    %v2835 = vld [vmem:[%s10 + $0x588] sm:$0xff]
    %v2836 = vld [vmem:[%s10 + $0x590] sm:$0xff]
    %v2837 = vld [vmem:[%s10 + $0x598] sm:$0xff]
    %v2838 = vld [vmem:[%s10 + $0x5a0] sm:$0xff]
    %v2839 = vld [vmem:[%s10 + $0x5a8] sm:$0xff]
    %v2840 = vld [vmem:[%s10 + $0x5b0] sm:$0xff]
    %v2841 = vld [vmem:[%s10 + $0x5b8] sm:$0xff]
    %v2842 = vld [vmem:[%s10 + $0x5c0] sm:$0xff]
    %v2843 = vld [vmem:[%s10 + $0x5c8] sm:$0xff]
    %v2844 = vld [vmem:[%s10 + $0x5d0] sm:$0xff]
    %v2845 = vld [vmem:[%s10 + $0x5d8] sm:$0xff]
    %v2846 = vld [vmem:[%s10 + $0x5e0] sm:$0xff]
    %v2847 = vld [vmem:[%s10 + $0x5e8] sm:$0xff]
    %v2848 = vld [vmem:[%s10 + $0x5f0] sm:$0xff]
    %v2849 = vld [vmem:[%s10 + $0x5f8] sm:$0xff]
    %v2850 = vld [vmem:[%s10 + $0x600] sm:$0xff]
    %v2851 = vld [vmem:[%s10 + $0x608] sm:$0xff]
    %v2852 = vld [vmem:[%s10 + $0x610] sm:$0xff]
    %v2853 = vld [vmem:[%s10 + $0x618] sm:$0xff]
    %v2854 = vld [vmem:[%s10 + $0x620] sm:$0xff]
    %v2855 = vld [vmem:[%s10 + $0x628] sm:$0xff]
    %v2856 = vld [vmem:[%s10 + $0x630] sm:$0xff]
    %v2857 = vld [vmem:[%s10 + $0x638] sm:$0xff]
    %v2858 = vld [vmem:[%s10 + $0x640] sm:$0xff]
    %v2859 = vld [vmem:[%s10 + $0x648] sm:$0xff]
    %v2860 = vld [vmem:[%s10 + $0x650] sm:$0xff]
    %v2861 = vld [vmem:[%s10 + $0x658] sm:$0xff]
    %v2862 = vld [vmem:[%s10 + $0x660] sm:$0xff]
    %v2863 = vld [vmem:[%s10 + $0x668] sm:$0xff]
    %v2864 = vld [vmem:[%s10 + $0x670] sm:$0xff]
    %v2865 = vld [vmem:[%s10 + $0x678] sm:$0xff]
    %v2866 = vld [vmem:[%s10 + $0x680] sm:$0xff]
    %v2867 = vld [vmem:[%s10 + $0x688] sm:$0xff]
    %v2868 = vld [vmem:[%s10 + $0x690] sm:$0xff]
    %v2869 = vld [vmem:[%s10 + $0x698] sm:$0xff]
    %v2870 = vld [vmem:[%s10 + $0x6a0] sm:$0xff]
    %v2871 = vld [vmem:[%s10 + $0x6a8] sm:$0xff]
    %v2872 = vld [vmem:[%s10 + $0x6b0] sm:$0xff]
    %v2873 = vld [vmem:[%s10 + $0x6b8] sm:$0xff]
    %v2874 = vld [vmem:[%s10 + $0x6c0] sm:$0xff]
    %v2875 = vld [vmem:[%s10 + $0x6c8] sm:$0xff]
    %v2876 = vld [vmem:[%s10 + $0x6d0] sm:$0xff]
    %v2877 = vld [vmem:[%s10 + $0x6d8] sm:$0xff]
    %v2878 = vld [vmem:[%s10 + $0x6e0] sm:$0xff]
    %v2879 = vld [vmem:[%s10 + $0x6e8] sm:$0xff]
    %v2880 = vld [vmem:[%s10 + $0x6f0] sm:$0xff]
    %v2881 = vld [vmem:[%s10 + $0x6f8] sm:$0xff]
    %v2882 = vld [vmem:[%s10 + $0x700] sm:$0xff]
    %v2883 = vld [vmem:[%s10 + $0x708] sm:$0xff]
    %v2884 = vld [vmem:[%s10 + $0x710] sm:$0xff]
    %v2885 = vld [vmem:[%s10 + $0x718] sm:$0xff]
    %v2886 = vld [vmem:[%s10 + $0x720] sm:$0xff]
    %v2887 = vld [vmem:[%s10 + $0x728] sm:$0xff]
    %v2888 = vld [vmem:[%s10 + $0x730] sm:$0xff]
    %v2889 = vld [vmem:[%s10 + $0x738] sm:$0xff]
    %v2890 = vld [vmem:[%s10 + $0x740] sm:$0xff]
    %v2891 = vld [vmem:[%s10 + $0x748] sm:$0xff]
    %v2892 = vld [vmem:[%s10 + $0x750] sm:$0xff]
    %v2893 = vld [vmem:[%s10 + $0x758] sm:$0xff]
    %v2894 = vld [vmem:[%s10 + $0x760] sm:$0xff]
    %v2895 = vld [vmem:[%s10 + $0x768] sm:$0xff]
    %v2896 = vld [vmem:[%s10 + $0x770] sm:$0xff]
    %v2897 = vld [vmem:[%s10 + $0x778] sm:$0xff]
    %v2898 = vld [vmem:[%s10 + $0x780] sm:$0xff]
    %v2899 = vld [vmem:[%s10 + $0x788] sm:$0xff]
    %v2900 = vld [vmem:[%s10 + $0x790] sm:$0xff]
    %v2901 = vld [vmem:[%s10 + $0x798] sm:$0xff]
    %v2902 = vld [vmem:[%s10 + $0x7a0] sm:$0xff]
    %v2903 = vld [vmem:[%s10 + $0x7a8] sm:$0xff]
    %v2904 = vld [vmem:[%s10 + $0x7b0] sm:$0xff]
    %v2905 = vld [vmem:[%s10 + $0x7b8] sm:$0xff]
    %v2906 = vld [vmem:[%s10 + $0x7c0] sm:$0xff]
    %v2907 = vld [vmem:[%s10 + $0x7c8] sm:$0xff]
    %v2908 = vld [vmem:[%s10 + $0x7d0] sm:$0xff]
    %v2909 = vld [vmem:[%s10 + $0x7d8] sm:$0xff]
    %v2910 = vld [vmem:[%s10 + $0x7e0] sm:$0xff]
    %v2911 = vld [vmem:[%s10 + $0x7e8] sm:$0xff]
    %v2912 = vld [vmem:[%s10 + $0x7f0] sm:$0xff]
    %v2913 = vld [vmem:[%s10 + $0x7f8] sm:$0xff]
    %v2914 = vld [vmem:[%s11] sm:$0x1]
    %v2916 = vlaneseq
    %v2917 = vshrl.u32 %v2916, 7
    %v2918 = vsub.s32 0, %v2917
    %v2919 = vrot.slane %v2914, %v2918
    %2921 = vmatprep.subr.mxu0 0.0
    %2922 = vmatpush1.msra.mxu0 %v2673
    %2923 = vmatprep.subr.mxu0 0.0
    %2924 = vmatpush1.msra.mxu0 %v2672
    %2925 = vmatprep.subr.mxu0 0.0
    %2926 = vmatpush1.msra.mxu0 %v2671
    %2927 = vmatprep.subr.mxu0 0.0
    %2928 = vmatpush1.msra.mxu0 %v2670
    %2929 = vmatprep.subr.mxu0 0.0
    %2930 = vmatpush1.msra.mxu0 %v2669
    %2931 = vmatprep.subr.mxu0 0.0
    %2932 = vmatpush1.msra.mxu0 %v2668
    %2933 = vmatprep.subr.mxu0 0.0
    %2934 = vmatpush1.msra.mxu0 %v2667
    %2935 = vmatprep.subr.mxu0 0.0
    %2936 = vmatpush1.msra.mxu0 %v2666
    %2937 = vmatprep.subr.mxu0 0.0
    %2938 = vmatpush1.msra.mxu0 %v2665
    %2939 = vmatprep.subr.mxu0 0.0
    %2940 = vmatpush1.msra.mxu0 %v2664
    %2941 = vmatprep.subr.mxu0 0.0
    %2942 = vmatpush1.msra.mxu0 %v2663
    %2943 = vmatprep.subr.mxu0 0.0
    %2944 = vmatpush1.msra.mxu0 %v2662
    %2945 = vmatprep.subr.mxu0 0.0
    %2946 = vmatpush1.msra.mxu0 %v2661
    %2947 = vmatprep.subr.mxu0 0.0
    %2948 = vmatpush1.msra.mxu0 %v2660
    %2949 = vmatprep.subr.mxu0 0.0
    %2950 = vmatpush1.msra.mxu0 %v2659
    %2951 = vmatprep.subr.mxu0 0.0
    %2952 = vmatpush1.msra.mxu0 %v2658
    %2953 = vmatprep.subr.mxu0 0.0
    %2954 = vmatpush2.msra.mxu0 %v2689
    %2955 = vmatprep.subr.mxu0 0.0
    %2956 = vmatpush2.msra.mxu0 %v2688
    %2957 = vmatprep.subr.mxu0 0.0
    %2958 = vmatpush2.msra.mxu0 %v2687
    %2959 = vmatprep.subr.mxu0 0.0
    %2960 = vmatpush2.msra.mxu0 %v2686
    %2961 = vmatprep.subr.mxu0 0.0
    %2962 = vmatpush2.msra.mxu0 %v2685
    %2963 = vmatprep.subr.mxu0 0.0
    %2964 = vmatpush2.msra.mxu0 %v2684
    %2965 = vmatprep.subr.mxu0 0.0
    %2966 = vmatpush2.msra.mxu0 %v2683
    %2967 = vmatprep.subr.mxu0 0.0
    %2968 = vmatpush2.msra.mxu0 %v2682
    %2969 = vmatprep.subr.mxu0 0.0
    %2970 = vmatpush2.msra.mxu0 %v2681
    %2971 = vmatprep.subr.mxu0 0.0
    %2972 = vmatpush2.msra.mxu0 %v2680
    %2973 = vmatprep.subr.mxu0 0.0
    %2974 = vmatpush2.msra.mxu0 %v2679
    %2975 = vmatprep.subr.mxu0 0.0
    %2976 = vmatpush2.msra.mxu0 %v2678
    %2977 = vmatprep.subr.mxu0 0.0
    %2978 = vmatpush2.msra.mxu0 %v2677
    %2979 = vmatprep.subr.mxu0 0.0
    %2980 = vmatpush2.msra.mxu0 %v2676
    %2981 = vmatprep.subr.mxu0 0.0
    %2982 = vmatpush2.msra.mxu0 %v2675
    %2983 = vmatprep.subr.mxu0 0.0
    %2984 = vmatpush2.msra.mxu0 %v2674
    %2985 = vmatprep.mubr.f32.mxu0 %v2627
    %2986 = vmatmul.mubr.f32.gmra.mxu0 %v2626
    %v2987 = vpop.f32.mrf.mxu0
    %v2988 = vadd.f32 %v2919, %v2987
    %v2989 = vpop.f32.mrf.mxu0
    %2990 = vmatprep.mubr.f32.mxu0 %v2643
    %2991 = vmatmul.mubr.f32.gmra.mxu0 %v2642
    %v2992 = vpop.f32.mrf.mxu0
    %v2993 = vadd.f32 %v2919, %v2992
    %v2994 = vpop.f32.mrf.mxu0
    %2995 = vdwg.mxu0
    %2996 = vmatprep.subr.mxu0 0.0
    %2997 = vmatpush1.msra.mxu0 %v2705
    %2998 = vmatprep.subr.mxu0 0.0
    %2999 = vmatpush1.msra.mxu0 %v2704
    %3000 = vmatprep.subr.mxu0 0.0
    %3001 = vmatpush1.msra.mxu0 %v2703
    %3002 = vmatprep.subr.mxu0 0.0
    %3003 = vmatpush1.msra.mxu0 %v2702
    %3004 = vmatprep.subr.mxu0 0.0
    %3005 = vmatpush1.msra.mxu0 %v2701
    %3006 = vmatprep.subr.mxu0 0.0
    %3007 = vmatpush1.msra.mxu0 %v2700
    %3008 = vmatprep.subr.mxu0 0.0
    %3009 = vmatpush1.msra.mxu0 %v2699
    %3010 = vmatprep.subr.mxu0 0.0
    %3011 = vmatpush1.msra.mxu0 %v2698
    %3012 = vmatprep.subr.mxu0 0.0
    %3013 = vmatpush1.msra.mxu0 %v2697
    %3014 = vmatprep.subr.mxu0 0.0
    %3015 = vmatpush1.msra.mxu0 %v2696
    %3016 = vmatprep.subr.mxu0 0.0
    %3017 = vmatpush1.msra.mxu0 %v2695
    %3018 = vmatprep.subr.mxu0 0.0
    %3019 = vmatpush1.msra.mxu0 %v2694
    %3020 = vmatprep.subr.mxu0 0.0
    %3021 = vmatpush1.msra.mxu0 %v2693
    %3022 = vmatprep.subr.mxu0 0.0
    %3023 = vmatpush1.msra.mxu0 %v2692
    %3024 = vmatprep.subr.mxu0 0.0
    %3025 = vmatpush1.msra.mxu0 %v2691
    %3026 = vmatprep.subr.mxu0 0.0
    %3027 = vmatpush1.msra.mxu0 %v2690
    %3028 = vmatprep.subr.mxu0 0.0
    %3029 = vmatpush2.msra.mxu0 %v2721
    %3030 = vmatprep.subr.mxu0 0.0
    %3031 = vmatpush2.msra.mxu0 %v2720
    %3032 = vmatprep.subr.mxu0 0.0
    %3033 = vmatpush2.msra.mxu0 %v2719
    %3034 = vmatprep.subr.mxu0 0.0
    %3035 = vmatpush2.msra.mxu0 %v2718
    %3036 = vmatprep.subr.mxu0 0.0
    %3037 = vmatpush2.msra.mxu0 %v2717
    %3038 = vmatprep.subr.mxu0 0.0
    %3039 = vmatpush2.msra.mxu0 %v2716
    %3040 = vmatprep.subr.mxu0 0.0
    %3041 = vmatpush2.msra.mxu0 %v2715
    %3042 = vmatprep.subr.mxu0 0.0
    %3043 = vmatpush2.msra.mxu0 %v2714
    %3044 = vmatprep.subr.mxu0 0.0
    %3045 = vmatpush2.msra.mxu0 %v2713
    %3046 = vmatprep.subr.mxu0 0.0
    %3047 = vmatpush2.msra.mxu0 %v2712
    %3048 = vmatprep.subr.mxu0 0.0
    %3049 = vmatpush2.msra.mxu0 %v2711
    %3050 = vmatprep.subr.mxu0 0.0
    %3051 = vmatpush2.msra.mxu0 %v2710
    %3052 = vmatprep.subr.mxu0 0.0
    %3053 = vmatpush2.msra.mxu0 %v2709
    %3054 = vmatprep.subr.mxu0 0.0
    %3055 = vmatpush2.msra.mxu0 %v2708
    %3056 = vmatprep.subr.mxu0 0.0
    %3057 = vmatpush2.msra.mxu0 %v2707
    %3058 = vmatprep.subr.mxu0 0.0
    %3059 = vmatpush2.msra.mxu0 %v2706
    %3060 = vmatprep.mubr.f32.mxu0 %v2629
    %3061 = vmatmul.mubr.f32.gmra.mxu0 %v2628
    %v3062 = vpop.f32.mrf.mxu0
    %v3063 = vadd.f32 %v2988, %v3062
    %v3064 = vpop.f32.mrf.mxu0
    %3065 = vmatprep.mubr.f32.mxu0 %v2645
    %3066 = vmatmul.mubr.f32.gmra.mxu0 %v2644
    %v3067 = vpop.f32.mrf.mxu0
    %v3068 = vadd.f32 %v2993, %v3067
    %v3069 = vpop.f32.mrf.mxu0
    %3070 = vdwg.mxu0
    %3071 = vmatprep.subr.mxu0 0.0
    %3072 = vmatpush1.msra.mxu0 %v2737
    %3073 = vmatprep.subr.mxu0 0.0
    %3074 = vmatpush1.msra.mxu0 %v2736
    %3075 = vmatprep.subr.mxu0 0.0
    %3076 = vmatpush1.msra.mxu0 %v2735
    %3077 = vmatprep.subr.mxu0 0.0
    %3078 = vmatpush1.msra.mxu0 %v2734
    %3079 = vmatprep.subr.mxu0 0.0
    %3080 = vmatpush1.msra.mxu0 %v2733
    %3081 = vmatprep.subr.mxu0 0.0
    %3082 = vmatpush1.msra.mxu0 %v2732
    %3083 = vmatprep.subr.mxu0 0.0
    %3084 = vmatpush1.msra.mxu0 %v2731
    %3085 = vmatprep.subr.mxu0 0.0
    %3086 = vmatpush1.msra.mxu0 %v2730
    %3087 = vmatprep.subr.mxu0 0.0
    %3088 = vmatpush1.msra.mxu0 %v2729
    %3089 = vmatprep.subr.mxu0 0.0
    %3090 = vmatpush1.msra.mxu0 %v2728
    %3091 = vmatprep.subr.mxu0 0.0
    %3092 = vmatpush1.msra.mxu0 %v2727
    %3093 = vmatprep.subr.mxu0 0.0
    %3094 = vmatpush1.msra.mxu0 %v2726
    %3095 = vmatprep.subr.mxu0 0.0
    %3096 = vmatpush1.msra.mxu0 %v2725
    %3097 = vmatprep.subr.mxu0 0.0
    %3098 = vmatpush1.msra.mxu0 %v2724
    %3099 = vmatprep.subr.mxu0 0.0
    %3100 = vmatpush1.msra.mxu0 %v2723
    %3101 = vmatprep.subr.mxu0 0.0
    %3102 = vmatpush1.msra.mxu0 %v2722
    %3103 = vmatprep.subr.mxu0 0.0
    %3104 = vmatpush2.msra.mxu0 %v2753
    %3105 = vmatprep.subr.mxu0 0.0
    %3106 = vmatpush2.msra.mxu0 %v2752
    %3107 = vmatprep.subr.mxu0 0.0
    %3108 = vmatpush2.msra.mxu0 %v2751
    %3109 = vmatprep.subr.mxu0 0.0
    %3110 = vmatpush2.msra.mxu0 %v2750
    %3111 = vmatprep.subr.mxu0 0.0
    %3112 = vmatpush2.msra.mxu0 %v2749
    %3113 = vmatprep.subr.mxu0 0.0
    %3114 = vmatpush2.msra.mxu0 %v2748
    %3115 = vmatprep.subr.mxu0 0.0
    %3116 = vmatpush2.msra.mxu0 %v2747
    %3117 = vmatprep.subr.mxu0 0.0
    %3118 = vmatpush2.msra.mxu0 %v2746
    %3119 = vmatprep.subr.mxu0 0.0
    %3120 = vmatpush2.msra.mxu0 %v2745
    %3121 = vmatprep.subr.mxu0 0.0
    %3122 = vmatpush2.msra.mxu0 %v2744
    %3123 = vmatprep.subr.mxu0 0.0
    %3124 = vmatpush2.msra.mxu0 %v2743
    %3125 = vmatprep.subr.mxu0 0.0
    %3126 = vmatpush2.msra.mxu0 %v2742
    %3127 = vmatprep.subr.mxu0 0.0
    %3128 = vmatpush2.msra.mxu0 %v2741
    %3129 = vmatprep.subr.mxu0 0.0
    %3130 = vmatpush2.msra.mxu0 %v2740
    %3131 = vmatprep.subr.mxu0 0.0
    %3132 = vmatpush2.msra.mxu0 %v2739
    %3133 = vmatprep.subr.mxu0 0.0
    %3134 = vmatpush2.msra.mxu0 %v2738
    %3135 = vmatprep.mubr.f32.mxu0 %v2631
    %3136 = vmatmul.mubr.f32.gmra.mxu0 %v2630
    %v3137 = vpop.f32.mrf.mxu0
    %v3138 = vadd.f32 %v3063, %v3137
    %v3139 = vpop.f32.mrf.mxu0
    %3140 = vmatprep.mubr.f32.mxu0 %v2647
    %3141 = vmatmul.mubr.f32.gmra.mxu0 %v2646
    %v3142 = vpop.f32.mrf.mxu0
    %v3143 = vadd.f32 %v3068, %v3142
    %v3144 = vpop.f32.mrf.mxu0
    %3145 = vdwg.mxu0
    %3146 = vmatprep.subr.mxu0 0.0
    %3147 = vmatpush1.msra.mxu0 %v2769
    %3148 = vmatprep.subr.mxu0 0.0
    %3149 = vmatpush1.msra.mxu0 %v2768
    %3150 = vmatprep.subr.mxu0 0.0
    %3151 = vmatpush1.msra.mxu0 %v2767
    %3152 = vmatprep.subr.mxu0 0.0
    %3153 = vmatpush1.msra.mxu0 %v2766
    %3154 = vmatprep.subr.mxu0 0.0
    %3155 = vmatpush1.msra.mxu0 %v2765
    %3156 = vmatprep.subr.mxu0 0.0
    %3157 = vmatpush1.msra.mxu0 %v2764
    %3158 = vmatprep.subr.mxu0 0.0
    %3159 = vmatpush1.msra.mxu0 %v2763
    %3160 = vmatprep.subr.mxu0 0.0
    %3161 = vmatpush1.msra.mxu0 %v2762
    %3162 = vmatprep.subr.mxu0 0.0
    %3163 = vmatpush1.msra.mxu0 %v2761
    %3164 = vmatprep.subr.mxu0 0.0
    %3165 = vmatpush1.msra.mxu0 %v2760
    %3166 = vmatprep.subr.mxu0 0.0
    %3167 = vmatpush1.msra.mxu0 %v2759
    %3168 = vmatprep.subr.mxu0 0.0
    %3169 = vmatpush1.msra.mxu0 %v2758
    %3170 = vmatprep.subr.mxu0 0.0
    %3171 = vmatpush1.msra.mxu0 %v2757
    %3172 = vmatprep.subr.mxu0 0.0
    %3173 = vmatpush1.msra.mxu0 %v2756
    %3174 = vmatprep.subr.mxu0 0.0
    %3175 = vmatpush1.msra.mxu0 %v2755
    %3176 = vmatprep.subr.mxu0 0.0
    %3177 = vmatpush1.msra.mxu0 %v2754
    %3178 = vmatprep.subr.mxu0 0.0
    %3179 = vmatpush2.msra.mxu0 %v2785
    %3180 = vmatprep.subr.mxu0 0.0
    %3181 = vmatpush2.msra.mxu0 %v2784
    %3182 = vmatprep.subr.mxu0 0.0
    %3183 = vmatpush2.msra.mxu0 %v2783
    %3184 = vmatprep.subr.mxu0 0.0
    %3185 = vmatpush2.msra.mxu0 %v2782
    %3186 = vmatprep.subr.mxu0 0.0
    %3187 = vmatpush2.msra.mxu0 %v2781
    %3188 = vmatprep.subr.mxu0 0.0
    %3189 = vmatpush2.msra.mxu0 %v2780
    %3190 = vmatprep.subr.mxu0 0.0
    %3191 = vmatpush2.msra.mxu0 %v2779
    %3192 = vmatprep.subr.mxu0 0.0
    %3193 = vmatpush2.msra.mxu0 %v2778
    %3194 = vmatprep.subr.mxu0 0.0
    %3195 = vmatpush2.msra.mxu0 %v2777
    %3196 = vmatprep.subr.mxu0 0.0
    %3197 = vmatpush2.msra.mxu0 %v2776
    %3198 = vmatprep.subr.mxu0 0.0
    %3199 = vmatpush2.msra.mxu0 %v2775
    %3200 = vmatprep.subr.mxu0 0.0
    %3201 = vmatpush2.msra.mxu0 %v2774
    %3202 = vmatprep.subr.mxu0 0.0
    %3203 = vmatpush2.msra.mxu0 %v2773
    %3204 = vmatprep.subr.mxu0 0.0
    %3205 = vmatpush2.msra.mxu0 %v2772
    %3206 = vmatprep.subr.mxu0 0.0
    %3207 = vmatpush2.msra.mxu0 %v2771
    %3208 = vmatprep.subr.mxu0 0.0
    %3209 = vmatpush2.msra.mxu0 %v2770
    %3210 = vmatprep.mubr.f32.mxu0 %v2633
    %3211 = vmatmul.mubr.f32.gmra.mxu0 %v2632
    %v3212 = vpop.f32.mrf.mxu0
    %v3213 = vadd.f32 %v3138, %v3212
    %v3214 = vpop.f32.mrf.mxu0
    %3215 = vmatprep.mubr.f32.mxu0 %v2649
    %3216 = vmatmul.mubr.f32.gmra.mxu0 %v2648
    %v3217 = vpop.f32.mrf.mxu0
    %v3218 = vadd.f32 %v3143, %v3217
    %v3219 = vpop.f32.mrf.mxu0
    %3220 = vdwg.mxu0
    %3221 = vmatprep.subr.mxu0 0.0
    %3222 = vmatpush1.msra.mxu0 %v2801
    %3223 = vmatprep.subr.mxu0 0.0
    %3224 = vmatpush1.msra.mxu0 %v2800
    %3225 = vmatprep.subr.mxu0 0.0
    %3226 = vmatpush1.msra.mxu0 %v2799
    %3227 = vmatprep.subr.mxu0 0.0
    %3228 = vmatpush1.msra.mxu0 %v2798
    %3229 = vmatprep.subr.mxu0 0.0
    %3230 = vmatpush1.msra.mxu0 %v2797
    %3231 = vmatprep.subr.mxu0 0.0
    %3232 = vmatpush1.msra.mxu0 %v2796
    %3233 = vmatprep.subr.mxu0 0.0
    %3234 = vmatpush1.msra.mxu0 %v2795
    %3235 = vmatprep.subr.mxu0 0.0
    %3236 = vmatpush1.msra.mxu0 %v2794
    %3237 = vmatprep.subr.mxu0 0.0
    %3238 = vmatpush1.msra.mxu0 %v2793
    %3239 = vmatprep.subr.mxu0 0.0
    %3240 = vmatpush1.msra.mxu0 %v2792
    %3241 = vmatprep.subr.mxu0 0.0
    %3242 = vmatpush1.msra.mxu0 %v2791
    %3243 = vmatprep.subr.mxu0 0.0
    %3244 = vmatpush1.msra.mxu0 %v2790
    %3245 = vmatprep.subr.mxu0 0.0
    %3246 = vmatpush1.msra.mxu0 %v2789
    %3247 = vmatprep.subr.mxu0 0.0
    %3248 = vmatpush1.msra.mxu0 %v2788
    %3249 = vmatprep.subr.mxu0 0.0
    %3250 = vmatpush1.msra.mxu0 %v2787
    %3251 = vmatprep.subr.mxu0 0.0
    %3252 = vmatpush1.msra.mxu0 %v2786
    %3253 = vmatprep.subr.mxu0 0.0
    %3254 = vmatpush2.msra.mxu0 %v2817
    %3255 = vmatprep.subr.mxu0 0.0
    %3256 = vmatpush2.msra.mxu0 %v2816
    %3257 = vmatprep.subr.mxu0 0.0
    %3258 = vmatpush2.msra.mxu0 %v2815
    %3259 = vmatprep.subr.mxu0 0.0
    %3260 = vmatpush2.msra.mxu0 %v2814
    %3261 = vmatprep.subr.mxu0 0.0
    %3262 = vmatpush2.msra.mxu0 %v2813
    %3263 = vmatprep.subr.mxu0 0.0
    %3264 = vmatpush2.msra.mxu0 %v2812
    %3265 = vmatprep.subr.mxu0 0.0
    %3266 = vmatpush2.msra.mxu0 %v2811
    %3267 = vmatprep.subr.mxu0 0.0
    %3268 = vmatpush2.msra.mxu0 %v2810
    %3269 = vmatprep.subr.mxu0 0.0
    %3270 = vmatpush2.msra.mxu0 %v2809
    %3271 = vmatprep.subr.mxu0 0.0
    %3272 = vmatpush2.msra.mxu0 %v2808
    %3273 = vmatprep.subr.mxu0 0.0
    %3274 = vmatpush2.msra.mxu0 %v2807
    %3275 = vmatprep.subr.mxu0 0.0
    %3276 = vmatpush2.msra.mxu0 %v2806
    %3277 = vmatprep.subr.mxu0 0.0
    %3278 = vmatpush2.msra.mxu0 %v2805
    %3279 = vmatprep.subr.mxu0 0.0
    %3280 = vmatpush2.msra.mxu0 %v2804
    %3281 = vmatprep.subr.mxu0 0.0
    %3282 = vmatpush2.msra.mxu0 %v2803
    %3283 = vmatprep.subr.mxu0 0.0
    %3284 = vmatpush2.msra.mxu0 %v2802
    %3285 = vmatprep.mubr.f32.mxu0 %v2635
    %3286 = vmatmul.mubr.f32.gmra.mxu0 %v2634
    %v3287 = vpop.f32.mrf.mxu0
    %v3288 = vadd.f32 %v3213, %v3287
    %v3289 = vpop.f32.mrf.mxu0
    %3290 = vmatprep.mubr.f32.mxu0 %v2651
    %3291 = vmatmul.mubr.f32.gmra.mxu0 %v2650
    %v3292 = vpop.f32.mrf.mxu0
    %v3293 = vadd.f32 %v3218, %v3292
    %v3294 = vpop.f32.mrf.mxu0
    %3295 = vdwg.mxu0
    %3296 = vmatprep.subr.mxu0 0.0
    %3297 = vmatpush1.msra.mxu0 %v2833
    %3298 = vmatprep.subr.mxu0 0.0
    %3299 = vmatpush1.msra.mxu0 %v2832
    %3300 = vmatprep.subr.mxu0 0.0
    %3301 = vmatpush1.msra.mxu0 %v2831
    %3302 = vmatprep.subr.mxu0 0.0
    %3303 = vmatpush1.msra.mxu0 %v2830
    %3304 = vmatprep.subr.mxu0 0.0
    %3305 = vmatpush1.msra.mxu0 %v2829
    %3306 = vmatprep.subr.mxu0 0.0
    %3307 = vmatpush1.msra.mxu0 %v2828
    %3308 = vmatprep.subr.mxu0 0.0
    %3309 = vmatpush1.msra.mxu0 %v2827
    %3310 = vmatprep.subr.mxu0 0.0
    %3311 = vmatpush1.msra.mxu0 %v2826
    %3312 = vmatprep.subr.mxu0 0.0
    %3313 = vmatpush1.msra.mxu0 %v2825
    %3314 = vmatprep.subr.mxu0 0.0
    %3315 = vmatpush1.msra.mxu0 %v2824
    %3316 = vmatprep.subr.mxu0 0.0
    %3317 = vmatpush1.msra.mxu0 %v2823
    %3318 = vmatprep.subr.mxu0 0.0
    %3319 = vmatpush1.msra.mxu0 %v2822
    %3320 = vmatprep.subr.mxu0 0.0
    %3321 = vmatpush1.msra.mxu0 %v2821
    %3322 = vmatprep.subr.mxu0 0.0
    %3323 = vmatpush1.msra.mxu0 %v2820
    %3324 = vmatprep.subr.mxu0 0.0
    %3325 = vmatpush1.msra.mxu0 %v2819
    %3326 = vmatprep.subr.mxu0 0.0
    %3327 = vmatpush1.msra.mxu0 %v2818
    %3328 = vmatprep.subr.mxu0 0.0
    %3329 = vmatpush2.msra.mxu0 %v2849
    %3330 = vmatprep.subr.mxu0 0.0
    %3331 = vmatpush2.msra.mxu0 %v2848
    %3332 = vmatprep.subr.mxu0 0.0
    %3333 = vmatpush2.msra.mxu0 %v2847
    %3334 = vmatprep.subr.mxu0 0.0
    %3335 = vmatpush2.msra.mxu0 %v2846
    %3336 = vmatprep.subr.mxu0 0.0
    %3337 = vmatpush2.msra.mxu0 %v2845
    %3338 = vmatprep.subr.mxu0 0.0
    %3339 = vmatpush2.msra.mxu0 %v2844
    %3340 = vmatprep.subr.mxu0 0.0
    %3341 = vmatpush2.msra.mxu0 %v2843
    %3342 = vmatprep.subr.mxu0 0.0
    %3343 = vmatpush2.msra.mxu0 %v2842
    %3344 = vmatprep.subr.mxu0 0.0
    %3345 = vmatpush2.msra.mxu0 %v2841
    %3346 = vmatprep.subr.mxu0 0.0
    %3347 = vmatpush2.msra.mxu0 %v2840
    %3348 = vmatprep.subr.mxu0 0.0
    %3349 = vmatpush2.msra.mxu0 %v2839
    %3350 = vmatprep.subr.mxu0 0.0
    %3351 = vmatpush2.msra.mxu0 %v2838
    %3352 = vmatprep.subr.mxu0 0.0
    %3353 = vmatpush2.msra.mxu0 %v2837
    %3354 = vmatprep.subr.mxu0 0.0
    %3355 = vmatpush2.msra.mxu0 %v2836
    %3356 = vmatprep.subr.mxu0 0.0
    %3357 = vmatpush2.msra.mxu0 %v2835
    %3358 = vmatprep.subr.mxu0 0.0
    %3359 = vmatpush2.msra.mxu0 %v2834
    %3360 = vmatprep.mubr.f32.mxu0 %v2637
    %3361 = vmatmul.mubr.f32.gmra.mxu0 %v2636
    %v3362 = vpop.f32.mrf.mxu0
    %v3363 = vadd.f32 %v3288, %v3362
    %v3364 = vpop.f32.mrf.mxu0
    %3365 = vmatprep.mubr.f32.mxu0 %v2653
    %3366 = vmatmul.mubr.f32.gmra.mxu0 %v2652
    %v3367 = vpop.f32.mrf.mxu0
    %v3368 = vadd.f32 %v3293, %v3367
    %v3369 = vpop.f32.mrf.mxu0
    %3370 = vdwg.mxu0
    %3371 = vmatprep.subr.mxu0 0.0
    %3372 = vmatpush1.msra.mxu0 %v2865
    %3373 = vmatprep.subr.mxu0 0.0
    %3374 = vmatpush1.msra.mxu0 %v2864
    %3375 = vmatprep.subr.mxu0 0.0
    %3376 = vmatpush1.msra.mxu0 %v2863
    %3377 = vmatprep.subr.mxu0 0.0
    %3378 = vmatpush1.msra.mxu0 %v2862
    %3379 = vmatprep.subr.mxu0 0.0
    %3380 = vmatpush1.msra.mxu0 %v2861
    %3381 = vmatprep.subr.mxu0 0.0
    %3382 = vmatpush1.msra.mxu0 %v2860
    %3383 = vmatprep.subr.mxu0 0.0
    %3384 = vmatpush1.msra.mxu0 %v2859
    %3385 = vmatprep.subr.mxu0 0.0
    %3386 = vmatpush1.msra.mxu0 %v2858
    %3387 = vmatprep.subr.mxu0 0.0
    %3388 = vmatpush1.msra.mxu0 %v2857
    %3389 = vmatprep.subr.mxu0 0.0
    %3390 = vmatpush1.msra.mxu0 %v2856
    %3391 = vmatprep.subr.mxu0 0.0
    %3392 = vmatpush1.msra.mxu0 %v2855
    %3393 = vmatprep.subr.mxu0 0.0
    %3394 = vmatpush1.msra.mxu0 %v2854
    %3395 = vmatprep.subr.mxu0 0.0
    %3396 = vmatpush1.msra.mxu0 %v2853
    %3397 = vmatprep.subr.mxu0 0.0
    %3398 = vmatpush1.msra.mxu0 %v2852
    %3399 = vmatprep.subr.mxu0 0.0
    %3400 = vmatpush1.msra.mxu0 %v2851
    %3401 = vmatprep.subr.mxu0 0.0
    %3402 = vmatpush1.msra.mxu0 %v2850
    %3403 = vmatprep.subr.mxu0 0.0
    %3404 = vmatpush2.msra.mxu0 %v2881
    %3405 = vmatprep.subr.mxu0 0.0
    %3406 = vmatpush2.msra.mxu0 %v2880
    %3407 = vmatprep.subr.mxu0 0.0
    %3408 = vmatpush2.msra.mxu0 %v2879
    %3409 = vmatprep.subr.mxu0 0.0
    %3410 = vmatpush2.msra.mxu0 %v2878
    %3411 = vmatprep.subr.mxu0 0.0
    %3412 = vmatpush2.msra.mxu0 %v2877
    %3413 = vmatprep.subr.mxu0 0.0
    %3414 = vmatpush2.msra.mxu0 %v2876
    %3415 = vmatprep.subr.mxu0 0.0
    %3416 = vmatpush2.msra.mxu0 %v2875
    %3417 = vmatprep.subr.mxu0 0.0
    %3418 = vmatpush2.msra.mxu0 %v2874
    %3419 = vmatprep.subr.mxu0 0.0
    %3420 = vmatpush2.msra.mxu0 %v2873
    %3421 = vmatprep.subr.mxu0 0.0
    %3422 = vmatpush2.msra.mxu0 %v2872
    %3423 = vmatprep.subr.mxu0 0.0
    %3424 = vmatpush2.msra.mxu0 %v2871
    %3425 = vmatprep.subr.mxu0 0.0
    %3426 = vmatpush2.msra.mxu0 %v2870
    %3427 = vmatprep.subr.mxu0 0.0
    %3428 = vmatpush2.msra.mxu0 %v2869
    %3429 = vmatprep.subr.mxu0 0.0
    %3430 = vmatpush2.msra.mxu0 %v2868
    %3431 = vmatprep.subr.mxu0 0.0
    %3432 = vmatpush2.msra.mxu0 %v2867
    %3433 = vmatprep.subr.mxu0 0.0
    %3434 = vmatpush2.msra.mxu0 %v2866
    %3435 = vmatprep.mubr.f32.mxu0 %v2639
    %3436 = vmatmul.mubr.f32.gmra.mxu0 %v2638
    %v3437 = vpop.f32.mrf.mxu0
    %v3438 = vadd.f32 %v3363, %v3437
    %v3439 = vpop.f32.mrf.mxu0
    %3440 = vmatprep.mubr.f32.mxu0 %v2655
    %3441 = vmatmul.mubr.f32.gmra.mxu0 %v2654
    %v3442 = vpop.f32.mrf.mxu0
    %v3443 = vadd.f32 %v3368, %v3442
    %v3444 = vpop.f32.mrf.mxu0
    %3445 = vdwg.mxu0
    %3446 = vmatprep.subr.mxu0 0.0
    %3447 = vmatpush1.msra.mxu0 %v2897
    %3448 = vmatprep.subr.mxu0 0.0
    %3449 = vmatpush1.msra.mxu0 %v2896
    %3450 = vmatprep.subr.mxu0 0.0
    %3451 = vmatpush1.msra.mxu0 %v2895
    %3452 = vmatprep.subr.mxu0 0.0
    %3453 = vmatpush1.msra.mxu0 %v2894
    %3454 = vmatprep.subr.mxu0 0.0
    %3455 = vmatpush1.msra.mxu0 %v2893
    %3456 = vmatprep.subr.mxu0 0.0
    %3457 = vmatpush1.msra.mxu0 %v2892
    %3458 = vmatprep.subr.mxu0 0.0
    %3459 = vmatpush1.msra.mxu0 %v2891
    %3460 = vmatprep.subr.mxu0 0.0
    %3461 = vmatpush1.msra.mxu0 %v2890
    %3462 = vmatprep.subr.mxu0 0.0
    %3463 = vmatpush1.msra.mxu0 %v2889
    %3464 = vmatprep.subr.mxu0 0.0
    %3465 = vmatpush1.msra.mxu0 %v2888
    %3466 = vmatprep.subr.mxu0 0.0
    %3467 = vmatpush1.msra.mxu0 %v2887
    %3468 = vmatprep.subr.mxu0 0.0
    %3469 = vmatpush1.msra.mxu0 %v2886
    %3470 = vmatprep.subr.mxu0 0.0
    %3471 = vmatpush1.msra.mxu0 %v2885
    %3472 = vmatprep.subr.mxu0 0.0
    %3473 = vmatpush1.msra.mxu0 %v2884
    %3474 = vmatprep.subr.mxu0 0.0
    %3475 = vmatpush1.msra.mxu0 %v2883
    %3476 = vmatprep.subr.mxu0 0.0
    %3477 = vmatpush1.msra.mxu0 %v2882
    %3478 = vmatprep.subr.mxu0 0.0
    %3479 = vmatpush2.msra.mxu0 %v2913
    %3480 = vmatprep.subr.mxu0 0.0
    %3481 = vmatpush2.msra.mxu0 %v2912
    %3482 = vmatprep.subr.mxu0 0.0
    %3483 = vmatpush2.msra.mxu0 %v2911
    %3484 = vmatprep.subr.mxu0 0.0
    %3485 = vmatpush2.msra.mxu0 %v2910
    %3486 = vmatprep.subr.mxu0 0.0
    %3487 = vmatpush2.msra.mxu0 %v2909
    %3488 = vmatprep.subr.mxu0 0.0
    %3489 = vmatpush2.msra.mxu0 %v2908
    %3490 = vmatprep.subr.mxu0 0.0
    %3491 = vmatpush2.msra.mxu0 %v2907
    %3492 = vmatprep.subr.mxu0 0.0
    %3493 = vmatpush2.msra.mxu0 %v2906
    %3494 = vmatprep.subr.mxu0 0.0
    %3495 = vmatpush2.msra.mxu0 %v2905
    %3496 = vmatprep.subr.mxu0 0.0
    %3497 = vmatpush2.msra.mxu0 %v2904
    %3498 = vmatprep.subr.mxu0 0.0
    %3499 = vmatpush2.msra.mxu0 %v2903
    %3500 = vmatprep.subr.mxu0 0.0
    %3501 = vmatpush2.msra.mxu0 %v2902
    %3502 = vmatprep.subr.mxu0 0.0
    %3503 = vmatpush2.msra.mxu0 %v2901
    %3504 = vmatprep.subr.mxu0 0.0
    %3505 = vmatpush2.msra.mxu0 %v2900
    %3506 = vmatprep.subr.mxu0 0.0
    %3507 = vmatpush2.msra.mxu0 %v2899
    %3508 = vmatprep.subr.mxu0 0.0
    %3509 = vmatpush2.msra.mxu0 %v2898
    %3510 = vmatprep.mubr.f32.mxu0 %v2641
    %3511 = vmatmul.mubr.f32.gmra.mxu0 %v2640
    %v3512 = vpop.f32.mrf.mxu0
    %v3513 = vadd.f32 %v3438, %v3512
    %v3514 = vpop.f32.mrf.mxu0
    %3515 = vmatprep.mubr.f32.mxu0 %v2657
    %3516 = vmatmul.mubr.f32.gmra.mxu0 %v2656
    %v3517 = vpop.f32.mrf.mxu0
    %v3518 = vadd.f32 %v3443, %v3517
    %v3519 = vpop.f32.mrf.mxu0
    %3520 = vdwg.mxu0
    %v3521 = vadd.f32 %v1854, %v3513
    %v3522 = vadd.f32 %v1855, %v3518
    %v3523 = vld [vmem:[%s12] sm:$0x1]
    %v3524 = vld [vmem:[%s13] sm:$0x1]
    %v3525 = vsel %vm280, %v3521, 0.0
    %3526 = vadd.xlane.f32.xlu0 %v3525
    %v3527 = vpop.xlane.xlu0 %3526
    %v3528 = vsel %vm280, %v3522, 0.0
    %3529 = vadd.xlane.f32.xlu0 %v3528
    %v3530 = vpop.xlane.xlu0 %3529
    %v3531 = vmul.f32 %v3527, %v1819
    %v3532 = vmul.f32 %v3530, %v1819
    %v3533 = vsub.f32 %v3521, %v3531
    %v3534 = vsub.f32 %v3522, %v3532
    %v3535 = vmul.f32 %v3533, %v3533
    %v3536 = vmul.f32 %v3534, %v3534
    %v3537 = vsel %vm280, %v3535, 0.0
    %3538 = vadd.xlane.f32.xlu0 %v3537
    %v3539 = vpop.xlane.xlu0 %3538
    %v3540 = vsel %vm280, %v3536, 0.0
    %3541 = vadd.xlane.f32.xlu0 %v3540
    %v3542 = vpop.xlane.xlu0 %3541
    %v3543 = vmul.f32 %v3539, %v1819
    %v3544 = vmul.f32 %v3542, %v1819
    %v3545 = vadd.f32 %v3543, 1e-05
    %v3546 = vadd.f32 %v3544, 1e-05
    %v3547 = vrsqrt.pop %v3545
    %v3548 = vrsqrt.pop %v3546
    %v3549 = vmul.f32 %v3533, %v3547
    %v3550 = vmul.f32 %v3534, %v3548
    %v3552 = vlaneseq
    %v3553 = vshrl.u32 %v3552, 7
    %v3554 = vsub.s32 0, %v3553
    %v3555 = vrot.slane %v3523, %v3554
    %v3557 = vmul.f32 %v3549, %v3555
    %v3558 = vmul.f32 %v3550, %v3555
    %v3560 = vlaneseq
    %v3561 = vshrl.u32 %v3560, 7
    %v3562 = vsub.s32 0, %v3561
    %v3563 = vrot.slane %v3524, %v3562
    %v3565 = vadd.f32 %v3557, %v3563
    %v3566 = vadd.f32 %v3558, %v3563
    %v3567 = vld [vmem:[%s14] sm:$0xff]
    %v3568 = vld [vmem:[%s14 + $0x8] sm:$0xff]
    %v3569 = vld [vmem:[%s14 + $0x10] sm:$0xff]
    %v3570 = vld [vmem:[%s14 + $0x18] sm:$0xff]
    %v3571 = vld [vmem:[%s15] sm:$0x1]
    %v3573 = vlaneseq
    %v3574 = vshrl.u32 %v3573, 7
    %v3575 = vsub.s32 0, %v3574
    %v3576 = vrot.slane %v3571, %v3575
    %v3579 = vsel %vm280, %v3565, 0
    %v3582 = vsel %vm280, %v3566, 0
    %3584 = vmatprep.subr.mxu0 0.0
    %3585 = vmatpush1.msra.mxu0 0.0
    %3586 = vmatprep.subr.mxu0 0.0
    %3587 = vmatpush1.msra.mxu0 0.0
    %3588 = vmatprep.subr.mxu0 0.0
    %3589 = vmatpush1.msra.mxu0 0.0
    %3590 = vmatprep.subr.mxu0 0.0
    %3591 = vmatpush1.msra.mxu0 0.0
    %3592 = vmatprep.subr.mxu0 0.0
    %3593 = vmatpush1.msra.mxu0 0.0
    %3594 = vmatprep.subr.mxu0 0.0
    %3595 = vmatpush1.msra.mxu0 0.0
    %3596 = vmatprep.subr.mxu0 0.0
    %3597 = vmatpush1.msra.mxu0 0.0
    %3598 = vmatprep.subr.mxu0 0.0
    %3599 = vmatpush1.msra.mxu0 0.0
    %3600 = vmatprep.subr.mxu0 0.0
    %3601 = vmatpush1.msra.mxu0 0.0
    %3602 = vmatprep.subr.mxu0 0.0
    %3603 = vmatpush1.msra.mxu0 0.0
    %3604 = vmatprep.subr.mxu0 0.0
    %3605 = vmatpush1.msra.mxu0 0.0
    %3606 = vmatprep.subr.mxu0 0.0
    %3607 = vmatpush1.msra.mxu0 0.0
    %3608 = vmatprep.subr.mxu0 0.0
    %3609 = vmatpush1.msra.mxu0 %v3570
    %3610 = vmatprep.subr.mxu0 0.0
    %3611 = vmatpush1.msra.mxu0 %v3569
    %3612 = vmatprep.subr.mxu0 0.0
    %3613 = vmatpush1.msra.mxu0 %v3568
    %3614 = vmatprep.subr.mxu0 0.0
    %3615 = vmatpush1.msra.mxu0 %v3567
    %3616 = vmatprep.subr.mxu0 0.0
    %3617 = vmatpush2.msra.mxu0 0.0
    %3618 = vmatprep.subr.mxu0 0.0
    %3619 = vmatpush2.msra.mxu0 0.0
    %3620 = vmatprep.subr.mxu0 0.0
    %3621 = vmatpush2.msra.mxu0 0.0
    %3622 = vmatprep.subr.mxu0 0.0
    %3623 = vmatpush2.msra.mxu0 0.0
    %3624 = vmatprep.subr.mxu0 0.0
    %3625 = vmatpush2.msra.mxu0 0.0
    %3626 = vmatprep.subr.mxu0 0.0
    %3627 = vmatpush2.msra.mxu0 0.0
    %3628 = vmatprep.subr.mxu0 0.0
    %3629 = vmatpush2.msra.mxu0 0.0
    %3630 = vmatprep.subr.mxu0 0.0
    %3631 = vmatpush2.msra.mxu0 0.0
    %3632 = vmatprep.subr.mxu0 0.0
    %3633 = vmatpush2.msra.mxu0 0.0
    %3634 = vmatprep.subr.mxu0 0.0
    %3635 = vmatpush2.msra.mxu0 0.0
    %3636 = vmatprep.subr.mxu0 0.0
    %3637 = vmatpush2.msra.mxu0 0.0
    %3638 = vmatprep.subr.mxu0 0.0
    %3639 = vmatpush2.msra.mxu0 0.0
    %3640 = vmatprep.subr.mxu0 0.0
    %3641 = vmatpush2.msra.mxu0 0.0
    %3642 = vmatprep.subr.mxu0 0.0
    %3643 = vmatpush2.msra.mxu0 0.0
    %3644 = vmatprep.subr.mxu0 0.0
    %3645 = vmatpush2.msra.mxu0 0.0
    %3646 = vmatprep.subr.mxu0 0.0
    %3647 = vmatpush2.msra.mxu0 0.0
    %3648 = vmatprep.mubr.f32.mxu0 0.0
    %3649 = vmatmul.mubr.f32.gmra.mxu0 %v3579
    %v3650 = vpop.f32.mrf.mxu0
    %v3651 = vadd.f32 %v3576, %v3650
    %v3652 = vpop.f32.mrf.mxu0
    %3653 = vmatprep.mubr.f32.mxu0 0.0
    %3654 = vmatmul.mubr.f32.gmra.mxu0 %v3582
    %v3655 = vpop.f32.mrf.mxu0
    %v3656 = vadd.f32 %v3576, %v3655
    %v3657 = vpop.f32.mrf.mxu0
    %3658 = vdwg.mxu0
    %3659 = vst.msk [vmem:[#allocation4] sm:$0xff] %vm1038, %v3651
    %s3660 = scalar_lea.vmem [#allocation4], 8
    %3661 = vst.msk [vmem:[%s3660] sm:$0xff] %vm1038, %v3656
    // Predicated region
    $region62: #{tpu_custom_call.1} parent=1 // pred_check
      _
    $region63: #{tpu_custom_call.1} parent=1 // pred_check_branch
      %3663 = sbr.rel (0) target = $region65
    $region64: #{tpu_custom_call.1} parent=1 // pred_region
      %s3665 = ssub.s32 256, 256
      %3666 = vsyncadd [#allocation5], %s3665
      %s3667 = sshll.u32 [#allocation4], 4
      %s3668 = int_to_ptr.vmem [resolvable:$true] %s3667
      %3673 = dma.vmem_to_hbm [thread:$0]  %s3668, 256, %s16, [#allocation5], 128, 128, 8
    $region65: #{tpu_custom_call.1} parent=1 // pred_fallthru
      _
    // Predicated region
    $region66: #{tpu_custom_call.1} parent=1 // pred_check
      _
    $region67: #{tpu_custom_call.1} parent=1 // pred_check_branch
      %3675 = sbr.rel (0) target = $region69
    $region68: #{tpu_custom_call.1} parent=1 // pred_region
      %3676 = dma.done [#allocation5], 256
    $region69: #{tpu_custom_call.1} parent=1 // pred_fallthru
      _
    %3677 = vsyncpa [#allocation5], 1

</llo_original>
